<compile_context>
chip_gen: v7x
topology: tpu7x:2x2x1
jax: 0.10.0
libtpu: 0.0.40
codegen_flags: <defaults>
</compile_context>

<pallas_src>
import functools

import jax
import jax.numpy as jnp
import numpy as np
from jax.experimental import pallas as pl
from jax.experimental.pallas import tpu as pltpu


def _round_up(x, m):
    return (x + m - 1) // m * m


def _gru_kernel(xproj_ref, h0_ref, *refs, n_layers, hp, seq_len, needs_mask):
    # refs = [Wfused_stack, bx_stack (only if n_layers > 1)],
    #        Whzr0, Wgh_stack, ytop_ref, h_ref
    if n_layers > 1:
        wfused_ref, bx_ref = refs[0], refs[1]
        refs = refs[2:]
    whzr0_ref, wgh_ref, ytop_ref, h_ref = refs

    # Initialize the resident hidden-state block from h0 on the first time slab.
    @pl.when(pl.program_id(0) == 0)
    def _():
        h_ref[...] = h0_ref[...]

    t_block = xproj_ref.shape[0]
    bp = xproj_ref.shape[1]
    bf16 = jnp.bfloat16
    f32 = jnp.float32

    # Loop-invariant weight/bias loads + bias broadcasts hoisted out of the
    # unrolled time loop (JAX does not CSE per-iteration loads/broadcasts).
    whzr0 = whzr0_ref[...]
    wgh = [wgh_ref[l] for l in range(n_layers)]
    if n_layers > 1:
        wfused = [wfused_ref[l] for l in range(n_layers - 1)]
        bx = [jnp.broadcast_to(bx_ref[l], (bp, 3 * hp)) for l in range(n_layers - 1)]

    t0 = pl.program_id(0) * t_block

    def step(t, carry):
        hs = list(carry)
        if needs_mask:
            valid = (t0 + t) < seq_len

        def commit(h_new, h_prev):
            if needs_mask:
                return jnp.where(valid, h_new, h_prev)
            return h_new

        # ---- layer 0: x-side preactivation precomputed in the wrapper,
        #      h-side z/r fused into one [Wzh|Wrh] matmul.
        xp = xproj_ref[t].astype(f32)                                   # (Bp, 3Hp)
        h_prev = hs[0]                                                  # (Bp, Hp) f32
        hzr = jnp.dot(h_prev.astype(bf16), whzr0,
                      preferred_element_type=f32)                       # (Bp, 2Hp)
        z = jax.nn.sigmoid(xp[:, :hp] + hzr[:, :hp])
        r = jax.nn.sigmoid(xp[:, hp:2 * hp] + hzr[:, hp:])
        g = jnp.tanh(xp[:, 2 * hp:]
                     + jnp.dot((r * h_prev).astype(bf16), wgh[0],
                               preferred_element_type=f32))
        h_new = g + z * (h_prev - g)                                    # == z*h + (1-z)*g
        hs[0] = commit(h_new, h_prev)
        x_bf = hs[0].astype(bf16)

        # ---- layers l > 0: fused [x | h] @ [[Wzx|Wrx|Wgx],[Wzh|Wrh|0]] matmul.
        for l in range(1, n_layers):
            h_prev = hs[l]
            xh = jnp.concatenate([x_bf, h_prev.astype(bf16)], axis=1)   # (Bp, 2Hp)
            pre = jnp.dot(xh, wfused[l - 1],
                          preferred_element_type=f32) + bx[l - 1]       # (Bp, 3Hp)
            z = jax.nn.sigmoid(pre[:, :hp])
            r = jax.nn.sigmoid(pre[:, hp:2 * hp])
            g = jnp.tanh(pre[:, 2 * hp:]
                         + jnp.dot((r * h_prev).astype(bf16), wgh[l],
                                   preferred_element_type=f32))
            h_new = g + z * (h_prev - g)
            hs[l] = commit(h_new, h_prev)
            x_bf = hs[l].astype(bf16)

        # Store only the top-layer hidden; Wout is applied outside the recurrence.
        ytop_ref[t] = hs[n_layers - 1]
        return tuple(hs)

    # Hidden state stays in vregs for the whole slab; h_ref touched once each way.
    h_init = tuple(h_ref[l] for l in range(n_layers))
    h_fin = jax.lax.fori_loop(0, t_block, step, h_init, unroll=True)
    for l in range(n_layers):
        h_ref[l] = h_fin[l]


def _pack_params(params, L, I, H, Hp):
    """Fuse + pad + bf16-cast the per-layer weights.  Padded rows/cols/biases are
    zero so the padded hidden channels stay exactly zero through the recurrence
    (z_pad = 0.5 decays an initially-zero pad state; g_pad = tanh(0) = 0)."""
    layers = params["layers"]

    def pad2(w, rows, cols):
        return jnp.pad(w, ((0, rows - w.shape[0]), (0, cols - w.shape[1])))

    l0 = layers[0]
    # Layer-0 fused input projection (f32; consumed by one big XLA matmul in the
    # wrapper, outside the serial recurrence), biases folded in.
    wx0 = jnp.concatenate(
        [pad2(l0["Wzx"], I, Hp), pad2(l0["Wrx"], I, Hp), pad2(l0["Wgx"], I, Hp)],
        axis=1)                                                        # (I, 3Hp)
    bx0 = jnp.concatenate(
        [pad2(l0["bz"], 1, Hp), pad2(l0["br"], 1, Hp), pad2(l0["bg"], 1, Hp)],
        axis=1)                                                        # (1, 3Hp)
    whzr0 = jnp.concatenate(
        [pad2(l0["Wzh"], Hp, Hp), pad2(l0["Wrh"], Hp, Hp)], axis=1)    # (Hp, 2Hp)

    wfused, bx, wgh = [], [], [pad2(l0["Wgh"], Hp, Hp)]
    for lp in layers[1:]:
        top = jnp.concatenate(
            [pad2(lp["Wzx"], Hp, Hp), pad2(lp["Wrx"], Hp, Hp),
             pad2(lp["Wgx"], Hp, Hp)], axis=1)                         # (Hp, 3Hp)
        bot = jnp.concatenate(
            [pad2(lp["Wzh"], Hp, Hp), pad2(lp["Wrh"], Hp, Hp),
             jnp.zeros((Hp, Hp), jnp.float32)], axis=1)                # (Hp, 3Hp)
        wfused.append(jnp.concatenate([top, bot], axis=0))             # (2Hp, 3Hp)
        bx.append(jnp.concatenate(
            [pad2(lp["bz"], 1, Hp), pad2(lp["br"], 1, Hp), pad2(lp["bg"], 1, Hp)],
            axis=1))                                                   # (1, 3Hp)
        wgh.append(pad2(lp["Wgh"], Hp, Hp))

    packed = {
        "Wx0": wx0,
        "bx0": bx0,
        "Whzr0": whzr0.astype(jnp.bfloat16),                           # (Hp, 2Hp)
        "Wgh": jnp.stack(wgh).astype(jnp.bfloat16),                    # (L, Hp, Hp)
    }
    if L > 1:
        packed["Wfused"] = jnp.stack(wfused).astype(jnp.bfloat16)      # (L-1, 2Hp, 3Hp)
        packed["bx"] = jnp.stack(bx)                                   # (L-1, 1, 3Hp) f32
    return packed


def _vmem_limit_bytes():
    # Generation-aware scoped-VMEM limit: leave headroom below physical capacity
    # (v5e/v6e: 128 MiB, v7x: 64 MiB per TensorCore).
    try:
        cap = pltpu.get_tpu_info().vmem_capacity_bytes
        return min(int(cap * 3 // 4), 100 * 1024 * 1024)
    except Exception:
        return 64 * 1024 * 1024


def multilayer_gru_forward(x, h0, params):
    """x: (B, S, I) f32, h0: (B, L, H) f32 or None -> (y (B, S, O), h (B, L, H))."""
    B, S, I = x.shape
    layers = params["layers"]
    L = len(layers)
    H = layers[0]["Wzh"].shape[0]
    O = params["Wout"].shape[1]
    Hp = _round_up(H, 128)      # lane-dense hidden
    Bp = _round_up(B, 8)        # f32 sublane-dense batch

    if h0 is None:
        h0 = jnp.zeros((B, L, H), jnp.float32)

    packed = _pack_params(params, L, I, H, Hp)

    # Time-slab size: fixed T for long sequences (pad + mask tail) so per-grid-step
    # overhead never degenerates to once-per-timestep.
    T = S if S <= 32 else 32
    S_pad = _round_up(S, T)
    needs_mask = S_pad != S

    # Time-major, batch/seq padded.
    x_sbi = jnp.transpose(x, (1, 0, 2))                                # (S, B, I)
    x_sbi = jnp.pad(x_sbi, ((0, S_pad - S), (0, Bp - B), (0, 0)))      # (S_pad, Bp, I)

    # Hoist layer-0 input projections out of the serial loop (one big XLA matmul);
    # slab stored bf16 to halve HBM/VMEM traffic.
    xproj0 = (x_sbi.reshape(S_pad * Bp, I) @ packed["Wx0"] + packed["bx0"])
    xproj0 = xproj0.reshape(S_pad, Bp, 3 * Hp).astype(jnp.bfloat16)

    h0_lbh = jnp.transpose(h0, (1, 0, 2)).astype(jnp.float32)          # (L, B, H)
    h0_lbh = jnp.pad(h0_lbh, ((0, 0), (0, Bp - B), (0, Hp - H)))       # (L, Bp, Hp)

    operands = [xproj0, h0_lbh]
    in_specs = [
        pl.BlockSpec((T, Bp, 3 * Hp), lambda s: (s, 0, 0)),            # time slab
        pl.BlockSpec((L, Bp, Hp), lambda s: (0, 0, 0)),                # h0 (resident)
    ]
    if L > 1:
        operands += [packed["Wfused"], packed["bx"]]
        in_specs += [
            pl.BlockSpec((L - 1, 2 * Hp, 3 * Hp), lambda s: (0, 0, 0)),
            pl.BlockSpec((L - 1, 1, 3 * Hp), lambda s: (0, 0, 0)),
        ]
    operands += [packed["Whzr0"], packed["Wgh"]]
    in_specs += [
        pl.BlockSpec((Hp, 2 * Hp), lambda s: (0, 0)),
        pl.BlockSpec((L, Hp, Hp), lambda s: (0, 0, 0)),
    ]
    out_specs = [
        pl.BlockSpec((T, Bp, Hp), lambda s: (s, 0, 0)),                # top-layer hidden slab
        pl.BlockSpec((L, Bp, Hp), lambda s: (0, 0, 0)),                # final hidden (resident)
    ]
    out_shape = [
        jax.ShapeDtypeStruct((S_pad, Bp, Hp), jnp.float32),
        jax.ShapeDtypeStruct((L, Bp, Hp), jnp.float32),
    ]

    kernel = functools.partial(_gru_kernel, n_layers=L, hp=Hp,
                               seq_len=S, needs_mask=needs_mask)

    ytop_pad, h_pad = pl.pallas_call(
        kernel,
        grid=(S_pad // T,),
        in_specs=in_specs,
        out_specs=out_specs,
        out_shape=out_shape,
        compiler_params=pltpu.CompilerParams(
            dimension_semantics=("arbitrary",),       # time recurrence is serial
            vmem_limit_bytes=_vmem_limit_bytes()),
    )(*operands)

    # Hoisted output projection (outside the serial recurrence).
    ytop = ytop_pad[:S, :B, :H]                                        # (S, B, H)
    y = (ytop.reshape(S * B, H) @ params["Wout"] + params["bout"]).reshape(S, B, O)
    y = jnp.transpose(y, (1, 0, 2))                                    # (B, S, O)
    h_final = jnp.transpose(h_pad[:, :B, :H], (1, 0, 2))               # (B, L, H)
    return y, h_final


def make_params(key, in_dim, h_dim, out_dim, n_layers):
    """Deterministic synthetic parameters; weights stored as (fan_in, fan_out)."""
    layers = []
    prev = in_dim
    for _ in range(n_layers):
        keys = jax.random.split(key, 10)
        key = keys[0]
        s_x = 1.0 / np.sqrt(prev)
        s_h = 1.0 / np.sqrt(h_dim)
        layers.append({
            "Wzx": jax.random.uniform(keys[1], (prev, h_dim), jnp.float32, -s_x, s_x),
            "Wzh": jax.random.uniform(keys[2], (h_dim, h_dim), jnp.float32, -s_h, s_h),
            "bz":  jax.random.uniform(keys[3], (1, h_dim), jnp.float32, -s_h, s_h),
            "Wrx": jax.random.uniform(keys[4], (prev, h_dim), jnp.float32, -s_x, s_x),
            "Wrh": jax.random.uniform(keys[5], (h_dim, h_dim), jnp.float32, -s_h, s_h),
            "br":  jax.random.uniform(keys[6], (1, h_dim), jnp.float32, -s_h, s_h),
            "Wgx": jax.random.uniform(keys[7], (prev, h_dim), jnp.float32, -s_x, s_x),
            "Wgh": jax.random.uniform(keys[8], (h_dim, h_dim), jnp.float32, -s_h, s_h),
            "bg":  jax.random.uniform(keys[9], (1, h_dim), jnp.float32, -s_h, s_h),
        })
        prev = h_dim
    keys = jax.random.split(key, 3)
    s_o = 1.0 / np.sqrt(h_dim)
    return {
        "layers": layers,
        "Wout": jax.random.uniform(keys[1], (h_dim, out_dim), jnp.float32, -s_o, s_o),
        "bout": jax.random.uniform(keys[2], (1, out_dim), jnp.float32, -s_o, s_o),
    }


def reference_forward(x, h0, params):
    """Plain-JAX replica of MultilayerGRU.forward (dropout=0)."""
    B, S, _ = x.shape
    layers = params["layers"]
    L = len(layers)
    states = [h0[:, i, :] for i in range(L)]
    outs = []
    for s in range(S):
        x_curr = x[:, s, :]
        for l in range(L):
            p = layers[l]
            h = states[l]
            z = jax.nn.sigmoid(x_curr @ p["Wzx"] + h @ p["Wzh"] + p["bz"])
            r = jax.nn.sigmoid(x_curr @ p["Wrx"] + h @ p["Wrh"] + p["br"])
            g = jnp.tanh(x_curr @ p["Wgx"] + (r * h) @ p["Wgh"] + p["bg"])
            states[l] = z * h + (1.0 - z) * g
            x_curr = states[l]
        outs.append(x_curr @ params["Wout"] + params["bout"])
    return jnp.stack(outs, axis=1), jnp.stack(states, axis=1)


if __name__ == "__main__":
    B, S, I, H, O, L = 2, 8, 16, 32, 8, 2

    key = jax.random.PRNGKey(0)
    k_x, k_h, k_p = jax.random.split(key, 3)
    x = jax.random.normal(k_x, (B, S, I), dtype=jnp.float32)
    h0 = jax.random.normal(k_h, (B, L, H), dtype=jnp.float32)
    params = make_params(k_p, I, H, O, L)

    y, h_final = multilayer_gru_forward(x, h0, params)
    jax.block_until_ready((y, h_final))

    y_ref, h_ref = reference_forward(x, h0, params)
    # Matmuls use bf16 inputs with f32 accumulation on the MXU -> loosened tolerance.
    np.testing.assert_allclose(np.asarray(y), np.asarray(y_ref), rtol=5e-2, atol=5e-2)
    np.testing.assert_allclose(np.asarray(h_final), np.asarray(h_ref), rtol=5e-2, atol=5e-2)

    assert y.shape == (B, S, O) and h_final.shape == (B, L, H)
    print("KERNEL_OK")
</pallas_src>

<mosaic_0001>
module attributes {stable_mosaic.version = 11 : i64} {
  func.func @_gru_kernel(%arg0: i32, %arg1: memref<8x8x384xbf16, #tpu.memory_space<vmem>>, %arg2: memref<2x8x128xf32, #tpu.memory_space<vmem>>, %arg3: memref<1x256x384xbf16, #tpu.memory_space<vmem>>, %arg4: memref<1x1x384xf32, #tpu.memory_space<vmem>>, %arg5: memref<128x256xbf16, #tpu.memory_space<vmem>>, %arg6: memref<2x128x128xbf16, #tpu.memory_space<vmem>>, %arg7: memref<8x8x128xf32, #tpu.memory_space<vmem>>, %arg8: memref<2x8x128xf32, #tpu.memory_space<vmem>>) attributes {dimension_semantics = [#tpu.dimension_semantics<arbitrary>], iteration_bounds = array<i64: 1>, scalar_prefetch = 0 : i64, scratch_operands = 0 : i64, tpu.core_type = #tpu.core_type<tc>, window_params = [{transform_indices = @transform_0, window_bounds = array<i64: 8, 8, 384>}, {pipeline_mode = #tpu.pipeline_mode<synchronous>, transform_indices = @transform_1, window_bounds = array<i64: 2, 8, 128>}, {pipeline_mode = #tpu.pipeline_mode<synchronous>, transform_indices = @transform_2, window_bounds = array<i64: 1, 256, 384>}, {pipeline_mode = #tpu.pipeline_mode<synchronous>, transform_indices = @transform_3, window_bounds = array<i64: 1, 1, 384>}, {pipeline_mode = #tpu.pipeline_mode<synchronous>, transform_indices = @transform_4, window_bounds = array<i64: 128, 256>}, {pipeline_mode = #tpu.pipeline_mode<synchronous>, transform_indices = @transform_5, window_bounds = array<i64: 2, 128, 128>}, {transform_indices = @transform_6, window_bounds = array<i64: 8, 8, 128>}, {pipeline_mode = #tpu.pipeline_mode<synchronous>, transform_indices = @transform_7, window_bounds = array<i64: 2, 8, 128>}]} {
    %c0_i32 = arith.constant 0 : i32
    %0 = arith.cmpi eq, %arg0, %c0_i32 : i32
    %1 = arith.extui %0 : i1 to i32
    %c0_i32_0 = arith.constant 0 : i32
    %2 = arith.cmpi ne, %1, %c0_i32_0 : i32
    scf.if %2 {
      %c0_121 = arith.constant 0 : index
      %c0_122 = arith.constant 0 : index
      %c0_123 = arith.constant 0 : index
      %512 = vector.load %arg2[%c0_121, %c0_122, %c0_123] : memref<2x8x128xf32, #tpu.memory_space<vmem>>, vector<2x8x128xf32>
      %c0_124 = arith.constant 0 : index
      %c0_125 = arith.constant 0 : index
      %c0_126 = arith.constant 0 : index
      %513 = vector.load %arg8[%c0_124, %c0_125, %c0_126] : memref<2x8x128xf32, #tpu.memory_space<vmem>>, vector<2x8x128xf32>
      tpu.vector_store %arg8[%c0_124, %c0_125, %c0_126], %512 {strides = array<i32>} : memref<2x8x128xf32, #tpu.memory_space<vmem>>, vector<2x8x128xf32>,
    } else {
    }
    %c0 = arith.constant 0 : index
    %c0_1 = arith.constant 0 : index
    %3 = vector.load %arg5[%c0, %c0_1] : memref<128x256xbf16, #tpu.memory_space<vmem>>, vector<128x256xbf16>
    %c0_2 = arith.constant 0 : index
    %c0_3 = arith.constant 0 : index
    %c0_4 = arith.constant 0 : index
    %4 = vector.load %arg6[%c0_2, %c0_3, %c0_4] : memref<2x128x128xbf16, #tpu.memory_space<vmem>>, vector<1x128x128xbf16>
    %5 = vector.shape_cast %4 : vector<1x128x128xbf16> to vector<128x128xbf16>
    %c1 = arith.constant 1 : index
    %c0_5 = arith.constant 0 : index
    %c0_6 = arith.constant 0 : index
    %6 = vector.load %arg6[%c1, %c0_5, %c0_6] : memref<2x128x128xbf16, #tpu.memory_space<vmem>>, vector<1x128x128xbf16>
    %7 = vector.shape_cast %6 : vector<1x128x128xbf16> to vector<128x128xbf16>
    %c0_7 = arith.constant 0 : index
    %c0_8 = arith.constant 0 : index
    %c0_9 = arith.constant 0 : index
    %8 = vector.load %arg3[%c0_7, %c0_8, %c0_9] : memref<1x256x384xbf16, #tpu.memory_space<vmem>>, vector<1x256x384xbf16>
    %9 = vector.shape_cast %8 : vector<1x256x384xbf16> to vector<256x384xbf16>
    %c0_10 = arith.constant 0 : index
    %c0_11 = arith.constant 0 : index
    %c0_12 = arith.constant 0 : index
    %10 = vector.load %arg4[%c0_10, %c0_11, %c0_12] : memref<1x1x384xf32, #tpu.memory_space<vmem>>, vector<1x1x384xf32>
    %11 = vector.shape_cast %10 : vector<1x1x384xf32> to vector<1x384xf32>
    %12 = vector.shape_cast %11 : vector<1x384xf32> to vector<1x384xf32>
    %13 = vector.broadcast %12 : vector<1x384xf32> to vector<8x384xf32>
    %c0_13 = arith.constant 0 : index
    %c0_14 = arith.constant 0 : index
    %c0_15 = arith.constant 0 : index
    %14 = vector.load %arg8[%c0_13, %c0_14, %c0_15] : memref<2x8x128xf32, #tpu.memory_space<vmem>>, vector<1x8x128xf32>
    %15 = vector.shape_cast %14 : vector<1x8x128xf32> to vector<8x128xf32>
    %c1_16 = arith.constant 1 : index
    %c0_17 = arith.constant 0 : index
    %c0_18 = arith.constant 0 : index
    %16 = vector.load %arg8[%c1_16, %c0_17, %c0_18] : memref<2x8x128xf32, #tpu.memory_space<vmem>>, vector<1x8x128xf32>
    %17 = vector.shape_cast %16 : vector<1x8x128xf32> to vector<8x128xf32>
    %c0_i32_19 = arith.constant 0 : i32
    %18 = arith.index_cast %c0_i32_19 : i32 to index
    %c0_20 = arith.constant 0 : index
    %c0_21 = arith.constant 0 : index
    %19 = vector.load %arg1[%18, %c0_20, %c0_21] : memref<8x8x384xbf16, #tpu.memory_space<vmem>>, vector<1x8x384xbf16>
    %20 = vector.shape_cast %19 : vector<1x8x384xbf16> to vector<8x384xbf16>
    %21 = arith.extf %20 : vector<8x384xbf16> to vector<8x384xf32>
    %22 = arith.truncf %15 : vector<8x128xf32> to vector<8x128xbf16>
    %cst = arith.constant dense<0.000000e+00> : vector<8x256xf32>
    %23 = tpu.matmul %22, %3, %cst {dimension_numbers = #tpu.dot_dimension_numbers<[1], [0], [0], [1], [0, 0, 1, 1], [], []>} : vector<8x128xbf16>, vector<128x256xbf16>, vector<8x256xf32> -> vector<8x256xf32>
    %24 = vector.extract_strided_slice %21 {offsets = [0, 0], sizes = [8, 128], strides = [1, 1]} : vector<8x384xf32> to vector<8x128xf32>
    %25 = vector.extract_strided_slice %23 {offsets = [0, 0], sizes = [8, 128], strides = [1, 1]} : vector<8x256xf32> to vector<8x128xf32>
    %26 = arith.addf %24, %25 : vector<8x128xf32>
    %27 = arith.negf %26 : vector<8x128xf32>
    %28 = math.exp %27 : vector<8x128xf32>
    %cst_22 = arith.constant 1.000000e+00 : f32
    %29 = vector.broadcast %cst_22 : f32 to vector<8x128xf32>
    %30 = arith.addf %29, %28 : vector<8x128xf32>
    %31 = arith.divf %29, %30 : vector<8x128xf32>
    %32 = vector.extract_strided_slice %21 {offsets = [0, 128], sizes = [8, 128], strides = [1, 1]} : vector<8x384xf32> to vector<8x128xf32>
    %33 = vector.extract_strided_slice %23 {offsets = [0, 128], sizes = [8, 128], strides = [1, 1]} : vector<8x256xf32> to vector<8x128xf32>
    %34 = arith.addf %32, %33 : vector<8x128xf32>
    %35 = arith.negf %34 : vector<8x128xf32>
    %36 = math.exp %35 : vector<8x128xf32>
    %cst_23 = arith.constant 1.000000e+00 : f32
    %37 = vector.broadcast %cst_23 : f32 to vector<8x128xf32>
    %38 = arith.addf %37, %36 : vector<8x128xf32>
    %39 = arith.divf %37, %38 : vector<8x128xf32>
    %40 = vector.extract_strided_slice %21 {offsets = [0, 256], sizes = [8, 128], strides = [1, 1]} : vector<8x384xf32> to vector<8x128xf32>
    %41 = arith.mulf %39, %15 : vector<8x128xf32>
    %42 = arith.truncf %41 : vector<8x128xf32> to vector<8x128xbf16>
    %cst_24 = arith.constant dense<0.000000e+00> : vector<8x128xf32>
    %43 = tpu.matmul %42, %5, %cst_24 {dimension_numbers = #tpu.dot_dimension_numbers<[1], [0], [0], [1], [0, 0, 1, 1], [], []>} : vector<8x128xbf16>, vector<128x128xbf16>, vector<8x128xf32> -> vector<8x128xf32>
    %44 = arith.addf %40, %43 : vector<8x128xf32>
    %45 = math.tanh %44 : vector<8x128xf32>
    %46 = arith.subf %15, %45 : vector<8x128xf32>
    %47 = arith.mulf %31, %46 : vector<8x128xf32>
    %48 = arith.addf %45, %47 : vector<8x128xf32>
    %49 = arith.truncf %48 : vector<8x128xf32> to vector<8x128xbf16>
    %50 = arith.truncf %17 : vector<8x128xf32> to vector<8x128xbf16>
    %51 = tpu.concatenate %49, %50 in 1 : vector<8x128xbf16>, vector<8x128xbf16> -> vector<8x256xbf16>
    %cst_25 = arith.constant dense<0.000000e+00> : vector<8x384xf32>
    %52 = tpu.matmul %51, %9, %cst_25 {dimension_numbers = #tpu.dot_dimension_numbers<[1], [0], [0], [1], [0, 0, 1, 1], [], []>} : vector<8x256xbf16>, vector<256x384xbf16>, vector<8x384xf32> -> vector<8x384xf32>
    %53 = arith.addf %52, %13 : vector<8x384xf32>
    %54 = vector.extract_strided_slice %53 {offsets = [0, 0], sizes = [8, 128], strides = [1, 1]} : vector<8x384xf32> to vector<8x128xf32>
    %55 = arith.negf %54 : vector<8x128xf32>
    %56 = math.exp %55 : vector<8x128xf32>
    %cst_26 = arith.constant 1.000000e+00 : f32
    %57 = vector.broadcast %cst_26 : f32 to vector<8x128xf32>
    %58 = arith.addf %57, %56 : vector<8x128xf32>
    %59 = arith.divf %57, %58 : vector<8x128xf32>
    %60 = vector.extract_strided_slice %53 {offsets = [0, 128], sizes = [8, 128], strides = [1, 1]} : vector<8x384xf32> to vector<8x128xf32>
    %61 = arith.negf %60 : vector<8x128xf32>
    %62 = math.exp %61 : vector<8x128xf32>
    %cst_27 = arith.constant 1.000000e+00 : f32
    %63 = vector.broadcast %cst_27 : f32 to vector<8x128xf32>
    %64 = arith.addf %63, %62 : vector<8x128xf32>
    %65 = arith.divf %63, %64 : vector<8x128xf32>
    %66 = vector.extract_strided_slice %53 {offsets = [0, 256], sizes = [8, 128], strides = [1, 1]} : vector<8x384xf32> to vector<8x128xf32>
    %67 = arith.mulf %65, %17 : vector<8x128xf32>
    %68 = arith.truncf %67 : vector<8x128xf32> to vector<8x128xbf16>
    %cst_28 = arith.constant dense<0.000000e+00> : vector<8x128xf32>
    %69 = tpu.matmul %68, %7, %cst_28 {dimension_numbers = #tpu.dot_dimension_numbers<[1], [0], [0], [1], [0, 0, 1, 1], [], []>} : vector<8x128xbf16>, vector<128x128xbf16>, vector<8x128xf32> -> vector<8x128xf32>
    %70 = arith.addf %66, %69 : vector<8x128xf32>
    %71 = math.tanh %70 : vector<8x128xf32>
    %72 = arith.subf %17, %71 : vector<8x128xf32>
    %73 = arith.mulf %59, %72 : vector<8x128xf32>
    %74 = arith.addf %71, %73 : vector<8x128xf32>
    %75 = arith.index_cast %c0_i32_19 : i32 to index
    %c0_29 = arith.constant 0 : index
    %c0_30 = arith.constant 0 : index
    %76 = vector.load %arg7[%75, %c0_29, %c0_30] : memref<8x8x128xf32, #tpu.memory_space<vmem>>, vector<1x8x128xf32>
    %77 = vector.shape_cast %76 : vector<1x8x128xf32> to vector<8x128xf32>
    %78 = vector.shape_cast %74 : vector<8x128xf32> to vector<1x8x128xf32>
    tpu.vector_store %arg7[%75, %c0_29, %c0_30], %78 {strides = array<i32>} : memref<8x8x128xf32, #tpu.memory_space<vmem>>, vector<1x8x128xf32>,
    %c1_i32 = arith.constant 1 : i32
    %79 = arith.index_cast %c1_i32 : i32 to index
    %c0_31 = arith.constant 0 : index
    %c0_32 = arith.constant 0 : index
    %80 = vector.load %arg1[%79, %c0_31, %c0_32] : memref<8x8x384xbf16, #tpu.memory_space<vmem>>, vector<1x8x384xbf16>
    %81 = vector.shape_cast %80 : vector<1x8x384xbf16> to vector<8x384xbf16>
    %82 = arith.extf %81 : vector<8x384xbf16> to vector<8x384xf32>
    %83 = arith.truncf %48 : vector<8x128xf32> to vector<8x128xbf16>
    %cst_33 = arith.constant dense<0.000000e+00> : vector<8x256xf32>
    %84 = tpu.matmul %83, %3, %cst_33 {dimension_numbers = #tpu.dot_dimension_numbers<[1], [0], [0], [1], [0, 0, 1, 1], [], []>} : vector<8x128xbf16>, vector<128x256xbf16>, vector<8x256xf32> -> vector<8x256xf32>
    %85 = vector.extract_strided_slice %82 {offsets = [0, 0], sizes = [8, 128], strides = [1, 1]} : vector<8x384xf32> to vector<8x128xf32>
    %86 = vector.extract_strided_slice %84 {offsets = [0, 0], sizes = [8, 128], strides = [1, 1]} : vector<8x256xf32> to vector<8x128xf32>
    %87 = arith.addf %85, %86 : vector<8x128xf32>
    %88 = arith.negf %87 : vector<8x128xf32>
    %89 = math.exp %88 : vector<8x128xf32>
    %cst_34 = arith.constant 1.000000e+00 : f32
    %90 = vector.broadcast %cst_34 : f32 to vector<8x128xf32>
    %91 = arith.addf %90, %89 : vector<8x128xf32>
    %92 = arith.divf %90, %91 : vector<8x128xf32>
    %93 = vector.extract_strided_slice %82 {offsets = [0, 128], sizes = [8, 128], strides = [1, 1]} : vector<8x384xf32> to vector<8x128xf32>
    %94 = vector.extract_strided_slice %84 {offsets = [0, 128], sizes = [8, 128], strides = [1, 1]} : vector<8x256xf32> to vector<8x128xf32>
    %95 = arith.addf %93, %94 : vector<8x128xf32>
    %96 = arith.negf %95 : vector<8x128xf32>
    %97 = math.exp %96 : vector<8x128xf32>
    %cst_35 = arith.constant 1.000000e+00 : f32
    %98 = vector.broadcast %cst_35 : f32 to vector<8x128xf32>
    %99 = arith.addf %98, %97 : vector<8x128xf32>
    %100 = arith.divf %98, %99 : vector<8x128xf32>
    %101 = vector.extract_strided_slice %82 {offsets = [0, 256], sizes = [8, 128], strides = [1, 1]} : vector<8x384xf32> to vector<8x128xf32>
    %102 = arith.mulf %100, %48 : vector<8x128xf32>
    %103 = arith.truncf %102 : vector<8x128xf32> to vector<8x128xbf16>
    %cst_36 = arith.constant dense<0.000000e+00> : vector<8x128xf32>
    %104 = tpu.matmul %103, %5, %cst_36 {dimension_numbers = #tpu.dot_dimension_numbers<[1], [0], [0], [1], [0, 0, 1, 1], [], []>} : vector<8x128xbf16>, vector<128x128xbf16>, vector<8x128xf32> -> vector<8x128xf32>
    %105 = arith.addf %101, %104 : vector<8x128xf32>
    %106 = math.tanh %105 : vector<8x128xf32>
    %107 = arith.subf %48, %106 : vector<8x128xf32>
    %108 = arith.mulf %92, %107 : vector<8x128xf32>
    %109 = arith.addf %106, %108 : vector<8x128xf32>
    %110 = arith.truncf %109 : vector<8x128xf32> to vector<8x128xbf16>
    %111 = arith.truncf %74 : vector<8x128xf32> to vector<8x128xbf16>
    %112 = tpu.concatenate %110, %111 in 1 : vector<8x128xbf16>, vector<8x128xbf16> -> vector<8x256xbf16>
    %cst_37 = arith.constant dense<0.000000e+00> : vector<8x384xf32>
    %113 = tpu.matmul %112, %9, %cst_37 {dimension_numbers = #tpu.dot_dimension_numbers<[1], [0], [0], [1], [0, 0, 1, 1], [], []>} : vector<8x256xbf16>, vector<256x384xbf16>, vector<8x384xf32> -> vector<8x384xf32>
    %114 = arith.addf %113, %13 : vector<8x384xf32>
    %115 = vector.extract_strided_slice %114 {offsets = [0, 0], sizes = [8, 128], strides = [1, 1]} : vector<8x384xf32> to vector<8x128xf32>
    %116 = arith.negf %115 : vector<8x128xf32>
    %117 = math.exp %116 : vector<8x128xf32>
    %cst_38 = arith.constant 1.000000e+00 : f32
    %118 = vector.broadcast %cst_38 : f32 to vector<8x128xf32>
    %119 = arith.addf %118, %117 : vector<8x128xf32>
    %120 = arith.divf %118, %119 : vector<8x128xf32>
    %121 = vector.extract_strided_slice %114 {offsets = [0, 128], sizes = [8, 128], strides = [1, 1]} : vector<8x384xf32> to vector<8x128xf32>
    %122 = arith.negf %121 : vector<8x128xf32>
    %123 = math.exp %122 : vector<8x128xf32>
    %cst_39 = arith.constant 1.000000e+00 : f32
    %124 = vector.broadcast %cst_39 : f32 to vector<8x128xf32>
    %125 = arith.addf %124, %123 : vector<8x128xf32>
    %126 = arith.divf %124, %125 : vector<8x128xf32>
    %127 = vector.extract_strided_slice %114 {offsets = [0, 256], sizes = [8, 128], strides = [1, 1]} : vector<8x384xf32> to vector<8x128xf32>
    %128 = arith.mulf %126, %74 : vector<8x128xf32>
    %129 = arith.truncf %128 : vector<8x128xf32> to vector<8x128xbf16>
    %cst_40 = arith.constant dense<0.000000e+00> : vector<8x128xf32>
    %130 = tpu.matmul %129, %7, %cst_40 {dimension_numbers = #tpu.dot_dimension_numbers<[1], [0], [0], [1], [0, 0, 1, 1], [], []>} : vector<8x128xbf16>, vector<128x128xbf16>, vector<8x128xf32> -> vector<8x128xf32>
    %131 = arith.addf %127, %130 : vector<8x128xf32>
    %132 = math.tanh %131 : vector<8x128xf32>
    %133 = arith.subf %74, %132 : vector<8x128xf32>
    %134 = arith.mulf %120, %133 : vector<8x128xf32>
    %135 = arith.addf %132, %134 : vector<8x128xf32>
    %136 = arith.index_cast %c1_i32 : i32 to index
    %c0_41 = arith.constant 0 : index
    %c0_42 = arith.constant 0 : index
    %137 = vector.load %arg7[%136, %c0_41, %c0_42] : memref<8x8x128xf32, #tpu.memory_space<vmem>>, vector<1x8x128xf32>
    %138 = vector.shape_cast %137 : vector<1x8x128xf32> to vector<8x128xf32>
    %139 = vector.shape_cast %135 : vector<8x128xf32> to vector<1x8x128xf32>
    tpu.vector_store %arg7[%136, %c0_41, %c0_42], %139 {strides = array<i32>} : memref<8x8x128xf32, #tpu.memory_space<vmem>>, vector<1x8x128xf32>,
    %c2_i32 = arith.constant 2 : i32
    %140 = arith.index_cast %c2_i32 : i32 to index
    %c0_43 = arith.constant 0 : index
    %c0_44 = arith.constant 0 : index
    %141 = vector.load %arg1[%140, %c0_43, %c0_44] : memref<8x8x384xbf16, #tpu.memory_space<vmem>>, vector<1x8x384xbf16>
    %142 = vector.shape_cast %141 : vector<1x8x384xbf16> to vector<8x384xbf16>
    %143 = arith.extf %142 : vector<8x384xbf16> to vector<8x384xf32>
    %144 = arith.truncf %109 : vector<8x128xf32> to vector<8x128xbf16>
    %cst_45 = arith.constant dense<0.000000e+00> : vector<8x256xf32>
    %145 = tpu.matmul %144, %3, %cst_45 {dimension_numbers = #tpu.dot_dimension_numbers<[1], [0], [0], [1], [0, 0, 1, 1], [], []>} : vector<8x128xbf16>, vector<128x256xbf16>, vector<8x256xf32> -> vector<8x256xf32>
    %146 = vector.extract_strided_slice %143 {offsets = [0, 0], sizes = [8, 128], strides = [1, 1]} : vector<8x384xf32> to vector<8x128xf32>
    %147 = vector.extract_strided_slice %145 {offsets = [0, 0], sizes = [8, 128], strides = [1, 1]} : vector<8x256xf32> to vector<8x128xf32>
    %148 = arith.addf %146, %147 : vector<8x128xf32>
    %149 = arith.negf %148 : vector<8x128xf32>
    %150 = math.exp %149 : vector<8x128xf32>
    %cst_46 = arith.constant 1.000000e+00 : f32
    %151 = vector.broadcast %cst_46 : f32 to vector<8x128xf32>
    %152 = arith.addf %151, %150 : vector<8x128xf32>
    %153 = arith.divf %151, %152 : vector<8x128xf32>
    %154 = vector.extract_strided_slice %143 {offsets = [0, 128], sizes = [8, 128], strides = [1, 1]} : vector<8x384xf32> to vector<8x128xf32>
    %155 = vector.extract_strided_slice %145 {offsets = [0, 128], sizes = [8, 128], strides = [1, 1]} : vector<8x256xf32> to vector<8x128xf32>
    %156 = arith.addf %154, %155 : vector<8x128xf32>
    %157 = arith.negf %156 : vector<8x128xf32>
    %158 = math.exp %157 : vector<8x128xf32>
    %cst_47 = arith.constant 1.000000e+00 : f32
    %159 = vector.broadcast %cst_47 : f32 to vector<8x128xf32>
    %160 = arith.addf %159, %158 : vector<8x128xf32>
    %161 = arith.divf %159, %160 : vector<8x128xf32>
    %162 = vector.extract_strided_slice %143 {offsets = [0, 256], sizes = [8, 128], strides = [1, 1]} : vector<8x384xf32> to vector<8x128xf32>
    %163 = arith.mulf %161, %109 : vector<8x128xf32>
    %164 = arith.truncf %163 : vector<8x128xf32> to vector<8x128xbf16>
    %cst_48 = arith.constant dense<0.000000e+00> : vector<8x128xf32>
    %165 = tpu.matmul %164, %5, %cst_48 {dimension_numbers = #tpu.dot_dimension_numbers<[1], [0], [0], [1], [0, 0, 1, 1], [], []>} : vector<8x128xbf16>, vector<128x128xbf16>, vector<8x128xf32> -> vector<8x128xf32>
    %166 = arith.addf %162, %165 : vector<8x128xf32>
    %167 = math.tanh %166 : vector<8x128xf32>
    %168 = arith.subf %109, %167 : vector<8x128xf32>
    %169 = arith.mulf %153, %168 : vector<8x128xf32>
    %170 = arith.addf %167, %169 : vector<8x128xf32>
    %171 = arith.truncf %170 : vector<8x128xf32> to vector<8x128xbf16>
    %172 = arith.truncf %135 : vector<8x128xf32> to vector<8x128xbf16>
    %173 = tpu.concatenate %171, %172 in 1 : vector<8x128xbf16>, vector<8x128xbf16> -> vector<8x256xbf16>
    %cst_49 = arith.constant dense<0.000000e+00> : vector<8x384xf32>
    %174 = tpu.matmul %173, %9, %cst_49 {dimension_numbers = #tpu.dot_dimension_numbers<[1], [0], [0], [1], [0, 0, 1, 1], [], []>} : vector<8x256xbf16>, vector<256x384xbf16>, vector<8x384xf32> -> vector<8x384xf32>
    %175 = arith.addf %174, %13 : vector<8x384xf32>
    %176 = vector.extract_strided_slice %175 {offsets = [0, 0], sizes = [8, 128], strides = [1, 1]} : vector<8x384xf32> to vector<8x128xf32>
    %177 = arith.negf %176 : vector<8x128xf32>
    %178 = math.exp %177 : vector<8x128xf32>
    %cst_50 = arith.constant 1.000000e+00 : f32
    %179 = vector.broadcast %cst_50 : f32 to vector<8x128xf32>
    %180 = arith.addf %179, %178 : vector<8x128xf32>
    %181 = arith.divf %179, %180 : vector<8x128xf32>
    %182 = vector.extract_strided_slice %175 {offsets = [0, 128], sizes = [8, 128], strides = [1, 1]} : vector<8x384xf32> to vector<8x128xf32>
    %183 = arith.negf %182 : vector<8x128xf32>
    %184 = math.exp %183 : vector<8x128xf32>
    %cst_51 = arith.constant 1.000000e+00 : f32
    %185 = vector.broadcast %cst_51 : f32 to vector<8x128xf32>
    %186 = arith.addf %185, %184 : vector<8x128xf32>
    %187 = arith.divf %185, %186 : vector<8x128xf32>
    %188 = vector.extract_strided_slice %175 {offsets = [0, 256], sizes = [8, 128], strides = [1, 1]} : vector<8x384xf32> to vector<8x128xf32>
    %189 = arith.mulf %187, %135 : vector<8x128xf32>
    %190 = arith.truncf %189 : vector<8x128xf32> to vector<8x128xbf16>
    %cst_52 = arith.constant dense<0.000000e+00> : vector<8x128xf32>
    %191 = tpu.matmul %190, %7, %cst_52 {dimension_numbers = #tpu.dot_dimension_numbers<[1], [0], [0], [1], [0, 0, 1, 1], [], []>} : vector<8x128xbf16>, vector<128x128xbf16>, vector<8x128xf32> -> vector<8x128xf32>
    %192 = arith.addf %188, %191 : vector<8x128xf32>
    %193 = math.tanh %192 : vector<8x128xf32>
    %194 = arith.subf %135, %193 : vector<8x128xf32>
    %195 = arith.mulf %181, %194 : vector<8x128xf32>
    %196 = arith.addf %193, %195 : vector<8x128xf32>
    %197 = arith.index_cast %c2_i32 : i32 to index
    %c0_53 = arith.constant 0 : index
    %c0_54 = arith.constant 0 : index
    %198 = vector.load %arg7[%197, %c0_53, %c0_54] : memref<8x8x128xf32, #tpu.memory_space<vmem>>, vector<1x8x128xf32>
    %199 = vector.shape_cast %198 : vector<1x8x128xf32> to vector<8x128xf32>
    %200 = vector.shape_cast %196 : vector<8x128xf32> to vector<1x8x128xf32>
    tpu.vector_store %arg7[%197, %c0_53, %c0_54], %200 {strides = array<i32>} : memref<8x8x128xf32, #tpu.memory_space<vmem>>, vector<1x8x128xf32>,
    %c3_i32 = arith.constant 3 : i32
    %201 = arith.index_cast %c3_i32 : i32 to index
    %c0_55 = arith.constant 0 : index
    %c0_56 = arith.constant 0 : index
    %202 = vector.load %arg1[%201, %c0_55, %c0_56] : memref<8x8x384xbf16, #tpu.memory_space<vmem>>, vector<1x8x384xbf16>
    %203 = vector.shape_cast %202 : vector<1x8x384xbf16> to vector<8x384xbf16>
    %204 = arith.extf %203 : vector<8x384xbf16> to vector<8x384xf32>
    %205 = arith.truncf %170 : vector<8x128xf32> to vector<8x128xbf16>
    %cst_57 = arith.constant dense<0.000000e+00> : vector<8x256xf32>
    %206 = tpu.matmul %205, %3, %cst_57 {dimension_numbers = #tpu.dot_dimension_numbers<[1], [0], [0], [1], [0, 0, 1, 1], [], []>} : vector<8x128xbf16>, vector<128x256xbf16>, vector<8x256xf32> -> vector<8x256xf32>
    %207 = vector.extract_strided_slice %204 {offsets = [0, 0], sizes = [8, 128], strides = [1, 1]} : vector<8x384xf32> to vector<8x128xf32>
    %208 = vector.extract_strided_slice %206 {offsets = [0, 0], sizes = [8, 128], strides = [1, 1]} : vector<8x256xf32> to vector<8x128xf32>
    %209 = arith.addf %207, %208 : vector<8x128xf32>
    %210 = arith.negf %209 : vector<8x128xf32>
    %211 = math.exp %210 : vector<8x128xf32>
    %cst_58 = arith.constant 1.000000e+00 : f32
    %212 = vector.broadcast %cst_58 : f32 to vector<8x128xf32>
    %213 = arith.addf %212, %211 : vector<8x128xf32>
    %214 = arith.divf %212, %213 : vector<8x128xf32>
    %215 = vector.extract_strided_slice %204 {offsets = [0, 128], sizes = [8, 128], strides = [1, 1]} : vector<8x384xf32> to vector<8x128xf32>
    %216 = vector.extract_strided_slice %206 {offsets = [0, 128], sizes = [8, 128], strides = [1, 1]} : vector<8x256xf32> to vector<8x128xf32>
    %217 = arith.addf %215, %216 : vector<8x128xf32>
    %218 = arith.negf %217 : vector<8x128xf32>
    %219 = math.exp %218 : vector<8x128xf32>
    %cst_59 = arith.constant 1.000000e+00 : f32
    %220 = vector.broadcast %cst_59 : f32 to vector<8x128xf32>
    %221 = arith.addf %220, %219 : vector<8x128xf32>
    %222 = arith.divf %220, %221 : vector<8x128xf32>
    %223 = vector.extract_strided_slice %204 {offsets = [0, 256], sizes = [8, 128], strides = [1, 1]} : vector<8x384xf32> to vector<8x128xf32>
    %224 = arith.mulf %222, %170 : vector<8x128xf32>
    %225 = arith.truncf %224 : vector<8x128xf32> to vector<8x128xbf16>
    %cst_60 = arith.constant dense<0.000000e+00> : vector<8x128xf32>
    %226 = tpu.matmul %225, %5, %cst_60 {dimension_numbers = #tpu.dot_dimension_numbers<[1], [0], [0], [1], [0, 0, 1, 1], [], []>} : vector<8x128xbf16>, vector<128x128xbf16>, vector<8x128xf32> -> vector<8x128xf32>
    %227 = arith.addf %223, %226 : vector<8x128xf32>
    %228 = math.tanh %227 : vector<8x128xf32>
    %229 = arith.subf %170, %228 : vector<8x128xf32>
    %230 = arith.mulf %214, %229 : vector<8x128xf32>
    %231 = arith.addf %228, %230 : vector<8x128xf32>
    %232 = arith.truncf %231 : vector<8x128xf32> to vector<8x128xbf16>
    %233 = arith.truncf %196 : vector<8x128xf32> to vector<8x128xbf16>
    %234 = tpu.concatenate %232, %233 in 1 : vector<8x128xbf16>, vector<8x128xbf16> -> vector<8x256xbf16>
    %cst_61 = arith.constant dense<0.000000e+00> : vector<8x384xf32>
    %235 = tpu.matmul %234, %9, %cst_61 {dimension_numbers = #tpu.dot_dimension_numbers<[1], [0], [0], [1], [0, 0, 1, 1], [], []>} : vector<8x256xbf16>, vector<256x384xbf16>, vector<8x384xf32> -> vector<8x384xf32>
    %236 = arith.addf %235, %13 : vector<8x384xf32>
    %237 = vector.extract_strided_slice %236 {offsets = [0, 0], sizes = [8, 128], strides = [1, 1]} : vector<8x384xf32> to vector<8x128xf32>
    %238 = arith.negf %237 : vector<8x128xf32>
    %239 = math.exp %238 : vector<8x128xf32>
    %cst_62 = arith.constant 1.000000e+00 : f32
    %240 = vector.broadcast %cst_62 : f32 to vector<8x128xf32>
    %241 = arith.addf %240, %239 : vector<8x128xf32>
    %242 = arith.divf %240, %241 : vector<8x128xf32>
    %243 = vector.extract_strided_slice %236 {offsets = [0, 128], sizes = [8, 128], strides = [1, 1]} : vector<8x384xf32> to vector<8x128xf32>
    %244 = arith.negf %243 : vector<8x128xf32>
    %245 = math.exp %244 : vector<8x128xf32>
    %cst_63 = arith.constant 1.000000e+00 : f32
    %246 = vector.broadcast %cst_63 : f32 to vector<8x128xf32>
    %247 = arith.addf %246, %245 : vector<8x128xf32>
    %248 = arith.divf %246, %247 : vector<8x128xf32>
    %249 = vector.extract_strided_slice %236 {offsets = [0, 256], sizes = [8, 128], strides = [1, 1]} : vector<8x384xf32> to vector<8x128xf32>
    %250 = arith.mulf %248, %196 : vector<8x128xf32>
    %251 = arith.truncf %250 : vector<8x128xf32> to vector<8x128xbf16>
    %cst_64 = arith.constant dense<0.000000e+00> : vector<8x128xf32>
    %252 = tpu.matmul %251, %7, %cst_64 {dimension_numbers = #tpu.dot_dimension_numbers<[1], [0], [0], [1], [0, 0, 1, 1], [], []>} : vector<8x128xbf16>, vector<128x128xbf16>, vector<8x128xf32> -> vector<8x128xf32>
    %253 = arith.addf %249, %252 : vector<8x128xf32>
    %254 = math.tanh %253 : vector<8x128xf32>
    %255 = arith.subf %196, %254 : vector<8x128xf32>
    %256 = arith.mulf %242, %255 : vector<8x128xf32>
    %257 = arith.addf %254, %256 : vector<8x128xf32>
    %258 = arith.index_cast %c3_i32 : i32 to index
    %c0_65 = arith.constant 0 : index
    %c0_66 = arith.constant 0 : index
    %259 = vector.load %arg7[%258, %c0_65, %c0_66] : memref<8x8x128xf32, #tpu.memory_space<vmem>>, vector<1x8x128xf32>
    %260 = vector.shape_cast %259 : vector<1x8x128xf32> to vector<8x128xf32>
    %261 = vector.shape_cast %257 : vector<8x128xf32> to vector<1x8x128xf32>
    tpu.vector_store %arg7[%258, %c0_65, %c0_66], %261 {strides = array<i32>} : memref<8x8x128xf32, #tpu.memory_space<vmem>>, vector<1x8x128xf32>,
    %c4_i32 = arith.constant 4 : i32
    %262 = arith.index_cast %c4_i32 : i32 to index
    %c0_67 = arith.constant 0 : index
    %c0_68 = arith.constant 0 : index
    %263 = vector.load %arg1[%262, %c0_67, %c0_68] : memref<8x8x384xbf16, #tpu.memory_space<vmem>>, vector<1x8x384xbf16>
    %264 = vector.shape_cast %263 : vector<1x8x384xbf16> to vector<8x384xbf16>
    %265 = arith.extf %264 : vector<8x384xbf16> to vector<8x384xf32>
    %266 = arith.truncf %231 : vector<8x128xf32> to vector<8x128xbf16>
    %cst_69 = arith.constant dense<0.000000e+00> : vector<8x256xf32>
    %267 = tpu.matmul %266, %3, %cst_69 {dimension_numbers = #tpu.dot_dimension_numbers<[1], [0], [0], [1], [0, 0, 1, 1], [], []>} : vector<8x128xbf16>, vector<128x256xbf16>, vector<8x256xf32> -> vector<8x256xf32>
    %268 = vector.extract_strided_slice %265 {offsets = [0, 0], sizes = [8, 128], strides = [1, 1]} : vector<8x384xf32> to vector<8x128xf32>
    %269 = vector.extract_strided_slice %267 {offsets = [0, 0], sizes = [8, 128], strides = [1, 1]} : vector<8x256xf32> to vector<8x128xf32>
    %270 = arith.addf %268, %269 : vector<8x128xf32>
    %271 = arith.negf %270 : vector<8x128xf32>
    %272 = math.exp %271 : vector<8x128xf32>
    %cst_70 = arith.constant 1.000000e+00 : f32
    %273 = vector.broadcast %cst_70 : f32 to vector<8x128xf32>
    %274 = arith.addf %273, %272 : vector<8x128xf32>
    %275 = arith.divf %273, %274 : vector<8x128xf32>
    %276 = vector.extract_strided_slice %265 {offsets = [0, 128], sizes = [8, 128], strides = [1, 1]} : vector<8x384xf32> to vector<8x128xf32>
    %277 = vector.extract_strided_slice %267 {offsets = [0, 128], sizes = [8, 128], strides = [1, 1]} : vector<8x256xf32> to vector<8x128xf32>
    %278 = arith.addf %276, %277 : vector<8x128xf32>
    %279 = arith.negf %278 : vector<8x128xf32>
    %280 = math.exp %279 : vector<8x128xf32>
    %cst_71 = arith.constant 1.000000e+00 : f32
    %281 = vector.broadcast %cst_71 : f32 to vector<8x128xf32>
    %282 = arith.addf %281, %280 : vector<8x128xf32>
    %283 = arith.divf %281, %282 : vector<8x128xf32>
    %284 = vector.extract_strided_slice %265 {offsets = [0, 256], sizes = [8, 128], strides = [1, 1]} : vector<8x384xf32> to vector<8x128xf32>
    %285 = arith.mulf %283, %231 : vector<8x128xf32>
    %286 = arith.truncf %285 : vector<8x128xf32> to vector<8x128xbf16>
    %cst_72 = arith.constant dense<0.000000e+00> : vector<8x128xf32>
    %287 = tpu.matmul %286, %5, %cst_72 {dimension_numbers = #tpu.dot_dimension_numbers<[1], [0], [0], [1], [0, 0, 1, 1], [], []>} : vector<8x128xbf16>, vector<128x128xbf16>, vector<8x128xf32> -> vector<8x128xf32>
    %288 = arith.addf %284, %287 : vector<8x128xf32>
    %289 = math.tanh %288 : vector<8x128xf32>
    %290 = arith.subf %231, %289 : vector<8x128xf32>
    %291 = arith.mulf %275, %290 : vector<8x128xf32>
    %292 = arith.addf %289, %291 : vector<8x128xf32>
    %293 = arith.truncf %292 : vector<8x128xf32> to vector<8x128xbf16>
    %294 = arith.truncf %257 : vector<8x128xf32> to vector<8x128xbf16>
    %295 = tpu.concatenate %293, %294 in 1 : vector<8x128xbf16>, vector<8x128xbf16> -> vector<8x256xbf16>
    %cst_73 = arith.constant dense<0.000000e+00> : vector<8x384xf32>
    %296 = tpu.matmul %295, %9, %cst_73 {dimension_numbers = #tpu.dot_dimension_numbers<[1], [0], [0], [1], [0, 0, 1, 1], [], []>} : vector<8x256xbf16>, vector<256x384xbf16>, vector<8x384xf32> -> vector<8x384xf32>
    %297 = arith.addf %296, %13 : vector<8x384xf32>
    %298 = vector.extract_strided_slice %297 {offsets = [0, 0], sizes = [8, 128], strides = [1, 1]} : vector<8x384xf32> to vector<8x128xf32>
    %299 = arith.negf %298 : vector<8x128xf32>
    %300 = math.exp %299 : vector<8x128xf32>
    %cst_74 = arith.constant 1.000000e+00 : f32
    %301 = vector.broadcast %cst_74 : f32 to vector<8x128xf32>
    %302 = arith.addf %301, %300 : vector<8x128xf32>
    %303 = arith.divf %301, %302 : vector<8x128xf32>
    %304 = vector.extract_strided_slice %297 {offsets = [0, 128], sizes = [8, 128], strides = [1, 1]} : vector<8x384xf32> to vector<8x128xf32>
    %305 = arith.negf %304 : vector<8x128xf32>
    %306 = math.exp %305 : vector<8x128xf32>
    %cst_75 = arith.constant 1.000000e+00 : f32
    %307 = vector.broadcast %cst_75 : f32 to vector<8x128xf32>
    %308 = arith.addf %307, %306 : vector<8x128xf32>
    %309 = arith.divf %307, %308 : vector<8x128xf32>
    %310 = vector.extract_strided_slice %297 {offsets = [0, 256], sizes = [8, 128], strides = [1, 1]} : vector<8x384xf32> to vector<8x128xf32>
    %311 = arith.mulf %309, %257 : vector<8x128xf32>
    %312 = arith.truncf %311 : vector<8x128xf32> to vector<8x128xbf16>
    %cst_76 = arith.constant dense<0.000000e+00> : vector<8x128xf32>
    %313 = tpu.matmul %312, %7, %cst_76 {dimension_numbers = #tpu.dot_dimension_numbers<[1], [0], [0], [1], [0, 0, 1, 1], [], []>} : vector<8x128xbf16>, vector<128x128xbf16>, vector<8x128xf32> -> vector<8x128xf32>
    %314 = arith.addf %310, %313 : vector<8x128xf32>
    %315 = math.tanh %314 : vector<8x128xf32>
    %316 = arith.subf %257, %315 : vector<8x128xf32>
    %317 = arith.mulf %303, %316 : vector<8x128xf32>
    %318 = arith.addf %315, %317 : vector<8x128xf32>
    %319 = arith.index_cast %c4_i32 : i32 to index
    %c0_77 = arith.constant 0 : index
    %c0_78 = arith.constant 0 : index
    %320 = vector.load %arg7[%319, %c0_77, %c0_78] : memref<8x8x128xf32, #tpu.memory_space<vmem>>, vector<1x8x128xf32>
    %321 = vector.shape_cast %320 : vector<1x8x128xf32> to vector<8x128xf32>
    %322 = vector.shape_cast %318 : vector<8x128xf32> to vector<1x8x128xf32>
    tpu.vector_store %arg7[%319, %c0_77, %c0_78], %322 {strides = array<i32>} : memref<8x8x128xf32, #tpu.memory_space<vmem>>, vector<1x8x128xf32>,
    %c5_i32 = arith.constant 5 : i32
    %323 = arith.index_cast %c5_i32 : i32 to index
    %c0_79 = arith.constant 0 : index
    %c0_80 = arith.constant 0 : index
    %324 = vector.load %arg1[%323, %c0_79, %c0_80] : memref<8x8x384xbf16, #tpu.memory_space<vmem>>, vector<1x8x384xbf16>
    %325 = vector.shape_cast %324 : vector<1x8x384xbf16> to vector<8x384xbf16>
    %326 = arith.extf %325 : vector<8x384xbf16> to vector<8x384xf32>
    %327 = arith.truncf %292 : vector<8x128xf32> to vector<8x128xbf16>
    %cst_81 = arith.constant dense<0.000000e+00> : vector<8x256xf32>
    %328 = tpu.matmul %327, %3, %cst_81 {dimension_numbers = #tpu.dot_dimension_numbers<[1], [0], [0], [1], [0, 0, 1, 1], [], []>} : vector<8x128xbf16>, vector<128x256xbf16>, vector<8x256xf32> -> vector<8x256xf32>
    %329 = vector.extract_strided_slice %326 {offsets = [0, 0], sizes = [8, 128], strides = [1, 1]} : vector<8x384xf32> to vector<8x128xf32>
    %330 = vector.extract_strided_slice %328 {offsets = [0, 0], sizes = [8, 128], strides = [1, 1]} : vector<8x256xf32> to vector<8x128xf32>
    %331 = arith.addf %329, %330 : vector<8x128xf32>
    %332 = arith.negf %331 : vector<8x128xf32>
    %333 = math.exp %332 : vector<8x128xf32>
    %cst_82 = arith.constant 1.000000e+00 : f32
    %334 = vector.broadcast %cst_82 : f32 to vector<8x128xf32>
    %335 = arith.addf %334, %333 : vector<8x128xf32>
    %336 = arith.divf %334, %335 : vector<8x128xf32>
    %337 = vector.extract_strided_slice %326 {offsets = [0, 128], sizes = [8, 128], strides = [1, 1]} : vector<8x384xf32> to vector<8x128xf32>
    %338 = vector.extract_strided_slice %328 {offsets = [0, 128], sizes = [8, 128], strides = [1, 1]} : vector<8x256xf32> to vector<8x128xf32>
    %339 = arith.addf %337, %338 : vector<8x128xf32>
    %340 = arith.negf %339 : vector<8x128xf32>
    %341 = math.exp %340 : vector<8x128xf32>
    %cst_83 = arith.constant 1.000000e+00 : f32
    %342 = vector.broadcast %cst_83 : f32 to vector<8x128xf32>
    %343 = arith.addf %342, %341 : vector<8x128xf32>
    %344 = arith.divf %342, %343 : vector<8x128xf32>
    %345 = vector.extract_strided_slice %326 {offsets = [0, 256], sizes = [8, 128], strides = [1, 1]} : vector<8x384xf32> to vector<8x128xf32>
    %346 = arith.mulf %344, %292 : vector<8x128xf32>
    %347 = arith.truncf %346 : vector<8x128xf32> to vector<8x128xbf16>
    %cst_84 = arith.constant dense<0.000000e+00> : vector<8x128xf32>
    %348 = tpu.matmul %347, %5, %cst_84 {dimension_numbers = #tpu.dot_dimension_numbers<[1], [0], [0], [1], [0, 0, 1, 1], [], []>} : vector<8x128xbf16>, vector<128x128xbf16>, vector<8x128xf32> -> vector<8x128xf32>
    %349 = arith.addf %345, %348 : vector<8x128xf32>
    %350 = math.tanh %349 : vector<8x128xf32>
    %351 = arith.subf %292, %350 : vector<8x128xf32>
    %352 = arith.mulf %336, %351 : vector<8x128xf32>
    %353 = arith.addf %350, %352 : vector<8x128xf32>
    %354 = arith.truncf %353 : vector<8x128xf32> to vector<8x128xbf16>
    %355 = arith.truncf %318 : vector<8x128xf32> to vector<8x128xbf16>
    %356 = tpu.concatenate %354, %355 in 1 : vector<8x128xbf16>, vector<8x128xbf16> -> vector<8x256xbf16>
    %cst_85 = arith.constant dense<0.000000e+00> : vector<8x384xf32>
    %357 = tpu.matmul %356, %9, %cst_85 {dimension_numbers = #tpu.dot_dimension_numbers<[1], [0], [0], [1], [0, 0, 1, 1], [], []>} : vector<8x256xbf16>, vector<256x384xbf16>, vector<8x384xf32> -> vector<8x384xf32>
    %358 = arith.addf %357, %13 : vector<8x384xf32>
    %359 = vector.extract_strided_slice %358 {offsets = [0, 0], sizes = [8, 128], strides = [1, 1]} : vector<8x384xf32> to vector<8x128xf32>
    %360 = arith.negf %359 : vector<8x128xf32>
    %361 = math.exp %360 : vector<8x128xf32>
    %cst_86 = arith.constant 1.000000e+00 : f32
    %362 = vector.broadcast %cst_86 : f32 to vector<8x128xf32>
    %363 = arith.addf %362, %361 : vector<8x128xf32>
    %364 = arith.divf %362, %363 : vector<8x128xf32>
    %365 = vector.extract_strided_slice %358 {offsets = [0, 128], sizes = [8, 128], strides = [1, 1]} : vector<8x384xf32> to vector<8x128xf32>
    %366 = arith.negf %365 : vector<8x128xf32>
    %367 = math.exp %366 : vector<8x128xf32>
    %cst_87 = arith.constant 1.000000e+00 : f32
    %368 = vector.broadcast %cst_87 : f32 to vector<8x128xf32>
    %369 = arith.addf %368, %367 : vector<8x128xf32>
    %370 = arith.divf %368, %369 : vector<8x128xf32>
    %371 = vector.extract_strided_slice %358 {offsets = [0, 256], sizes = [8, 128], strides = [1, 1]} : vector<8x384xf32> to vector<8x128xf32>
    %372 = arith.mulf %370, %318 : vector<8x128xf32>
    %373 = arith.truncf %372 : vector<8x128xf32> to vector<8x128xbf16>
    %cst_88 = arith.constant dense<0.000000e+00> : vector<8x128xf32>
    %374 = tpu.matmul %373, %7, %cst_88 {dimension_numbers = #tpu.dot_dimension_numbers<[1], [0], [0], [1], [0, 0, 1, 1], [], []>} : vector<8x128xbf16>, vector<128x128xbf16>, vector<8x128xf32> -> vector<8x128xf32>
    %375 = arith.addf %371, %374 : vector<8x128xf32>
    %376 = math.tanh %375 : vector<8x128xf32>
    %377 = arith.subf %318, %376 : vector<8x128xf32>
    %378 = arith.mulf %364, %377 : vector<8x128xf32>
    %379 = arith.addf %376, %378 : vector<8x128xf32>
    %380 = arith.index_cast %c5_i32 : i32 to index
    %c0_89 = arith.constant 0 : index
    %c0_90 = arith.constant 0 : index
    %381 = vector.load %arg7[%380, %c0_89, %c0_90] : memref<8x8x128xf32, #tpu.memory_space<vmem>>, vector<1x8x128xf32>
    %382 = vector.shape_cast %381 : vector<1x8x128xf32> to vector<8x128xf32>
    %383 = vector.shape_cast %379 : vector<8x128xf32> to vector<1x8x128xf32>
    tpu.vector_store %arg7[%380, %c0_89, %c0_90], %383 {strides = array<i32>} : memref<8x8x128xf32, #tpu.memory_space<vmem>>, vector<1x8x128xf32>,
    %c6_i32 = arith.constant 6 : i32
    %384 = arith.index_cast %c6_i32 : i32 to index
    %c0_91 = arith.constant 0 : index
    %c0_92 = arith.constant 0 : index
    %385 = vector.load %arg1[%384, %c0_91, %c0_92] : memref<8x8x384xbf16, #tpu.memory_space<vmem>>, vector<1x8x384xbf16>
    %386 = vector.shape_cast %385 : vector<1x8x384xbf16> to vector<8x384xbf16>
    %387 = arith.extf %386 : vector<8x384xbf16> to vector<8x384xf32>
    %388 = arith.truncf %353 : vector<8x128xf32> to vector<8x128xbf16>
    %cst_93 = arith.constant dense<0.000000e+00> : vector<8x256xf32>
    %389 = tpu.matmul %388, %3, %cst_93 {dimension_numbers = #tpu.dot_dimension_numbers<[1], [0], [0], [1], [0, 0, 1, 1], [], []>} : vector<8x128xbf16>, vector<128x256xbf16>, vector<8x256xf32> -> vector<8x256xf32>
    %390 = vector.extract_strided_slice %387 {offsets = [0, 0], sizes = [8, 128], strides = [1, 1]} : vector<8x384xf32> to vector<8x128xf32>
    %391 = vector.extract_strided_slice %389 {offsets = [0, 0], sizes = [8, 128], strides = [1, 1]} : vector<8x256xf32> to vector<8x128xf32>
    %392 = arith.addf %390, %391 : vector<8x128xf32>
    %393 = arith.negf %392 : vector<8x128xf32>
    %394 = math.exp %393 : vector<8x128xf32>
    %cst_94 = arith.constant 1.000000e+00 : f32
    %395 = vector.broadcast %cst_94 : f32 to vector<8x128xf32>
    %396 = arith.addf %395, %394 : vector<8x128xf32>
    %397 = arith.divf %395, %396 : vector<8x128xf32>
    %398 = vector.extract_strided_slice %387 {offsets = [0, 128], sizes = [8, 128], strides = [1, 1]} : vector<8x384xf32> to vector<8x128xf32>
    %399 = vector.extract_strided_slice %389 {offsets = [0, 128], sizes = [8, 128], strides = [1, 1]} : vector<8x256xf32> to vector<8x128xf32>
    %400 = arith.addf %398, %399 : vector<8x128xf32>
    %401 = arith.negf %400 : vector<8x128xf32>
    %402 = math.exp %401 : vector<8x128xf32>
    %cst_95 = arith.constant 1.000000e+00 : f32
    %403 = vector.broadcast %cst_95 : f32 to vector<8x128xf32>
    %404 = arith.addf %403, %402 : vector<8x128xf32>
    %405 = arith.divf %403, %404 : vector<8x128xf32>
    %406 = vector.extract_strided_slice %387 {offsets = [0, 256], sizes = [8, 128], strides = [1, 1]} : vector<8x384xf32> to vector<8x128xf32>
    %407 = arith.mulf %405, %353 : vector<8x128xf32>
    %408 = arith.truncf %407 : vector<8x128xf32> to vector<8x128xbf16>
    %cst_96 = arith.constant dense<0.000000e+00> : vector<8x128xf32>
    %409 = tpu.matmul %408, %5, %cst_96 {dimension_numbers = #tpu.dot_dimension_numbers<[1], [0], [0], [1], [0, 0, 1, 1], [], []>} : vector<8x128xbf16>, vector<128x128xbf16>, vector<8x128xf32> -> vector<8x128xf32>
    %410 = arith.addf %406, %409 : vector<8x128xf32>
    %411 = math.tanh %410 : vector<8x128xf32>
    %412 = arith.subf %353, %411 : vector<8x128xf32>
    %413 = arith.mulf %397, %412 : vector<8x128xf32>
    %414 = arith.addf %411, %413 : vector<8x128xf32>
    %415 = arith.truncf %414 : vector<8x128xf32> to vector<8x128xbf16>
    %416 = arith.truncf %379 : vector<8x128xf32> to vector<8x128xbf16>
    %417 = tpu.concatenate %415, %416 in 1 : vector<8x128xbf16>, vector<8x128xbf16> -> vector<8x256xbf16>
    %cst_97 = arith.constant dense<0.000000e+00> : vector<8x384xf32>
    %418 = tpu.matmul %417, %9, %cst_97 {dimension_numbers = #tpu.dot_dimension_numbers<[1], [0], [0], [1], [0, 0, 1, 1], [], []>} : vector<8x256xbf16>, vector<256x384xbf16>, vector<8x384xf32> -> vector<8x384xf32>
    %419 = arith.addf %418, %13 : vector<8x384xf32>
    %420 = vector.extract_strided_slice %419 {offsets = [0, 0], sizes = [8, 128], strides = [1, 1]} : vector<8x384xf32> to vector<8x128xf32>
    %421 = arith.negf %420 : vector<8x128xf32>
    %422 = math.exp %421 : vector<8x128xf32>
    %cst_98 = arith.constant 1.000000e+00 : f32
    %423 = vector.broadcast %cst_98 : f32 to vector<8x128xf32>
    %424 = arith.addf %423, %422 : vector<8x128xf32>
    %425 = arith.divf %423, %424 : vector<8x128xf32>
    %426 = vector.extract_strided_slice %419 {offsets = [0, 128], sizes = [8, 128], strides = [1, 1]} : vector<8x384xf32> to vector<8x128xf32>
    %427 = arith.negf %426 : vector<8x128xf32>
    %428 = math.exp %427 : vector<8x128xf32>
    %cst_99 = arith.constant 1.000000e+00 : f32
    %429 = vector.broadcast %cst_99 : f32 to vector<8x128xf32>
    %430 = arith.addf %429, %428 : vector<8x128xf32>
    %431 = arith.divf %429, %430 : vector<8x128xf32>
    %432 = vector.extract_strided_slice %419 {offsets = [0, 256], sizes = [8, 128], strides = [1, 1]} : vector<8x384xf32> to vector<8x128xf32>
    %433 = arith.mulf %431, %379 : vector<8x128xf32>
    %434 = arith.truncf %433 : vector<8x128xf32> to vector<8x128xbf16>
    %cst_100 = arith.constant dense<0.000000e+00> : vector<8x128xf32>
    %435 = tpu.matmul %434, %7, %cst_100 {dimension_numbers = #tpu.dot_dimension_numbers<[1], [0], [0], [1], [0, 0, 1, 1], [], []>} : vector<8x128xbf16>, vector<128x128xbf16>, vector<8x128xf32> -> vector<8x128xf32>
    %436 = arith.addf %432, %435 : vector<8x128xf32>
    %437 = math.tanh %436 : vector<8x128xf32>
    %438 = arith.subf %379, %437 : vector<8x128xf32>
    %439 = arith.mulf %425, %438 : vector<8x128xf32>
    %440 = arith.addf %437, %439 : vector<8x128xf32>
    %441 = arith.index_cast %c6_i32 : i32 to index
    %c0_101 = arith.constant 0 : index
    %c0_102 = arith.constant 0 : index
    %442 = vector.load %arg7[%441, %c0_101, %c0_102] : memref<8x8x128xf32, #tpu.memory_space<vmem>>, vector<1x8x128xf32>
    %443 = vector.shape_cast %442 : vector<1x8x128xf32> to vector<8x128xf32>
    %444 = vector.shape_cast %440 : vector<8x128xf32> to vector<1x8x128xf32>
    tpu.vector_store %arg7[%441, %c0_101, %c0_102], %444 {strides = array<i32>} : memref<8x8x128xf32, #tpu.memory_space<vmem>>, vector<1x8x128xf32>,
    %c7_i32 = arith.constant 7 : i32
    %445 = arith.index_cast %c7_i32 : i32 to index
    %c0_103 = arith.constant 0 : index
    %c0_104 = arith.constant 0 : index
    %446 = vector.load %arg1[%445, %c0_103, %c0_104] : memref<8x8x384xbf16, #tpu.memory_space<vmem>>, vector<1x8x384xbf16>
    %447 = vector.shape_cast %446 : vector<1x8x384xbf16> to vector<8x384xbf16>
    %448 = arith.extf %447 : vector<8x384xbf16> to vector<8x384xf32>
    %449 = arith.truncf %414 : vector<8x128xf32> to vector<8x128xbf16>
    %cst_105 = arith.constant dense<0.000000e+00> : vector<8x256xf32>
    %450 = tpu.matmul %449, %3, %cst_105 {dimension_numbers = #tpu.dot_dimension_numbers<[1], [0], [0], [1], [0, 0, 1, 1], [], []>} : vector<8x128xbf16>, vector<128x256xbf16>, vector<8x256xf32> -> vector<8x256xf32>
    %451 = vector.extract_strided_slice %448 {offsets = [0, 0], sizes = [8, 128], strides = [1, 1]} : vector<8x384xf32> to vector<8x128xf32>
    %452 = vector.extract_strided_slice %450 {offsets = [0, 0], sizes = [8, 128], strides = [1, 1]} : vector<8x256xf32> to vector<8x128xf32>
    %453 = arith.addf %451, %452 : vector<8x128xf32>
    %454 = arith.negf %453 : vector<8x128xf32>
    %455 = math.exp %454 : vector<8x128xf32>
    %cst_106 = arith.constant 1.000000e+00 : f32
    %456 = vector.broadcast %cst_106 : f32 to vector<8x128xf32>
    %457 = arith.addf %456, %455 : vector<8x128xf32>
    %458 = arith.divf %456, %457 : vector<8x128xf32>
    %459 = vector.extract_strided_slice %448 {offsets = [0, 128], sizes = [8, 128], strides = [1, 1]} : vector<8x384xf32> to vector<8x128xf32>
    %460 = vector.extract_strided_slice %450 {offsets = [0, 128], sizes = [8, 128], strides = [1, 1]} : vector<8x256xf32> to vector<8x128xf32>
    %461 = arith.addf %459, %460 : vector<8x128xf32>
    %462 = arith.negf %461 : vector<8x128xf32>
    %463 = math.exp %462 : vector<8x128xf32>
    %cst_107 = arith.constant 1.000000e+00 : f32
    %464 = vector.broadcast %cst_107 : f32 to vector<8x128xf32>
    %465 = arith.addf %464, %463 : vector<8x128xf32>
    %466 = arith.divf %464, %465 : vector<8x128xf32>
    %467 = vector.extract_strided_slice %448 {offsets = [0, 256], sizes = [8, 128], strides = [1, 1]} : vector<8x384xf32> to vector<8x128xf32>
    %468 = arith.mulf %466, %414 : vector<8x128xf32>
    %469 = arith.truncf %468 : vector<8x128xf32> to vector<8x128xbf16>
    %cst_108 = arith.constant dense<0.000000e+00> : vector<8x128xf32>
    %470 = tpu.matmul %469, %5, %cst_108 {dimension_numbers = #tpu.dot_dimension_numbers<[1], [0], [0], [1], [0, 0, 1, 1], [], []>} : vector<8x128xbf16>, vector<128x128xbf16>, vector<8x128xf32> -> vector<8x128xf32>
    %471 = arith.addf %467, %470 : vector<8x128xf32>
    %472 = math.tanh %471 : vector<8x128xf32>
    %473 = arith.subf %414, %472 : vector<8x128xf32>
    %474 = arith.mulf %458, %473 : vector<8x128xf32>
    %475 = arith.addf %472, %474 : vector<8x128xf32>
    %476 = arith.truncf %475 : vector<8x128xf32> to vector<8x128xbf16>
    %477 = arith.truncf %440 : vector<8x128xf32> to vector<8x128xbf16>
    %478 = tpu.concatenate %476, %477 in 1 : vector<8x128xbf16>, vector<8x128xbf16> -> vector<8x256xbf16>
    %cst_109 = arith.constant dense<0.000000e+00> : vector<8x384xf32>
    %479 = tpu.matmul %478, %9, %cst_109 {dimension_numbers = #tpu.dot_dimension_numbers<[1], [0], [0], [1], [0, 0, 1, 1], [], []>} : vector<8x256xbf16>, vector<256x384xbf16>, vector<8x384xf32> -> vector<8x384xf32>
    %480 = arith.addf %479, %13 : vector<8x384xf32>
    %481 = vector.extract_strided_slice %480 {offsets = [0, 0], sizes = [8, 128], strides = [1, 1]} : vector<8x384xf32> to vector<8x128xf32>
    %482 = arith.negf %481 : vector<8x128xf32>
    %483 = math.exp %482 : vector<8x128xf32>
    %cst_110 = arith.constant 1.000000e+00 : f32
    %484 = vector.broadcast %cst_110 : f32 to vector<8x128xf32>
    %485 = arith.addf %484, %483 : vector<8x128xf32>
    %486 = arith.divf %484, %485 : vector<8x128xf32>
    %487 = vector.extract_strided_slice %480 {offsets = [0, 128], sizes = [8, 128], strides = [1, 1]} : vector<8x384xf32> to vector<8x128xf32>
    %488 = arith.negf %487 : vector<8x128xf32>
    %489 = math.exp %488 : vector<8x128xf32>
    %cst_111 = arith.constant 1.000000e+00 : f32
    %490 = vector.broadcast %cst_111 : f32 to vector<8x128xf32>
    %491 = arith.addf %490, %489 : vector<8x128xf32>
    %492 = arith.divf %490, %491 : vector<8x128xf32>
    %493 = vector.extract_strided_slice %480 {offsets = [0, 256], sizes = [8, 128], strides = [1, 1]} : vector<8x384xf32> to vector<8x128xf32>
    %494 = arith.mulf %492, %440 : vector<8x128xf32>
    %495 = arith.truncf %494 : vector<8x128xf32> to vector<8x128xbf16>
    %cst_112 = arith.constant dense<0.000000e+00> : vector<8x128xf32>
    %496 = tpu.matmul %495, %7, %cst_112 {dimension_numbers = #tpu.dot_dimension_numbers<[1], [0], [0], [1], [0, 0, 1, 1], [], []>} : vector<8x128xbf16>, vector<128x128xbf16>, vector<8x128xf32> -> vector<8x128xf32>
    %497 = arith.addf %493, %496 : vector<8x128xf32>
    %498 = math.tanh %497 : vector<8x128xf32>
    %499 = arith.subf %440, %498 : vector<8x128xf32>
    %500 = arith.mulf %486, %499 : vector<8x128xf32>
    %501 = arith.addf %498, %500 : vector<8x128xf32>
    %502 = arith.index_cast %c7_i32 : i32 to index
    %c0_113 = arith.constant 0 : index
    %c0_114 = arith.constant 0 : index
    %503 = vector.load %arg7[%502, %c0_113, %c0_114] : memref<8x8x128xf32, #tpu.memory_space<vmem>>, vector<1x8x128xf32>
    %504 = vector.shape_cast %503 : vector<1x8x128xf32> to vector<8x128xf32>
    %505 = vector.shape_cast %501 : vector<8x128xf32> to vector<1x8x128xf32>
    tpu.vector_store %arg7[%502, %c0_113, %c0_114], %505 {strides = array<i32>} : memref<8x8x128xf32, #tpu.memory_space<vmem>>, vector<1x8x128xf32>,
    %c8_i32 = arith.constant 8 : i32
    %c0_115 = arith.constant 0 : index
    %c0_116 = arith.constant 0 : index
    %c0_117 = arith.constant 0 : index
    %506 = vector.load %arg8[%c0_115, %c0_116, %c0_117] : memref<2x8x128xf32, #tpu.memory_space<vmem>>, vector<1x8x128xf32>
    %507 = vector.shape_cast %506 : vector<1x8x128xf32> to vector<8x128xf32>
    %508 = vector.shape_cast %475 : vector<8x128xf32> to vector<1x8x128xf32>
    tpu.vector_store %arg8[%c0_115, %c0_116, %c0_117], %508 {strides = array<i32>} : memref<2x8x128xf32, #tpu.memory_space<vmem>>, vector<1x8x128xf32>,
    %c1_118 = arith.constant 1 : index
    %c0_119 = arith.constant 0 : index
    %c0_120 = arith.constant 0 : index
    %509 = vector.load %arg8[%c1_118, %c0_119, %c0_120] : memref<2x8x128xf32, #tpu.memory_space<vmem>>, vector<1x8x128xf32>
    %510 = vector.shape_cast %509 : vector<1x8x128xf32> to vector<8x128xf32>
    %511 = vector.shape_cast %501 : vector<8x128xf32> to vector<1x8x128xf32>
    tpu.vector_store %arg8[%c1_118, %c0_119, %c0_120], %511 {strides = array<i32>} : memref<2x8x128xf32, #tpu.memory_space<vmem>>, vector<1x8x128xf32>,
    return
  }
  func.func @transform_0(%arg0: i32) -> (i32, i32, i32) {
    %c0_i32 = arith.constant 0 : i32
    %c0_i32_0 = arith.constant 0 : i32
    %c0_i32_1 = arith.constant 0 : i32
    return %arg0, %c0_i32, %c0_i32_0 : i32, i32, i32
  }
  func.func @transform_1(%arg0: i32) -> (i32, i32, i32) {
    %c0_i32 = arith.constant 0 : i32
    %c0_i32_0 = arith.constant 0 : i32
    %c0_i32_1 = arith.constant 0 : i32
    %c0_i32_2 = arith.constant 0 : i32
    return %c0_i32, %c0_i32_0, %c0_i32_1 : i32, i32, i32
  }
  func.func @transform_2(%arg0: i32) -> (i32, i32, i32) {
    %c0_i32 = arith.constant 0 : i32
    %c0_i32_0 = arith.constant 0 : i32
    %c0_i32_1 = arith.constant 0 : i32
    %c0_i32_2 = arith.constant 0 : i32
    return %c0_i32, %c0_i32_0, %c0_i32_1 : i32, i32, i32
  }
  func.func @transform_3(%arg0: i32) -> (i32, i32, i32) {
    %c0_i32 = arith.constant 0 : i32
    %c0_i32_0 = arith.constant 0 : i32
    %c0_i32_1 = arith.constant 0 : i32
    %c0_i32_2 = arith.constant 0 : i32
    return %c0_i32, %c0_i32_0, %c0_i32_1 : i32, i32, i32
  }
  func.func @transform_4(%arg0: i32) -> (i32, i32) {
    %c0_i32 = arith.constant 0 : i32
    %c0_i32_0 = arith.constant 0 : i32
    %c0_i32_1 = arith.constant 0 : i32
    return %c0_i32, %c0_i32_0 : i32, i32
  }
  func.func @transform_5(%arg0: i32) -> (i32, i32, i32) {
    %c0_i32 = arith.constant 0 : i32
    %c0_i32_0 = arith.constant 0 : i32
    %c0_i32_1 = arith.constant 0 : i32
    %c0_i32_2 = arith.constant 0 : i32
    return %c0_i32, %c0_i32_0, %c0_i32_1 : i32, i32, i32
  }
  func.func @transform_6(%arg0: i32) -> (i32, i32, i32) {
    %c0_i32 = arith.constant 0 : i32
    %c0_i32_0 = arith.constant 0 : i32
    %c0_i32_1 = arith.constant 0 : i32
    return %arg0, %c0_i32, %c0_i32_0 : i32, i32, i32
  }
  func.func @transform_7(%arg0: i32) -> (i32, i32, i32) {
    %c0_i32 = arith.constant 0 : i32
    %c0_i32_0 = arith.constant 0 : i32
    %c0_i32_1 = arith.constant 0 : i32
    %c0_i32_2 = arith.constant 0 : i32
    return %c0_i32, %c0_i32_0, %c0_i32_1 : i32, i32, i32
  }
}

</mosaic_0001>

<llo_original>
// kernel: tpu_custom_call.1
$region0: #{tpu_custom_call.1}
  #allocation0 [shape = 'u32[]', space=smem, size = 0x4, offset = 0x4, fixed_abs, tag = 'smem constant byte address 0x4 - core index']
  #allocation1 [shape = 'u32[144,128]{1,0:T(1,128)}', space=vmem, size = 0x12000, scoped, tag = 'internal scratch']
  %s0 = inlined_call_operand.hbm [shape: bf16[8,8,384], index: 0, kind: input, shape index: {}]
  %s1 = inlined_call_operand.hbm [shape: f32[2,8,128], index: 1, kind: input, shape index: {}]
  %s2 = inlined_call_operand.hbm [shape: bf16[1,256,384], index: 2, kind: input, shape index: {}]
  %s3 = inlined_call_operand.hbm [shape: f32[1,1,384], index: 3, kind: input, shape index: {}]
  %s4 = inlined_call_operand.hbm [shape: bf16[128,256], index: 4, kind: input, shape index: {}]
  %s5 = inlined_call_operand.hbm [shape: bf16[2,128,128], index: 5, kind: input, shape index: {}]
  %s6 = inlined_call_operand.hbm [shape: f32[8,8,128], index: 6, kind: output, shape index: {0}]
  %s7 = inlined_call_operand.hbm [shape: f32[2,8,128], index: 7, kind: output, shape index: {1}]
  %8 = xla_tuple %s6, %s7
  %s9 = sld [smem:[#allocation0]]
  $region70: #{tpu_custom_call.1} parent=0
    _
  %s11 = ssub.s32 1, %s9
  %s12 = scalar_select 0, %s11, %s9
  $region1: #{tpu_custom_call.1} parent=0
    #allocation2 [shape = 'u8[49152]{0}', space=vmem, size = 0xc000, scoped, tag = 'input window, operand 0, single buffered']
    #allocation3 [shape = 's32[1]{0}', space=sflag, size = 0x4, scoped, tag = 'scoped memory for tpu_custom_call.1']
    #allocation4 [shape = 's32[1]{0}', space=sflag, size = 0x4, scoped, tag = 'scoped memory for tpu_custom_call.1']
    #allocation5 [shape = 'u8[8192]{0}', space=vmem, size = 0x2000, scoped, tag = 'input window, operand 1, single buffered']
    #allocation6 [shape = 's32[1]{0}', space=sflag, size = 0x4, scoped, tag = 'scoped memory for tpu_custom_call.1']
    #allocation7 [shape = 'u8[196608]{0}', space=vmem, size = 0x30000, scoped, tag = 'input window, operand 2, single buffered']
    #allocation8 [shape = 'u8[1536]{0}', space=vmem, size = 0x800, scoped, tag = 'input window, operand 3, single buffered']
    #allocation9 [shape = 's32[1]{0}', space=sflag, size = 0x4, scoped, tag = 'scoped memory for tpu_custom_call.1']
    #allocation10 [shape = 'u8[65536]{0}', space=vmem, size = 0x10000, scoped, tag = 'input window, operand 4, single buffered']
    #allocation11 [shape = 'u8[65536]{0}', space=vmem, size = 0x10000, scoped, tag = 'input window, operand 5, single buffered']
    #allocation12 [shape = 's32[1]{0}', space=sflag, size = 0x4, scoped, tag = 'scoped memory for tpu_custom_call.1']
    #allocation13 [shape = 'u8[32768]{0}', space=vmem, size = 0x8000, scoped, tag = 'output window, operand 0, single buffered']
    #allocation14 [shape = 'u8[8192]{0}', space=vmem, size = 0x2000, scoped, tag = 'output window, operand 1, single buffered']
    #allocation15 [shape = 's32[1]{0}', space=sflag, size = 0x4, scoped, tag = 'scoped memory for tpu_custom_call.1']
    %13 = vsyncpa [#allocation3], 0
    %14 = vsyncpa [#allocation6], 0
    %15 = vsyncpa [#allocation9], 0
    %16 = vsyncpa [#allocation12], 0
    %17 = vsyncpa [#allocation4], 0
    %18 = vsyncpa [#allocation15], 0
    // Predicated region
    $region2: #{tpu_custom_call.1} parent=1 // pred_check
      _
    $region3: #{tpu_custom_call.1} parent=1 // pred_check_branch
      %20 = sbr.rel (0) target = $region5
    $region4: #{tpu_custom_call.1} parent=1 // pred_region
      %s22 = ssub.s32 1536, 1536
      %23 = vsyncadd [#allocation3], %s22
      %s24 = sshll.u32 [#allocation2], 4
      %s25 = int_to_ptr.vmem [resolvable:$true] %s24
      %30 = dma.hbm_to_vmem [thread:$0]  %s0, 1536, %s25, [#allocation3], 192, 192, 12
    $region5: #{tpu_custom_call.1} parent=1 // pred_fallthru
      _
    // Predicated region
    $region6: #{tpu_custom_call.1} parent=1 // pred_check
      _
    $region7: #{tpu_custom_call.1} parent=1 // pred_check_branch
      %32 = sbr.rel (0) target = $region9
    $region8: #{tpu_custom_call.1} parent=1 // pred_region
      %s34 = ssub.s32 256, 256
      %35 = vsyncadd [#allocation6], %s34
      %s36 = sshll.u32 [#allocation5], 4
      %s37 = int_to_ptr.vmem [resolvable:$true] %s36
      %42 = dma.hbm_to_vmem [thread:$0]  %s1, 256, %s37, [#allocation6], 128, 128, 8
    $region9: #{tpu_custom_call.1} parent=1 // pred_fallthru
      _
    // Predicated region
    $region10: #{tpu_custom_call.1} parent=1 // pred_check
      _
    $region11: #{tpu_custom_call.1} parent=1 // pred_check_branch
      %44 = sbr.rel (0) target = $region13
    $region12: #{tpu_custom_call.1} parent=1 // pred_region
      %s46 = ssub.s32 6144, 6144
      %47 = vsyncadd [#allocation6], %s46
      %s48 = sshll.u32 [#allocation7], 4
      %s49 = int_to_ptr.vmem [resolvable:$true] %s48
      %54 = dma.hbm_to_vmem [thread:$0]  %s2, 6144, %s49, [#allocation6], 192, 192, 12
    $region13: #{tpu_custom_call.1} parent=1 // pred_fallthru
      _
    // Predicated region
    $region14: #{tpu_custom_call.1} parent=1 // pred_check
      _
    $region15: #{tpu_custom_call.1} parent=1 // pred_check_branch
      %56 = sbr.rel (0) target = $region17
    $region16: #{tpu_custom_call.1} parent=1 // pred_region
      %s58 = ssub.s32 48, 48
      %59 = vsyncadd [#allocation9], %s58
      %s61 = sshll.u32 [#allocation8], 4
      %s62 = int_to_ptr.vmem [resolvable:$true] %s61
      %64 = dma.hbm_to_vmem [thread:$0]  %s3, 48, %s62, [#allocation9]
    $region17: #{tpu_custom_call.1} parent=1 // pred_fallthru
      _
    // Predicated region
    $region18: #{tpu_custom_call.1} parent=1 // pred_check
      _
    $region19: #{tpu_custom_call.1} parent=1 // pred_check_branch
      %66 = sbr.rel (0) target = $region21
    $region20: #{tpu_custom_call.1} parent=1 // pred_region
      %s68 = ssub.s32 2048, 2048
      %69 = vsyncadd [#allocation9], %s68
      %s70 = sshll.u32 [#allocation10], 4
      %s71 = int_to_ptr.vmem [resolvable:$true] %s70
      %76 = dma.hbm_to_vmem [thread:$0]  %s4, 2048, %s71, [#allocation9], 128, 128, 8
    $region21: #{tpu_custom_call.1} parent=1 // pred_fallthru
      _
    // Predicated region
    $region22: #{tpu_custom_call.1} parent=1 // pred_check
      _
    $region23: #{tpu_custom_call.1} parent=1 // pred_check_branch
      %78 = sbr.rel (0) target = $region25
    $region24: #{tpu_custom_call.1} parent=1 // pred_region
      %s80 = ssub.s32 2048, 2048
      %81 = vsyncadd [#allocation12], %s80
      %s82 = sshll.u32 [#allocation11], 4
      %s83 = int_to_ptr.vmem [resolvable:$true] %s82
      %88 = dma.hbm_to_vmem [thread:$0]  %s5, 2048, %s83, [#allocation12], 64, 64, 4
    $region25: #{tpu_custom_call.1} parent=1 // pred_fallthru
      _
    // Predicated region
    $region26: #{tpu_custom_call.1} parent=1 // pred_check
      _
    $region27: #{tpu_custom_call.1} parent=1 // pred_check_branch
      %90 = sbr.rel (0) target = $region29
    $region28: #{tpu_custom_call.1} parent=1 // pred_region
      %91 = dma.done [#allocation3], 1536
    $region29: #{tpu_custom_call.1} parent=1 // pred_fallthru
      _
    // Predicated region
    $region30: #{tpu_custom_call.1} parent=1 // pred_check
      _
    $region31: #{tpu_custom_call.1} parent=1 // pred_check_branch
      %93 = sbr.rel (0) target = $region33
    $region32: #{tpu_custom_call.1} parent=1 // pred_region
      %94 = dma.done [#allocation6], 256
    $region33: #{tpu_custom_call.1} parent=1 // pred_fallthru
      _
    // Predicated region
    $region34: #{tpu_custom_call.1} parent=1 // pred_check
      _
    $region35: #{tpu_custom_call.1} parent=1 // pred_check_branch
      %96 = sbr.rel (0) target = $region37
    $region36: #{tpu_custom_call.1} parent=1 // pred_region
      %97 = dma.done [#allocation6], 6144
    $region37: #{tpu_custom_call.1} parent=1 // pred_fallthru
      _
    // Predicated region
    $region38: #{tpu_custom_call.1} parent=1 // pred_check
      _
    $region39: #{tpu_custom_call.1} parent=1 // pred_check_branch
      %99 = sbr.rel (0) target = $region41
    $region40: #{tpu_custom_call.1} parent=1 // pred_region
      %100 = dma.done [#allocation9], 48
    $region41: #{tpu_custom_call.1} parent=1 // pred_fallthru
      _
    // Predicated region
    $region42: #{tpu_custom_call.1} parent=1 // pred_check
      _
    $region43: #{tpu_custom_call.1} parent=1 // pred_check_branch
      %102 = sbr.rel (0) target = $region45
    $region44: #{tpu_custom_call.1} parent=1 // pred_region
      %103 = dma.done [#allocation9], 2048
    $region45: #{tpu_custom_call.1} parent=1 // pred_fallthru
      _
    // Predicated region
    $region46: #{tpu_custom_call.1} parent=1 // pred_check
      _
    $region47: #{tpu_custom_call.1} parent=1 // pred_check_branch
      %105 = sbr.rel (0) target = $region49
    $region48: #{tpu_custom_call.1} parent=1 // pred_region
      %106 = dma.done [#allocation12], 2048
    $region49: #{tpu_custom_call.1} parent=1 // pred_fallthru
      _
    %p108 = scmp.eq.s32.totalorder 0, 0
    // Predicated region
    $region50: #{tpu_custom_call.1} parent=1 // pred_check
      %p109 = pneg %p108
    $region51: #{tpu_custom_call.1} parent=1 // pred_check_branch
      %111 = sbr.rel (%p109) target = $region53
    $region52: #{tpu_custom_call.1} parent=1 // pred_region
      %v112 = vld [vmem:[#allocation5] sm:$0xff]
      %v113 = vld [vmem:[#allocation5 + $0x8] sm:$0xff]
      %114 = vst [vmem:[#allocation14] sm:$0xff] %v112
      %115 = vst [vmem:[#allocation14 + $0x8] sm:$0xff] %v113
    $region53: #{tpu_custom_call.1} parent=1 // pred_fallthru
      _
    %v116 = vld [vmem:[#allocation10] sm:$0xff]
    %v117 = vld [vmem:[#allocation10 + $0x8] sm:$0xff]
    %v118 = vld [vmem:[#allocation10 + $0x10] sm:$0xff]
    %v119 = vld [vmem:[#allocation10 + $0x18] sm:$0xff]
    %v120 = vld [vmem:[#allocation10 + $0x20] sm:$0xff]
    %v121 = vld [vmem:[#allocation10 + $0x28] sm:$0xff]
    %v122 = vld [vmem:[#allocation10 + $0x30] sm:$0xff]
    %v123 = vld [vmem:[#allocation10 + $0x38] sm:$0xff]
    %v124 = vld [vmem:[#allocation10 + $0x40] sm:$0xff]
    %v125 = vld [vmem:[#allocation10 + $0x48] sm:$0xff]
    %v126 = vld [vmem:[#allocation10 + $0x50] sm:$0xff]
    %v127 = vld [vmem:[#allocation10 + $0x58] sm:$0xff]
    %v128 = vld [vmem:[#allocation10 + $0x60] sm:$0xff]
    %v129 = vld [vmem:[#allocation10 + $0x68] sm:$0xff]
    %v130 = vld [vmem:[#allocation10 + $0x70] sm:$0xff]
    %v131 = vld [vmem:[#allocation10 + $0x78] sm:$0xff]
    %v132 = vld [vmem:[#allocation11] sm:$0xf]
    %v133 = vld [vmem:[#allocation11 + $0x4] sm:$0xf]
    %v134 = vld [vmem:[#allocation11 + $0x8] sm:$0xf]
    %v135 = vld [vmem:[#allocation11 + $0xc] sm:$0xf]
    %v136 = vld [vmem:[#allocation11 + $0x10] sm:$0xf]
    %v137 = vld [vmem:[#allocation11 + $0x14] sm:$0xf]
    %v138 = vld [vmem:[#allocation11 + $0x18] sm:$0xf]
    %v139 = vld [vmem:[#allocation11 + $0x1c] sm:$0xf]
    %v140 = vld [vmem:[#allocation11 + $0x20] sm:$0xf]
    %v141 = vld [vmem:[#allocation11 + $0x24] sm:$0xf]
    %v142 = vld [vmem:[#allocation11 + $0x28] sm:$0xf]
    %v143 = vld [vmem:[#allocation11 + $0x2c] sm:$0xf]
    %v144 = vld [vmem:[#allocation11 + $0x30] sm:$0xf]
    %v145 = vld [vmem:[#allocation11 + $0x34] sm:$0xf]
    %v146 = vld [vmem:[#allocation11 + $0x38] sm:$0xf]
    %v147 = vld [vmem:[#allocation11 + $0x3c] sm:$0xf]
    %s148 = scalar_lea.vmem [#allocation11], 64
    %v149 = vld [vmem:[%s148] sm:$0xf]
    %v150 = vld [vmem:[%s148 + $0x4] sm:$0xf]
    %v151 = vld [vmem:[%s148 + $0x8] sm:$0xf]
    %v152 = vld [vmem:[%s148 + $0xc] sm:$0xf]
    %v153 = vld [vmem:[%s148 + $0x10] sm:$0xf]
    %v154 = vld [vmem:[%s148 + $0x14] sm:$0xf]
    %v155 = vld [vmem:[%s148 + $0x18] sm:$0xf]
    %v156 = vld [vmem:[%s148 + $0x1c] sm:$0xf]
    %v157 = vld [vmem:[%s148 + $0x20] sm:$0xf]
    %v158 = vld [vmem:[%s148 + $0x24] sm:$0xf]
    %v159 = vld [vmem:[%s148 + $0x28] sm:$0xf]
    %v160 = vld [vmem:[%s148 + $0x2c] sm:$0xf]
    %v161 = vld [vmem:[%s148 + $0x30] sm:$0xf]
    %v162 = vld [vmem:[%s148 + $0x34] sm:$0xf]
    %v163 = vld [vmem:[%s148 + $0x38] sm:$0xf]
    %v164 = vld [vmem:[%s148 + $0x3c] sm:$0xf]
    %v165 = vld [vmem:[#allocation7] sm:$0xff]
    %v166 = vld [vmem:[#allocation7 + $0x8] sm:$0xf]
    %v167 = vld [vmem:[#allocation7 + $0xc] sm:$0xff]
    %v168 = vld [vmem:[#allocation7 + $0x14] sm:$0xf]
    %v169 = vld [vmem:[#allocation7 + $0x18] sm:$0xff]
    %v170 = vld [vmem:[#allocation7 + $0x20] sm:$0xf]
    %v171 = vld [vmem:[#allocation7 + $0x24] sm:$0xff]
    %v172 = vld [vmem:[#allocation7 + $0x2c] sm:$0xf]
    %v173 = vld [vmem:[#allocation7 + $0x30] sm:$0xff]
    %v174 = vld [vmem:[#allocation7 + $0x38] sm:$0xf]
    %v175 = vld [vmem:[#allocation7 + $0x3c] sm:$0xff]
    %v176 = vld [vmem:[#allocation7 + $0x44] sm:$0xf]
    %v177 = vld [vmem:[#allocation7 + $0x48] sm:$0xff]
    %v178 = vld [vmem:[#allocation7 + $0x50] sm:$0xf]
    %v179 = vld [vmem:[#allocation7 + $0x54] sm:$0xff]
    %v180 = vld [vmem:[#allocation7 + $0x5c] sm:$0xf]
    %v181 = vld [vmem:[#allocation7 + $0x60] sm:$0xff]
    %v182 = vld [vmem:[#allocation7 + $0x68] sm:$0xf]
    %v183 = vld [vmem:[#allocation7 + $0x6c] sm:$0xff]
    %v184 = vld [vmem:[#allocation7 + $0x74] sm:$0xf]
    %v185 = vld [vmem:[#allocation7 + $0x78] sm:$0xff]
    %v186 = vld [vmem:[#allocation7 + $0x80] sm:$0xf]
    %v187 = vld [vmem:[#allocation7 + $0x84] sm:$0xff]
    %v188 = vld [vmem:[#allocation7 + $0x8c] sm:$0xf]
    %v189 = vld [vmem:[#allocation7 + $0x90] sm:$0xff]
    %v190 = vld [vmem:[#allocation7 + $0x98] sm:$0xf]
    %v191 = vld [vmem:[#allocation7 + $0x9c] sm:$0xff]
    %v192 = vld [vmem:[#allocation7 + $0xa4] sm:$0xf]
    %v193 = vld [vmem:[#allocation7 + $0xa8] sm:$0xff]
    %v194 = vld [vmem:[#allocation7 + $0xb0] sm:$0xf]
    %v195 = vld [vmem:[#allocation7 + $0xb4] sm:$0xff]
    %v196 = vld [vmem:[#allocation7 + $0xbc] sm:$0xf]
    %v197 = vld [vmem:[#allocation7 + $0xc0] sm:$0xff]
    %v198 = vld [vmem:[#allocation7 + $0xc8] sm:$0xf]
    %v199 = vld [vmem:[#allocation7 + $0xcc] sm:$0xff]
    %v200 = vld [vmem:[#allocation7 + $0xd4] sm:$0xf]
    %v201 = vld [vmem:[#allocation7 + $0xd8] sm:$0xff]
    %v202 = vld [vmem:[#allocation7 + $0xe0] sm:$0xf]
    %v203 = vld [vmem:[#allocation7 + $0xe4] sm:$0xff]
    %v204 = vld [vmem:[#allocation7 + $0xec] sm:$0xf]
    %v205 = vld [vmem:[#allocation7 + $0xf0] sm:$0xff]
    %v206 = vld [vmem:[#allocation7 + $0xf8] sm:$0xf]
    %v207 = vld [vmem:[#allocation7 + $0xfc] sm:$0xff]
    %v208 = vld [vmem:[#allocation7 + $0x104] sm:$0xf]
    %v209 = vld [vmem:[#allocation7 + $0x108] sm:$0xff]
    %v210 = vld [vmem:[#allocation7 + $0x110] sm:$0xf]
    %v211 = vld [vmem:[#allocation7 + $0x114] sm:$0xff]
    %v212 = vld [vmem:[#allocation7 + $0x11c] sm:$0xf]
    %v213 = vld [vmem:[#allocation7 + $0x120] sm:$0xff]
    %v214 = vld [vmem:[#allocation7 + $0x128] sm:$0xf]
    %v215 = vld [vmem:[#allocation7 + $0x12c] sm:$0xff]
    %v216 = vld [vmem:[#allocation7 + $0x134] sm:$0xf]
    %v217 = vld [vmem:[#allocation7 + $0x138] sm:$0xff]
    %v218 = vld [vmem:[#allocation7 + $0x140] sm:$0xf]
    %v219 = vld [vmem:[#allocation7 + $0x144] sm:$0xff]
    %v220 = vld [vmem:[#allocation7 + $0x14c] sm:$0xf]
    %v221 = vld [vmem:[#allocation7 + $0x150] sm:$0xff]
    %v222 = vld [vmem:[#allocation7 + $0x158] sm:$0xf]
    %v223 = vld [vmem:[#allocation7 + $0x15c] sm:$0xff]
    %v224 = vld [vmem:[#allocation7 + $0x164] sm:$0xf]
    %v225 = vld [vmem:[#allocation7 + $0x168] sm:$0xff]
    %v226 = vld [vmem:[#allocation7 + $0x170] sm:$0xf]
    %v227 = vld [vmem:[#allocation7 + $0x174] sm:$0xff]
    %v228 = vld [vmem:[#allocation7 + $0x17c] sm:$0xf]
    %v229 = vld [vmem:[#allocation8] sm:$0x7]
    %v231 = vlaneseq
    %v232 = vshrl.u32 %v231, 7
    %v233 = vsub.s32 0, %v232
    %v234 = vrot.slane %v229, %v233
    %v235 = vlaneseq
    %v236 = vshrl.u32 %v235, 7
    %v237 = vsub.s32 1, %v236
    %v238 = vrot.slane %v229, %v237
    %v239 = vlaneseq
    %v240 = vshrl.u32 %v239, 7
    %v241 = vsub.s32 2, %v240
    %v242 = vrot.slane %v229, %v241
    %v246 = vld [vmem:[#allocation14] sm:$0xff]
    %s247 = scalar_lea.vmem [#allocation14], 8
    %v248 = vld [vmem:[%s247] sm:$0xff]
    %v249 = vld [vmem:[#allocation2] sm:$0xff]
    %v250 = vld [vmem:[#allocation2 + $0x8] sm:$0xf]
    %v251 = vunpack.c.l.bf16 %v249
    %v252 = vunpack.c.h.bf16 %v249
    %v253 = vunpack.c.l.bf16 %v250
    %v254 = vpack.c.bf16 %v246, %v246
    %v271 = vunpack.c.l.b16 %v116
    %v272 = vunpack.c.h.b16 %v116
    %v273 = vunpack.c.l.b16 %v117
    %v274 = vunpack.c.h.b16 %v117
    %v275 = vunpack.c.l.b16 %v118
    %v276 = vunpack.c.h.b16 %v118
    %v277 = vunpack.c.l.b16 %v119
    %v278 = vunpack.c.h.b16 %v119
    %v279 = vunpack.c.l.b16 %v120
    %v280 = vunpack.c.h.b16 %v120
    %v281 = vunpack.c.l.b16 %v121
    %v282 = vunpack.c.h.b16 %v121
    %v283 = vunpack.c.l.b16 %v122
    %v284 = vunpack.c.h.b16 %v122
    %v285 = vunpack.c.l.b16 %v123
    %v286 = vunpack.c.h.b16 %v123
    %v287 = vunpack.c.l.b16 %v124
    %v288 = vunpack.c.h.b16 %v124
    %v289 = vunpack.c.l.b16 %v125
    %v290 = vunpack.c.h.b16 %v125
    %v291 = vunpack.c.l.b16 %v126
    %v292 = vunpack.c.h.b16 %v126
    %v293 = vunpack.c.l.b16 %v127
    %v294 = vunpack.c.h.b16 %v127
    %v295 = vunpack.c.l.b16 %v128
    %v296 = vunpack.c.h.b16 %v128
    %v297 = vunpack.c.l.b16 %v129
    %v298 = vunpack.c.h.b16 %v129
    %v299 = vunpack.c.l.b16 %v130
    %v300 = vunpack.c.h.b16 %v130
    %v301 = vunpack.c.l.b16 %v131
    %v302 = vunpack.c.h.b16 %v131
    %v303 = vpack.c.b16 %v273, %v271
    %v304 = vpack.c.b16 %v274, %v272
    %v305 = vpack.c.b16 %v277, %v275
    %v306 = vpack.c.b16 %v278, %v276
    %v307 = vpack.c.b16 %v281, %v279
    %v308 = vpack.c.b16 %v282, %v280
    %v309 = vpack.c.b16 %v285, %v283
    %v310 = vpack.c.b16 %v286, %v284
    %v311 = vpack.c.b16 %v289, %v287
    %v312 = vpack.c.b16 %v290, %v288
    %v313 = vpack.c.b16 %v293, %v291
    %v314 = vpack.c.b16 %v294, %v292
    %v315 = vpack.c.b16 %v297, %v295
    %v316 = vpack.c.b16 %v298, %v296
    %v317 = vpack.c.b16 %v301, %v299
    %v318 = vpack.c.b16 %v302, %v300
    %335 = vmatprep.subr.bf16.mxu0 %v304
    %336 = vmatpush1.bf16.msra.mxu0 %v303
    %337 = vmatprep.subr.bf16.mxu0 %v306
    %338 = vmatpush1.bf16.msra.mxu0 %v305
    %339 = vmatprep.subr.bf16.mxu0 %v308
    %340 = vmatpush1.bf16.msra.mxu0 %v307
    %341 = vmatprep.subr.bf16.mxu0 %v310
    %342 = vmatpush1.bf16.msra.mxu0 %v309
    %343 = vmatprep.subr.bf16.mxu0 %v312
    %344 = vmatpush1.bf16.msra.mxu0 %v311
    %345 = vmatprep.subr.bf16.mxu0 %v314
    %346 = vmatpush1.bf16.msra.mxu0 %v313
    %347 = vmatprep.subr.bf16.mxu0 %v316
    %348 = vmatpush1.bf16.msra.mxu0 %v315
    %349 = vmatprep.subr.bf16.mxu0 %v318
    %350 = vmatpush1.bf16.msra.mxu0 %v317
    %351 = vmatprep.subr.bf16.mxu0 0
    %352 = vmatpush1.bf16.msra.mxu0 0
    %353 = vmatprep.subr.bf16.mxu0 0
    %354 = vmatpush1.bf16.msra.mxu0 0
    %355 = vmatprep.subr.bf16.mxu0 0
    %356 = vmatpush1.bf16.msra.mxu0 0
    %357 = vmatprep.subr.bf16.mxu0 0
    %358 = vmatpush1.bf16.msra.mxu0 0
    %359 = vmatprep.subr.bf16.mxu0 0
    %360 = vmatpush1.bf16.msra.mxu0 0
    %361 = vmatprep.subr.bf16.mxu0 0
    %362 = vmatpush1.bf16.msra.mxu0 0
    %363 = vmatprep.subr.bf16.mxu0 0
    %364 = vmatpush1.bf16.msra.mxu0 0
    %365 = vmatprep.subr.bf16.mxu0 0
    %366 = vmatpush1.bf16.msra.mxu0 0
    %367 = vmatprep.mubr.bf16.mxu0 0
    %368 = vmatmul.mubr.bf16.gmra.mrb[0].mxu0 %v254
    %v369 = vpop.f32.mrb[0].mxu0
    %v370 = vadd.f32 0.0, %v369
    %v371 = vpop.f32.mrb[0].mxu0
    %v372 = vadd.f32 0.0, %v371
    %v373 = vpop.f32.mrb[0].mxu0
    %v374 = vpop.f32.mrb[0].mxu0
    %375 = vdwg.mxu0
    %v376 = vadd.f32 %v251, %v370
    %v377 = vxor.u32 %v376, 2147483648
    %v378 = vmul.f32 %v377, 1.442695
    %v379 = vpow.pop %v378
    %v380 = vadd.f32 %v379, 1.0
    %v381 = vrcp.pop %v380
    %v382 = vmul.f32 1.0, %v381
    %v383 = vadd.f32 %v252, %v372
    %v384 = vxor.u32 %v383, 2147483648
    %v385 = vmul.f32 %v384, 1.442695
    %v386 = vpow.pop %v385
    %v387 = vadd.f32 %v386, 1.0
    %v388 = vrcp.pop %v387
    %v389 = vmul.f32 1.0, %v388
    %v390 = vmul.f32 %v389, %v246
    %v391 = vpack.c.bf16 %v390, %v390
    %v408 = vunpack.c.l.b16 %v132
    %v409 = vunpack.c.l.b16 %v133
    %v410 = vunpack.c.l.b16 %v134
    %v411 = vunpack.c.l.b16 %v135
    %v412 = vunpack.c.l.b16 %v136
    %v413 = vunpack.c.l.b16 %v137
    %v414 = vunpack.c.l.b16 %v138
    %v415 = vunpack.c.l.b16 %v139
    %v416 = vunpack.c.l.b16 %v140
    %v417 = vunpack.c.l.b16 %v141
    %v418 = vunpack.c.l.b16 %v142
    %v419 = vunpack.c.l.b16 %v143
    %v420 = vunpack.c.l.b16 %v144
    %v421 = vunpack.c.l.b16 %v145
    %v422 = vunpack.c.l.b16 %v146
    %v423 = vunpack.c.l.b16 %v147
    %v424 = vpack.c.b16 %v409, %v408
    %v425 = vpack.c.b16 %v411, %v410
    %v426 = vpack.c.b16 %v413, %v412
    %v427 = vpack.c.b16 %v415, %v414
    %v428 = vpack.c.b16 %v417, %v416
    %v429 = vpack.c.b16 %v419, %v418
    %v430 = vpack.c.b16 %v421, %v420
    %v431 = vpack.c.b16 %v423, %v422
    %440 = vmatprep.subr.bf16.mxu0 0
    %441 = vmatpush1.bf16.msra.mxu0 %v424
    %442 = vmatprep.subr.bf16.mxu0 0
    %443 = vmatpush1.bf16.msra.mxu0 %v425
    %444 = vmatprep.subr.bf16.mxu0 0
    %445 = vmatpush1.bf16.msra.mxu0 %v426
    %446 = vmatprep.subr.bf16.mxu0 0
    %447 = vmatpush1.bf16.msra.mxu0 %v427
    %448 = vmatprep.subr.bf16.mxu0 0
    %449 = vmatpush1.bf16.msra.mxu0 %v428
    %450 = vmatprep.subr.bf16.mxu0 0
    %451 = vmatpush1.bf16.msra.mxu0 %v429
    %452 = vmatprep.subr.bf16.mxu0 0
    %453 = vmatpush1.bf16.msra.mxu0 %v430
    %454 = vmatprep.subr.bf16.mxu0 0
    %455 = vmatpush1.bf16.msra.mxu0 %v431
    %456 = vmatprep.subr.bf16.mxu0 0
    %457 = vmatpush1.bf16.msra.mxu0 0
    %458 = vmatprep.subr.bf16.mxu0 0
    %459 = vmatpush1.bf16.msra.mxu0 0
    %460 = vmatprep.subr.bf16.mxu0 0
    %461 = vmatpush1.bf16.msra.mxu0 0
    %462 = vmatprep.subr.bf16.mxu0 0
    %463 = vmatpush1.bf16.msra.mxu0 0
    %464 = vmatprep.subr.bf16.mxu0 0
    %465 = vmatpush1.bf16.msra.mxu0 0
    %466 = vmatprep.subr.bf16.mxu0 0
    %467 = vmatpush1.bf16.msra.mxu0 0
    %468 = vmatprep.subr.bf16.mxu0 0
    %469 = vmatpush1.bf16.msra.mxu0 0
    %470 = vmatprep.subr.bf16.mxu0 0
    %471 = vmatpush1.bf16.msra.mxu0 0
    %472 = vmatprep.mubr.bf16.mxu0 0
    %473 = vmatmul.mubr.bf16.gmra.mrb[0].mxu0 %v391
    %v474 = vpop.f32.mrb[0].mxu0
    %v475 = vadd.f32 0.0, %v474
    %v476 = vpop.f32.mrb[0].mxu0
    %v477 = vpop.f32.mrb[0].mxu0
    %v478 = vpop.f32.mrb[0].mxu0
    %479 = vdwg.mxu0
    %v480 = vadd.f32 %v253, %v475
    %v481 = vtanh.pop %v480
    %v482 = vsub.f32 %v246, %v481
    %v483 = vmul.f32 %v382, %v482
    %v484 = vadd.f32 %v481, %v483
    %v485 = vpack.c.bf16 %v484, %v484
    %v486 = vpack.c.bf16 %v248, %v248
    %v551 = vunpack.c.l.b16 %v165
    %v552 = vunpack.c.h.b16 %v165
    %v553 = vunpack.c.l.b16 %v166
    %v554 = vunpack.c.l.b16 %v167
    %v555 = vunpack.c.h.b16 %v167
    %v556 = vunpack.c.l.b16 %v168
    %v557 = vunpack.c.l.b16 %v169
    %v558 = vunpack.c.h.b16 %v169
    %v559 = vunpack.c.l.b16 %v170
    %v560 = vunpack.c.l.b16 %v171
    %v561 = vunpack.c.h.b16 %v171
    %v562 = vunpack.c.l.b16 %v172
    %v563 = vunpack.c.l.b16 %v173
    %v564 = vunpack.c.h.b16 %v173
    %v565 = vunpack.c.l.b16 %v174
    %v566 = vunpack.c.l.b16 %v175
    %v567 = vunpack.c.h.b16 %v175
    %v568 = vunpack.c.l.b16 %v176
    %v569 = vunpack.c.l.b16 %v177
    %v570 = vunpack.c.h.b16 %v177
    %v571 = vunpack.c.l.b16 %v178
    %v572 = vunpack.c.l.b16 %v179
    %v573 = vunpack.c.h.b16 %v179
    %v574 = vunpack.c.l.b16 %v180
    %v575 = vunpack.c.l.b16 %v181
    %v576 = vunpack.c.h.b16 %v181
    %v577 = vunpack.c.l.b16 %v182
    %v578 = vunpack.c.l.b16 %v183
    %v579 = vunpack.c.h.b16 %v183
    %v580 = vunpack.c.l.b16 %v184
    %v581 = vunpack.c.l.b16 %v185
    %v582 = vunpack.c.h.b16 %v185
    %v583 = vunpack.c.l.b16 %v186
    %v584 = vunpack.c.l.b16 %v187
    %v585 = vunpack.c.h.b16 %v187
    %v586 = vunpack.c.l.b16 %v188
    %v587 = vunpack.c.l.b16 %v189
    %v588 = vunpack.c.h.b16 %v189
    %v589 = vunpack.c.l.b16 %v190
    %v590 = vunpack.c.l.b16 %v191
    %v591 = vunpack.c.h.b16 %v191
    %v592 = vunpack.c.l.b16 %v192
    %v593 = vunpack.c.l.b16 %v193
    %v594 = vunpack.c.h.b16 %v193
    %v595 = vunpack.c.l.b16 %v194
    %v596 = vunpack.c.l.b16 %v195
    %v597 = vunpack.c.h.b16 %v195
    %v598 = vunpack.c.l.b16 %v196
    %v599 = vunpack.c.l.b16 %v197
    %v600 = vunpack.c.h.b16 %v197
    %v601 = vunpack.c.l.b16 %v198
    %v602 = vunpack.c.l.b16 %v199
    %v603 = vunpack.c.h.b16 %v199
    %v604 = vunpack.c.l.b16 %v200
    %v605 = vunpack.c.l.b16 %v201
    %v606 = vunpack.c.h.b16 %v201
    %v607 = vunpack.c.l.b16 %v202
    %v608 = vunpack.c.l.b16 %v203
    %v609 = vunpack.c.h.b16 %v203
    %v610 = vunpack.c.l.b16 %v204
    %v611 = vunpack.c.l.b16 %v205
    %v612 = vunpack.c.h.b16 %v205
    %v613 = vunpack.c.l.b16 %v206
    %v614 = vunpack.c.l.b16 %v207
    %v615 = vunpack.c.h.b16 %v207
    %v616 = vunpack.c.l.b16 %v208
    %v617 = vunpack.c.l.b16 %v209
    %v618 = vunpack.c.h.b16 %v209
    %v619 = vunpack.c.l.b16 %v210
    %v620 = vunpack.c.l.b16 %v211
    %v621 = vunpack.c.h.b16 %v211
    %v622 = vunpack.c.l.b16 %v212
    %v623 = vunpack.c.l.b16 %v213
    %v624 = vunpack.c.h.b16 %v213
    %v625 = vunpack.c.l.b16 %v214
    %v626 = vunpack.c.l.b16 %v215
    %v627 = vunpack.c.h.b16 %v215
    %v628 = vunpack.c.l.b16 %v216
    %v629 = vunpack.c.l.b16 %v217
    %v630 = vunpack.c.h.b16 %v217
    %v631 = vunpack.c.l.b16 %v218
    %v632 = vunpack.c.l.b16 %v219
    %v633 = vunpack.c.h.b16 %v219
    %v634 = vunpack.c.l.b16 %v220
    %v635 = vunpack.c.l.b16 %v221
    %v636 = vunpack.c.h.b16 %v221
    %v637 = vunpack.c.l.b16 %v222
    %v638 = vunpack.c.l.b16 %v223
    %v639 = vunpack.c.h.b16 %v223
    %v640 = vunpack.c.l.b16 %v224
    %v641 = vunpack.c.l.b16 %v225
    %v642 = vunpack.c.h.b16 %v225
    %v643 = vunpack.c.l.b16 %v226
    %v644 = vunpack.c.l.b16 %v227
    %v645 = vunpack.c.h.b16 %v227
    %v646 = vunpack.c.l.b16 %v228
    %v647 = vpack.c.b16 %v554, %v551
    %v648 = vpack.c.b16 %v555, %v552
    %v649 = vpack.c.b16 %v556, %v553
    %v650 = vpack.c.b16 %v560, %v557
    %v651 = vpack.c.b16 %v561, %v558
    %v652 = vpack.c.b16 %v562, %v559
    %v653 = vpack.c.b16 %v566, %v563
    %v654 = vpack.c.b16 %v567, %v564
    %v655 = vpack.c.b16 %v568, %v565
    %v656 = vpack.c.b16 %v572, %v569
    %v657 = vpack.c.b16 %v573, %v570
    %v658 = vpack.c.b16 %v574, %v571
    %v659 = vpack.c.b16 %v578, %v575
    %v660 = vpack.c.b16 %v579, %v576
    %v661 = vpack.c.b16 %v580, %v577
    %v662 = vpack.c.b16 %v584, %v581
    %v663 = vpack.c.b16 %v585, %v582
    %v664 = vpack.c.b16 %v586, %v583
    %v665 = vpack.c.b16 %v590, %v587
    %v666 = vpack.c.b16 %v591, %v588
    %v667 = vpack.c.b16 %v592, %v589
    %v668 = vpack.c.b16 %v596, %v593
    %v669 = vpack.c.b16 %v597, %v594
    %v670 = vpack.c.b16 %v598, %v595
    %v671 = vpack.c.b16 %v602, %v599
    %v672 = vpack.c.b16 %v603, %v600
    %v673 = vpack.c.b16 %v604, %v601
    %v674 = vpack.c.b16 %v608, %v605
    %v675 = vpack.c.b16 %v609, %v606
    %v676 = vpack.c.b16 %v610, %v607
    %v677 = vpack.c.b16 %v614, %v611
    %v678 = vpack.c.b16 %v615, %v612
    %v679 = vpack.c.b16 %v616, %v613
    %v680 = vpack.c.b16 %v620, %v617
    %v681 = vpack.c.b16 %v621, %v618
    %v682 = vpack.c.b16 %v622, %v619
    %v683 = vpack.c.b16 %v626, %v623
    %v684 = vpack.c.b16 %v627, %v624
    %v685 = vpack.c.b16 %v628, %v625
    %v686 = vpack.c.b16 %v632, %v629
    %v687 = vpack.c.b16 %v633, %v630
    %v688 = vpack.c.b16 %v634, %v631
    %v689 = vpack.c.b16 %v638, %v635
    %v690 = vpack.c.b16 %v639, %v636
    %v691 = vpack.c.b16 %v640, %v637
    %v692 = vpack.c.b16 %v644, %v641
    %v693 = vpack.c.b16 %v645, %v642
    %v694 = vpack.c.b16 %v646, %v643
    %743 = vmatprep.subr.bf16.mxu0 %v648
    %744 = vmatpush1.bf16.msra.mxu0 %v647
    %745 = vmatprep.subr.bf16.mxu0 %v651
    %746 = vmatpush1.bf16.msra.mxu0 %v650
    %747 = vmatprep.subr.bf16.mxu0 %v654
    %748 = vmatpush1.bf16.msra.mxu0 %v653
    %749 = vmatprep.subr.bf16.mxu0 %v657
    %750 = vmatpush1.bf16.msra.mxu0 %v656
    %751 = vmatprep.subr.bf16.mxu0 %v660
    %752 = vmatpush1.bf16.msra.mxu0 %v659
    %753 = vmatprep.subr.bf16.mxu0 %v663
    %754 = vmatpush1.bf16.msra.mxu0 %v662
    %755 = vmatprep.subr.bf16.mxu0 %v666
    %756 = vmatpush1.bf16.msra.mxu0 %v665
    %757 = vmatprep.subr.bf16.mxu0 %v669
    %758 = vmatpush1.bf16.msra.mxu0 %v668
    %759 = vmatprep.subr.bf16.mxu0 %v672
    %760 = vmatpush1.bf16.msra.mxu0 %v671
    %761 = vmatprep.subr.bf16.mxu0 %v675
    %762 = vmatpush1.bf16.msra.mxu0 %v674
    %763 = vmatprep.subr.bf16.mxu0 %v678
    %764 = vmatpush1.bf16.msra.mxu0 %v677
    %765 = vmatprep.subr.bf16.mxu0 %v681
    %766 = vmatpush1.bf16.msra.mxu0 %v680
    %767 = vmatprep.subr.bf16.mxu0 %v684
    %768 = vmatpush1.bf16.msra.mxu0 %v683
    %769 = vmatprep.subr.bf16.mxu0 %v687
    %770 = vmatpush1.bf16.msra.mxu0 %v686
    %771 = vmatprep.subr.bf16.mxu0 %v690
    %772 = vmatpush1.bf16.msra.mxu0 %v689
    %773 = vmatprep.subr.bf16.mxu0 %v693
    %774 = vmatpush1.bf16.msra.mxu0 %v692
    %775 = vmatprep.mubr.bf16.mxu0 %v486
    %776 = vmatmul.mubr.bf16.gmra.mrb[0].mxu0 %v485
    %v777 = vpop.f32.mrb[0].mxu0
    %v778 = vadd.f32 %v234, %v777
    %v779 = vpop.f32.mrb[0].mxu0
    %v780 = vadd.f32 %v238, %v779
    %v781 = vpop.f32.mrb[0].mxu0
    %v782 = vpop.f32.mrb[0].mxu0
    %783 = vdwg.mxu0
    %784 = vmatprep.subr.bf16.mxu0 0
    %785 = vmatpush1.bf16.msra.mxu0 %v649
    %786 = vmatprep.subr.bf16.mxu0 0
    %787 = vmatpush1.bf16.msra.mxu0 %v652
    %788 = vmatprep.subr.bf16.mxu0 0
    %789 = vmatpush1.bf16.msra.mxu0 %v655
    %790 = vmatprep.subr.bf16.mxu0 0
    %791 = vmatpush1.bf16.msra.mxu0 %v658
    %792 = vmatprep.subr.bf16.mxu0 0
    %793 = vmatpush1.bf16.msra.mxu0 %v661
    %794 = vmatprep.subr.bf16.mxu0 0
    %795 = vmatpush1.bf16.msra.mxu0 %v664
    %796 = vmatprep.subr.bf16.mxu0 0
    %797 = vmatpush1.bf16.msra.mxu0 %v667
    %798 = vmatprep.subr.bf16.mxu0 0
    %799 = vmatpush1.bf16.msra.mxu0 %v670
    %800 = vmatprep.subr.bf16.mxu0 0
    %801 = vmatpush1.bf16.msra.mxu0 %v673
    %802 = vmatprep.subr.bf16.mxu0 0
    %803 = vmatpush1.bf16.msra.mxu0 %v676
    %804 = vmatprep.subr.bf16.mxu0 0
    %805 = vmatpush1.bf16.msra.mxu0 %v679
    %806 = vmatprep.subr.bf16.mxu0 0
    %807 = vmatpush1.bf16.msra.mxu0 %v682
    %808 = vmatprep.subr.bf16.mxu0 0
    %809 = vmatpush1.bf16.msra.mxu0 %v685
    %810 = vmatprep.subr.bf16.mxu0 0
    %811 = vmatpush1.bf16.msra.mxu0 %v688
    %812 = vmatprep.subr.bf16.mxu0 0
    %813 = vmatpush1.bf16.msra.mxu0 %v691
    %814 = vmatprep.subr.bf16.mxu0 0
    %815 = vmatpush1.bf16.msra.mxu0 %v694
    %816 = vmatprep.mubr.bf16.mxu0 %v486
    %817 = vmatmul.mubr.bf16.gmra.mrb[0].mxu0 %v485
    %v818 = vpop.f32.mrb[0].mxu0
    %v819 = vadd.f32 %v242, %v818
    %v820 = vpop.f32.mrb[0].mxu0
    %v821 = vpop.f32.mrb[0].mxu0
    %v822 = vpop.f32.mrb[0].mxu0
    %823 = vdwg.mxu0
    %v824 = vxor.u32 %v778, 2147483648
    %v825 = vmul.f32 %v824, 1.442695
    %v826 = vpow.pop %v825
    %v827 = vadd.f32 %v826, 1.0
    %v828 = vrcp.pop %v827
    %v829 = vmul.f32 1.0, %v828
    %v830 = vxor.u32 %v780, 2147483648
    %v831 = vmul.f32 %v830, 1.442695
    %v832 = vpow.pop %v831
    %v833 = vadd.f32 %v832, 1.0
    %v834 = vrcp.pop %v833
    %v835 = vmul.f32 1.0, %v834
    %v836 = vmul.f32 %v835, %v248
    %v837 = vpack.c.bf16 %v836, %v836
    %v854 = vunpack.c.l.b16 %v149
    %v855 = vunpack.c.l.b16 %v150
    %v856 = vunpack.c.l.b16 %v151
    %v857 = vunpack.c.l.b16 %v152
    %v858 = vunpack.c.l.b16 %v153
    %v859 = vunpack.c.l.b16 %v154
    %v860 = vunpack.c.l.b16 %v155
    %v861 = vunpack.c.l.b16 %v156
    %v862 = vunpack.c.l.b16 %v157
    %v863 = vunpack.c.l.b16 %v158
    %v864 = vunpack.c.l.b16 %v159
    %v865 = vunpack.c.l.b16 %v160
    %v866 = vunpack.c.l.b16 %v161
    %v867 = vunpack.c.l.b16 %v162
    %v868 = vunpack.c.l.b16 %v163
    %v869 = vunpack.c.l.b16 %v164
    %v870 = vpack.c.b16 %v855, %v854
    %v871 = vpack.c.b16 %v857, %v856
    %v872 = vpack.c.b16 %v859, %v858
    %v873 = vpack.c.b16 %v861, %v860
    %v874 = vpack.c.b16 %v863, %v862
    %v875 = vpack.c.b16 %v865, %v864
    %v876 = vpack.c.b16 %v867, %v866
    %v877 = vpack.c.b16 %v869, %v868
    %886 = vmatprep.subr.bf16.mxu0 0
    %887 = vmatpush1.bf16.msra.mxu0 %v870
    %888 = vmatprep.subr.bf16.mxu0 0
    %889 = vmatpush1.bf16.msra.mxu0 %v871
    %890 = vmatprep.subr.bf16.mxu0 0
    %891 = vmatpush1.bf16.msra.mxu0 %v872
    %892 = vmatprep.subr.bf16.mxu0 0
    %893 = vmatpush1.bf16.msra.mxu0 %v873
    %894 = vmatprep.subr.bf16.mxu0 0
    %895 = vmatpush1.bf16.msra.mxu0 %v874
    %896 = vmatprep.subr.bf16.mxu0 0
    %897 = vmatpush1.bf16.msra.mxu0 %v875
    %898 = vmatprep.subr.bf16.mxu0 0
    %899 = vmatpush1.bf16.msra.mxu0 %v876
    %900 = vmatprep.subr.bf16.mxu0 0
    %901 = vmatpush1.bf16.msra.mxu0 %v877
    %902 = vmatprep.subr.bf16.mxu0 0
    %903 = vmatpush1.bf16.msra.mxu0 0
    %904 = vmatprep.subr.bf16.mxu0 0
    %905 = vmatpush1.bf16.msra.mxu0 0
    %906 = vmatprep.subr.bf16.mxu0 0
    %907 = vmatpush1.bf16.msra.mxu0 0
    %908 = vmatprep.subr.bf16.mxu0 0
    %909 = vmatpush1.bf16.msra.mxu0 0
    %910 = vmatprep.subr.bf16.mxu0 0
    %911 = vmatpush1.bf16.msra.mxu0 0
    %912 = vmatprep.subr.bf16.mxu0 0
    %913 = vmatpush1.bf16.msra.mxu0 0
    %914 = vmatprep.subr.bf16.mxu0 0
    %915 = vmatpush1.bf16.msra.mxu0 0
    %916 = vmatprep.subr.bf16.mxu0 0
    %917 = vmatpush1.bf16.msra.mxu0 0
    %918 = vmatprep.mubr.bf16.mxu0 0
    %919 = vmatmul.mubr.bf16.gmra.mrb[0].mxu0 %v837
    %v920 = vpop.f32.mrb[0].mxu0
    %v921 = vadd.f32 0.0, %v920
    %v922 = vpop.f32.mrb[0].mxu0
    %v923 = vpop.f32.mrb[0].mxu0
    %v924 = vpop.f32.mrb[0].mxu0
    %925 = vdwg.mxu0
    %v926 = vadd.f32 %v819, %v921
    %v927 = vtanh.pop %v926
    %v928 = vsub.f32 %v248, %v927
    %v929 = vmul.f32 %v829, %v928
    %v930 = vadd.f32 %v927, %v929
    %931 = vst [vmem:[#allocation13] sm:$0xff] %v930
    %s932 = scalar_lea.vmem [#allocation2], 12
    %v933 = vld [vmem:[%s932] sm:$0xff]
    %v934 = vld [vmem:[%s932 + $0x8] sm:$0xf]
    %v935 = vunpack.c.l.bf16 %v933
    %v936 = vunpack.c.h.bf16 %v933
    %v937 = vunpack.c.l.bf16 %v934
    %938 = vmatprep.subr.bf16.mxu0 %v304
    %939 = vmatpush1.bf16.msra.mxu0 %v303
    %940 = vmatprep.subr.bf16.mxu0 %v306
    %941 = vmatpush1.bf16.msra.mxu0 %v305
    %942 = vmatprep.subr.bf16.mxu0 %v308
    %943 = vmatpush1.bf16.msra.mxu0 %v307
    %944 = vmatprep.subr.bf16.mxu0 %v310
    %945 = vmatpush1.bf16.msra.mxu0 %v309
    %946 = vmatprep.subr.bf16.mxu0 %v312
    %947 = vmatpush1.bf16.msra.mxu0 %v311
    %948 = vmatprep.subr.bf16.mxu0 %v314
    %949 = vmatpush1.bf16.msra.mxu0 %v313
    %950 = vmatprep.subr.bf16.mxu0 %v316
    %951 = vmatpush1.bf16.msra.mxu0 %v315
    %952 = vmatprep.subr.bf16.mxu0 %v318
    %953 = vmatpush1.bf16.msra.mxu0 %v317
    %954 = vmatprep.subr.bf16.mxu0 0
    %955 = vmatpush1.bf16.msra.mxu0 0
    %956 = vmatprep.subr.bf16.mxu0 0
    %957 = vmatpush1.bf16.msra.mxu0 0
    %958 = vmatprep.subr.bf16.mxu0 0
    %959 = vmatpush1.bf16.msra.mxu0 0
    %960 = vmatprep.subr.bf16.mxu0 0
    %961 = vmatpush1.bf16.msra.mxu0 0
    %962 = vmatprep.subr.bf16.mxu0 0
    %963 = vmatpush1.bf16.msra.mxu0 0
    %964 = vmatprep.subr.bf16.mxu0 0
    %965 = vmatpush1.bf16.msra.mxu0 0
    %966 = vmatprep.subr.bf16.mxu0 0
    %967 = vmatpush1.bf16.msra.mxu0 0
    %968 = vmatprep.subr.bf16.mxu0 0
    %969 = vmatpush1.bf16.msra.mxu0 0
    %970 = vmatprep.mubr.bf16.mxu0 0
    %971 = vmatmul.mubr.bf16.gmra.mrb[0].mxu0 %v485
    %v972 = vpop.f32.mrb[0].mxu0
    %v973 = vadd.f32 0.0, %v972
    %v974 = vpop.f32.mrb[0].mxu0
    %v975 = vadd.f32 0.0, %v974
    %v976 = vpop.f32.mrb[0].mxu0
    %v977 = vpop.f32.mrb[0].mxu0
    %978 = vdwg.mxu0
    %v979 = vadd.f32 %v935, %v973
    %v980 = vxor.u32 %v979, 2147483648
    %v981 = vmul.f32 %v980, 1.442695
    %v982 = vpow.pop %v981
    %v983 = vadd.f32 %v982, 1.0
    %v984 = vrcp.pop %v983
    %v985 = vmul.f32 1.0, %v984
    %v986 = vadd.f32 %v936, %v975
    %v987 = vxor.u32 %v986, 2147483648
    %v988 = vmul.f32 %v987, 1.442695
    %v989 = vpow.pop %v988
    %v990 = vadd.f32 %v989, 1.0
    %v991 = vrcp.pop %v990
    %v992 = vmul.f32 1.0, %v991
    %v993 = vmul.f32 %v992, %v484
    %v994 = vpack.c.bf16 %v993, %v993
    %995 = vmatprep.subr.bf16.mxu0 0
    %996 = vmatpush1.bf16.msra.mxu0 %v424
    %997 = vmatprep.subr.bf16.mxu0 0
    %998 = vmatpush1.bf16.msra.mxu0 %v425
    %999 = vmatprep.subr.bf16.mxu0 0
    %1000 = vmatpush1.bf16.msra.mxu0 %v426
    %1001 = vmatprep.subr.bf16.mxu0 0
    %1002 = vmatpush1.bf16.msra.mxu0 %v427
    %1003 = vmatprep.subr.bf16.mxu0 0
    %1004 = vmatpush1.bf16.msra.mxu0 %v428
    %1005 = vmatprep.subr.bf16.mxu0 0
    %1006 = vmatpush1.bf16.msra.mxu0 %v429
    %1007 = vmatprep.subr.bf16.mxu0 0
    %1008 = vmatpush1.bf16.msra.mxu0 %v430
    %1009 = vmatprep.subr.bf16.mxu0 0
    %1010 = vmatpush1.bf16.msra.mxu0 %v431
    %1011 = vmatprep.subr.bf16.mxu0 0
    %1012 = vmatpush1.bf16.msra.mxu0 0
    %1013 = vmatprep.subr.bf16.mxu0 0
    %1014 = vmatpush1.bf16.msra.mxu0 0
    %1015 = vmatprep.subr.bf16.mxu0 0
    %1016 = vmatpush1.bf16.msra.mxu0 0
    %1017 = vmatprep.subr.bf16.mxu0 0
    %1018 = vmatpush1.bf16.msra.mxu0 0
    %1019 = vmatprep.subr.bf16.mxu0 0
    %1020 = vmatpush1.bf16.msra.mxu0 0
    %1021 = vmatprep.subr.bf16.mxu0 0
    %1022 = vmatpush1.bf16.msra.mxu0 0
    %1023 = vmatprep.subr.bf16.mxu0 0
    %1024 = vmatpush1.bf16.msra.mxu0 0
    %1025 = vmatprep.subr.bf16.mxu0 0
    %1026 = vmatpush1.bf16.msra.mxu0 0
    %1027 = vmatprep.mubr.bf16.mxu0 0
    %1028 = vmatmul.mubr.bf16.gmra.mrb[0].mxu0 %v994
    %v1029 = vpop.f32.mrb[0].mxu0
    %v1030 = vadd.f32 0.0, %v1029
    %v1031 = vpop.f32.mrb[0].mxu0
    %v1032 = vpop.f32.mrb[0].mxu0
    %v1033 = vpop.f32.mrb[0].mxu0
    %1034 = vdwg.mxu0
    %v1035 = vadd.f32 %v937, %v1030
    %v1036 = vtanh.pop %v1035
    %v1037 = vsub.f32 %v484, %v1036
    %v1038 = vmul.f32 %v985, %v1037
    %v1039 = vadd.f32 %v1036, %v1038
    %v1040 = vpack.c.bf16 %v1039, %v1039
    %v1041 = vpack.c.bf16 %v930, %v930
    %1042 = vmatprep.subr.bf16.mxu0 %v648
    %1043 = vmatpush1.bf16.msra.mxu0 %v647
    %1044 = vmatprep.subr.bf16.mxu0 %v651
    %1045 = vmatpush1.bf16.msra.mxu0 %v650
    %1046 = vmatprep.subr.bf16.mxu0 %v654
    %1047 = vmatpush1.bf16.msra.mxu0 %v653
    %1048 = vmatprep.subr.bf16.mxu0 %v657
    %1049 = vmatpush1.bf16.msra.mxu0 %v656
    %1050 = vmatprep.subr.bf16.mxu0 %v660
    %1051 = vmatpush1.bf16.msra.mxu0 %v659
    %1052 = vmatprep.subr.bf16.mxu0 %v663
    %1053 = vmatpush1.bf16.msra.mxu0 %v662
    %1054 = vmatprep.subr.bf16.mxu0 %v666
    %1055 = vmatpush1.bf16.msra.mxu0 %v665
    %1056 = vmatprep.subr.bf16.mxu0 %v669
    %1057 = vmatpush1.bf16.msra.mxu0 %v668
    %1058 = vmatprep.subr.bf16.mxu0 %v672
    %1059 = vmatpush1.bf16.msra.mxu0 %v671
    %1060 = vmatprep.subr.bf16.mxu0 %v675
    %1061 = vmatpush1.bf16.msra.mxu0 %v674
    %1062 = vmatprep.subr.bf16.mxu0 %v678
    %1063 = vmatpush1.bf16.msra.mxu0 %v677
    %1064 = vmatprep.subr.bf16.mxu0 %v681
    %1065 = vmatpush1.bf16.msra.mxu0 %v680
    %1066 = vmatprep.subr.bf16.mxu0 %v684
    %1067 = vmatpush1.bf16.msra.mxu0 %v683
    %1068 = vmatprep.subr.bf16.mxu0 %v687
    %1069 = vmatpush1.bf16.msra.mxu0 %v686
    %1070 = vmatprep.subr.bf16.mxu0 %v690
    %1071 = vmatpush1.bf16.msra.mxu0 %v689
    %1072 = vmatprep.subr.bf16.mxu0 %v693
    %1073 = vmatpush1.bf16.msra.mxu0 %v692
    %1074 = vmatprep.mubr.bf16.mxu0 %v1041
    %1075 = vmatmul.mubr.bf16.gmra.mrb[0].mxu0 %v1040
    %v1076 = vpop.f32.mrb[0].mxu0
    %v1077 = vadd.f32 %v234, %v1076
    %v1078 = vpop.f32.mrb[0].mxu0
    %v1079 = vadd.f32 %v238, %v1078
    %v1080 = vpop.f32.mrb[0].mxu0
    %v1081 = vpop.f32.mrb[0].mxu0
    %1082 = vdwg.mxu0
    %1083 = vmatprep.subr.bf16.mxu0 0
    %1084 = vmatpush1.bf16.msra.mxu0 %v649
    %1085 = vmatprep.subr.bf16.mxu0 0
    %1086 = vmatpush1.bf16.msra.mxu0 %v652
    %1087 = vmatprep.subr.bf16.mxu0 0
    %1088 = vmatpush1.bf16.msra.mxu0 %v655
    %1089 = vmatprep.subr.bf16.mxu0 0
    %1090 = vmatpush1.bf16.msra.mxu0 %v658
    %1091 = vmatprep.subr.bf16.mxu0 0
    %1092 = vmatpush1.bf16.msra.mxu0 %v661
    %1093 = vmatprep.subr.bf16.mxu0 0
    %1094 = vmatpush1.bf16.msra.mxu0 %v664
    %1095 = vmatprep.subr.bf16.mxu0 0
    %1096 = vmatpush1.bf16.msra.mxu0 %v667
    %1097 = vmatprep.subr.bf16.mxu0 0
    %1098 = vmatpush1.bf16.msra.mxu0 %v670
    %1099 = vmatprep.subr.bf16.mxu0 0
    %1100 = vmatpush1.bf16.msra.mxu0 %v673
    %1101 = vmatprep.subr.bf16.mxu0 0
    %1102 = vmatpush1.bf16.msra.mxu0 %v676
    %1103 = vmatprep.subr.bf16.mxu0 0
    %1104 = vmatpush1.bf16.msra.mxu0 %v679
    %1105 = vmatprep.subr.bf16.mxu0 0
    %1106 = vmatpush1.bf16.msra.mxu0 %v682
    %1107 = vmatprep.subr.bf16.mxu0 0
    %1108 = vmatpush1.bf16.msra.mxu0 %v685
    %1109 = vmatprep.subr.bf16.mxu0 0
    %1110 = vmatpush1.bf16.msra.mxu0 %v688
    %1111 = vmatprep.subr.bf16.mxu0 0
    %1112 = vmatpush1.bf16.msra.mxu0 %v691
    %1113 = vmatprep.subr.bf16.mxu0 0
    %1114 = vmatpush1.bf16.msra.mxu0 %v694
    %1115 = vmatprep.mubr.bf16.mxu0 %v1041
    %1116 = vmatmul.mubr.bf16.gmra.mrb[0].mxu0 %v1040
    %v1117 = vpop.f32.mrb[0].mxu0
    %v1118 = vadd.f32 %v242, %v1117
    %v1119 = vpop.f32.mrb[0].mxu0
    %v1120 = vpop.f32.mrb[0].mxu0
    %v1121 = vpop.f32.mrb[0].mxu0
    %1122 = vdwg.mxu0
    %v1123 = vxor.u32 %v1077, 2147483648
    %v1124 = vmul.f32 %v1123, 1.442695
    %v1125 = vpow.pop %v1124
    %v1126 = vadd.f32 %v1125, 1.0
    %v1127 = vrcp.pop %v1126
    %v1128 = vmul.f32 1.0, %v1127
    %v1129 = vxor.u32 %v1079, 2147483648
    %v1130 = vmul.f32 %v1129, 1.442695
    %v1131 = vpow.pop %v1130
    %v1132 = vadd.f32 %v1131, 1.0
    %v1133 = vrcp.pop %v1132
    %v1134 = vmul.f32 1.0, %v1133
    %v1135 = vmul.f32 %v1134, %v930
    %v1136 = vpack.c.bf16 %v1135, %v1135
    %1137 = vmatprep.subr.bf16.mxu0 0
    %1138 = vmatpush1.bf16.msra.mxu0 %v870
    %1139 = vmatprep.subr.bf16.mxu0 0
    %1140 = vmatpush1.bf16.msra.mxu0 %v871
    %1141 = vmatprep.subr.bf16.mxu0 0
    %1142 = vmatpush1.bf16.msra.mxu0 %v872
    %1143 = vmatprep.subr.bf16.mxu0 0
    %1144 = vmatpush1.bf16.msra.mxu0 %v873
    %1145 = vmatprep.subr.bf16.mxu0 0
    %1146 = vmatpush1.bf16.msra.mxu0 %v874
    %1147 = vmatprep.subr.bf16.mxu0 0
    %1148 = vmatpush1.bf16.msra.mxu0 %v875
    %1149 = vmatprep.subr.bf16.mxu0 0
    %1150 = vmatpush1.bf16.msra.mxu0 %v876
    %1151 = vmatprep.subr.bf16.mxu0 0
    %1152 = vmatpush1.bf16.msra.mxu0 %v877
    %1153 = vmatprep.subr.bf16.mxu0 0
    %1154 = vmatpush1.bf16.msra.mxu0 0
    %1155 = vmatprep.subr.bf16.mxu0 0
    %1156 = vmatpush1.bf16.msra.mxu0 0
    %1157 = vmatprep.subr.bf16.mxu0 0
    %1158 = vmatpush1.bf16.msra.mxu0 0
    %1159 = vmatprep.subr.bf16.mxu0 0
    %1160 = vmatpush1.bf16.msra.mxu0 0
    %1161 = vmatprep.subr.bf16.mxu0 0
    %1162 = vmatpush1.bf16.msra.mxu0 0
    %1163 = vmatprep.subr.bf16.mxu0 0
    %1164 = vmatpush1.bf16.msra.mxu0 0
    %1165 = vmatprep.subr.bf16.mxu0 0
    %1166 = vmatpush1.bf16.msra.mxu0 0
    %1167 = vmatprep.subr.bf16.mxu0 0
    %1168 = vmatpush1.bf16.msra.mxu0 0
    %1169 = vmatprep.mubr.bf16.mxu0 0
    %1170 = vmatmul.mubr.bf16.gmra.mrb[0].mxu0 %v1136
    %v1171 = vpop.f32.mrb[0].mxu0
    %v1172 = vadd.f32 0.0, %v1171
    %v1173 = vpop.f32.mrb[0].mxu0
    %v1174 = vpop.f32.mrb[0].mxu0
    %v1175 = vpop.f32.mrb[0].mxu0
    %1176 = vdwg.mxu0
    %v1177 = vadd.f32 %v1118, %v1172
    %v1178 = vtanh.pop %v1177
    %v1179 = vsub.f32 %v930, %v1178
    %v1180 = vmul.f32 %v1128, %v1179
    %v1181 = vadd.f32 %v1178, %v1180
    %s1182 = scalar_lea.vmem [#allocation13], 8
    %1183 = vst [vmem:[%s1182] sm:$0xff] %v1181
    %s1184 = scalar_lea.vmem [#allocation2], 24
    %v1185 = vld [vmem:[%s1184] sm:$0xff]
    %v1186 = vld [vmem:[%s1184 + $0x8] sm:$0xf]
    %v1187 = vunpack.c.l.bf16 %v1185
    %v1188 = vunpack.c.h.bf16 %v1185
    %v1189 = vunpack.c.l.bf16 %v1186
    %1190 = vmatprep.subr.bf16.mxu0 %v304
    %1191 = vmatpush1.bf16.msra.mxu0 %v303
    %1192 = vmatprep.subr.bf16.mxu0 %v306
    %1193 = vmatpush1.bf16.msra.mxu0 %v305
    %1194 = vmatprep.subr.bf16.mxu0 %v308
    %1195 = vmatpush1.bf16.msra.mxu0 %v307
    %1196 = vmatprep.subr.bf16.mxu0 %v310
    %1197 = vmatpush1.bf16.msra.mxu0 %v309
    %1198 = vmatprep.subr.bf16.mxu0 %v312
    %1199 = vmatpush1.bf16.msra.mxu0 %v311
    %1200 = vmatprep.subr.bf16.mxu0 %v314
    %1201 = vmatpush1.bf16.msra.mxu0 %v313
    %1202 = vmatprep.subr.bf16.mxu0 %v316
    %1203 = vmatpush1.bf16.msra.mxu0 %v315
    %1204 = vmatprep.subr.bf16.mxu0 %v318
    %1205 = vmatpush1.bf16.msra.mxu0 %v317
    %1206 = vmatprep.subr.bf16.mxu0 0
    %1207 = vmatpush1.bf16.msra.mxu0 0
    %1208 = vmatprep.subr.bf16.mxu0 0
    %1209 = vmatpush1.bf16.msra.mxu0 0
    %1210 = vmatprep.subr.bf16.mxu0 0
    %1211 = vmatpush1.bf16.msra.mxu0 0
    %1212 = vmatprep.subr.bf16.mxu0 0
    %1213 = vmatpush1.bf16.msra.mxu0 0
    %1214 = vmatprep.subr.bf16.mxu0 0
    %1215 = vmatpush1.bf16.msra.mxu0 0
    %1216 = vmatprep.subr.bf16.mxu0 0
    %1217 = vmatpush1.bf16.msra.mxu0 0
    %1218 = vmatprep.subr.bf16.mxu0 0
    %1219 = vmatpush1.bf16.msra.mxu0 0
    %1220 = vmatprep.subr.bf16.mxu0 0
    %1221 = vmatpush1.bf16.msra.mxu0 0
    %1222 = vmatprep.mubr.bf16.mxu0 0
    %1223 = vmatmul.mubr.bf16.gmra.mrb[0].mxu0 %v1040
    %v1224 = vpop.f32.mrb[0].mxu0
    %v1225 = vadd.f32 0.0, %v1224
    %v1226 = vpop.f32.mrb[0].mxu0
    %v1227 = vadd.f32 0.0, %v1226
    %v1228 = vpop.f32.mrb[0].mxu0
    %v1229 = vpop.f32.mrb[0].mxu0
    %1230 = vdwg.mxu0
    %v1231 = vadd.f32 %v1187, %v1225
    %v1232 = vxor.u32 %v1231, 2147483648
    %v1233 = vmul.f32 %v1232, 1.442695
    %v1234 = vpow.pop %v1233
    %v1235 = vadd.f32 %v1234, 1.0
    %v1236 = vrcp.pop %v1235
    %v1237 = vmul.f32 1.0, %v1236
    %v1238 = vadd.f32 %v1188, %v1227
    %v1239 = vxor.u32 %v1238, 2147483648
    %v1240 = vmul.f32 %v1239, 1.442695
    %v1241 = vpow.pop %v1240
    %v1242 = vadd.f32 %v1241, 1.0
    %v1243 = vrcp.pop %v1242
    %v1244 = vmul.f32 1.0, %v1243
    %v1245 = vmul.f32 %v1244, %v1039
    %v1246 = vpack.c.bf16 %v1245, %v1245
    %1247 = vmatprep.subr.bf16.mxu0 0
    %1248 = vmatpush1.bf16.msra.mxu0 %v424
    %1249 = vmatprep.subr.bf16.mxu0 0
    %1250 = vmatpush1.bf16.msra.mxu0 %v425
    %1251 = vmatprep.subr.bf16.mxu0 0
    %1252 = vmatpush1.bf16.msra.mxu0 %v426
    %1253 = vmatprep.subr.bf16.mxu0 0
    %1254 = vmatpush1.bf16.msra.mxu0 %v427
    %1255 = vmatprep.subr.bf16.mxu0 0
    %1256 = vmatpush1.bf16.msra.mxu0 %v428
    %1257 = vmatprep.subr.bf16.mxu0 0
    %1258 = vmatpush1.bf16.msra.mxu0 %v429
    %1259 = vmatprep.subr.bf16.mxu0 0
    %1260 = vmatpush1.bf16.msra.mxu0 %v430
    %1261 = vmatprep.subr.bf16.mxu0 0
    %1262 = vmatpush1.bf16.msra.mxu0 %v431
    %1263 = vmatprep.subr.bf16.mxu0 0
    %1264 = vmatpush1.bf16.msra.mxu0 0
    %1265 = vmatprep.subr.bf16.mxu0 0
    %1266 = vmatpush1.bf16.msra.mxu0 0
    %1267 = vmatprep.subr.bf16.mxu0 0
    %1268 = vmatpush1.bf16.msra.mxu0 0
    %1269 = vmatprep.subr.bf16.mxu0 0
    %1270 = vmatpush1.bf16.msra.mxu0 0
    %1271 = vmatprep.subr.bf16.mxu0 0
    %1272 = vmatpush1.bf16.msra.mxu0 0
    %1273 = vmatprep.subr.bf16.mxu0 0
    %1274 = vmatpush1.bf16.msra.mxu0 0
    %1275 = vmatprep.subr.bf16.mxu0 0
    %1276 = vmatpush1.bf16.msra.mxu0 0
    %1277 = vmatprep.subr.bf16.mxu0 0
    %1278 = vmatpush1.bf16.msra.mxu0 0
    %1279 = vmatprep.mubr.bf16.mxu0 0
    %1280 = vmatmul.mubr.bf16.gmra.mrb[0].mxu0 %v1246
    %v1281 = vpop.f32.mrb[0].mxu0
    %v1282 = vadd.f32 0.0, %v1281
    %v1283 = vpop.f32.mrb[0].mxu0
    %v1284 = vpop.f32.mrb[0].mxu0
    %v1285 = vpop.f32.mrb[0].mxu0
    %1286 = vdwg.mxu0
    %v1287 = vadd.f32 %v1189, %v1282
    %v1288 = vtanh.pop %v1287
    %v1289 = vsub.f32 %v1039, %v1288
    %v1290 = vmul.f32 %v1237, %v1289
    %v1291 = vadd.f32 %v1288, %v1290
    %v1292 = vpack.c.bf16 %v1291, %v1291
    %v1293 = vpack.c.bf16 %v1181, %v1181
    %1294 = vmatprep.subr.bf16.mxu0 %v648
    %1295 = vmatpush1.bf16.msra.mxu0 %v647
    %1296 = vmatprep.subr.bf16.mxu0 %v651
    %1297 = vmatpush1.bf16.msra.mxu0 %v650
    %1298 = vmatprep.subr.bf16.mxu0 %v654
    %1299 = vmatpush1.bf16.msra.mxu0 %v653
    %1300 = vmatprep.subr.bf16.mxu0 %v657
    %1301 = vmatpush1.bf16.msra.mxu0 %v656
    %1302 = vmatprep.subr.bf16.mxu0 %v660
    %1303 = vmatpush1.bf16.msra.mxu0 %v659
    %1304 = vmatprep.subr.bf16.mxu0 %v663
    %1305 = vmatpush1.bf16.msra.mxu0 %v662
    %1306 = vmatprep.subr.bf16.mxu0 %v666
    %1307 = vmatpush1.bf16.msra.mxu0 %v665
    %1308 = vmatprep.subr.bf16.mxu0 %v669
    %1309 = vmatpush1.bf16.msra.mxu0 %v668
    %1310 = vmatprep.subr.bf16.mxu0 %v672
    %1311 = vmatpush1.bf16.msra.mxu0 %v671
    %1312 = vmatprep.subr.bf16.mxu0 %v675
    %1313 = vmatpush1.bf16.msra.mxu0 %v674
    %1314 = vmatprep.subr.bf16.mxu0 %v678
    %1315 = vmatpush1.bf16.msra.mxu0 %v677
    %1316 = vmatprep.subr.bf16.mxu0 %v681
    %1317 = vmatpush1.bf16.msra.mxu0 %v680
    %1318 = vmatprep.subr.bf16.mxu0 %v684
    %1319 = vmatpush1.bf16.msra.mxu0 %v683
    %1320 = vmatprep.subr.bf16.mxu0 %v687
    %1321 = vmatpush1.bf16.msra.mxu0 %v686
    %1322 = vmatprep.subr.bf16.mxu0 %v690
    %1323 = vmatpush1.bf16.msra.mxu0 %v689
    %1324 = vmatprep.subr.bf16.mxu0 %v693
    %1325 = vmatpush1.bf16.msra.mxu0 %v692
    %1326 = vmatprep.mubr.bf16.mxu0 %v1293
    %1327 = vmatmul.mubr.bf16.gmra.mrb[0].mxu0 %v1292
    %v1328 = vpop.f32.mrb[0].mxu0
    %v1329 = vadd.f32 %v234, %v1328
    %v1330 = vpop.f32.mrb[0].mxu0
    %v1331 = vadd.f32 %v238, %v1330
    %v1332 = vpop.f32.mrb[0].mxu0
    %v1333 = vpop.f32.mrb[0].mxu0
    %1334 = vdwg.mxu0
    %1335 = vmatprep.subr.bf16.mxu0 0
    %1336 = vmatpush1.bf16.msra.mxu0 %v649
    %1337 = vmatprep.subr.bf16.mxu0 0
    %1338 = vmatpush1.bf16.msra.mxu0 %v652
    %1339 = vmatprep.subr.bf16.mxu0 0
    %1340 = vmatpush1.bf16.msra.mxu0 %v655
    %1341 = vmatprep.subr.bf16.mxu0 0
    %1342 = vmatpush1.bf16.msra.mxu0 %v658
    %1343 = vmatprep.subr.bf16.mxu0 0
    %1344 = vmatpush1.bf16.msra.mxu0 %v661
    %1345 = vmatprep.subr.bf16.mxu0 0
    %1346 = vmatpush1.bf16.msra.mxu0 %v664
    %1347 = vmatprep.subr.bf16.mxu0 0
    %1348 = vmatpush1.bf16.msra.mxu0 %v667
    %1349 = vmatprep.subr.bf16.mxu0 0
    %1350 = vmatpush1.bf16.msra.mxu0 %v670
    %1351 = vmatprep.subr.bf16.mxu0 0
    %1352 = vmatpush1.bf16.msra.mxu0 %v673
    %1353 = vmatprep.subr.bf16.mxu0 0
    %1354 = vmatpush1.bf16.msra.mxu0 %v676
    %1355 = vmatprep.subr.bf16.mxu0 0
    %1356 = vmatpush1.bf16.msra.mxu0 %v679
    %1357 = vmatprep.subr.bf16.mxu0 0
    %1358 = vmatpush1.bf16.msra.mxu0 %v682
    %1359 = vmatprep.subr.bf16.mxu0 0
    %1360 = vmatpush1.bf16.msra.mxu0 %v685
    %1361 = vmatprep.subr.bf16.mxu0 0
    %1362 = vmatpush1.bf16.msra.mxu0 %v688
    %1363 = vmatprep.subr.bf16.mxu0 0
    %1364 = vmatpush1.bf16.msra.mxu0 %v691
    %1365 = vmatprep.subr.bf16.mxu0 0
    %1366 = vmatpush1.bf16.msra.mxu0 %v694
    %1367 = vmatprep.mubr.bf16.mxu0 %v1293
    %1368 = vmatmul.mubr.bf16.gmra.mrb[0].mxu0 %v1292
    %v1369 = vpop.f32.mrb[0].mxu0
    %v1370 = vadd.f32 %v242, %v1369
    %v1371 = vpop.f32.mrb[0].mxu0
    %v1372 = vpop.f32.mrb[0].mxu0
    %v1373 = vpop.f32.mrb[0].mxu0
    %1374 = vdwg.mxu0
    %v1375 = vxor.u32 %v1329, 2147483648
    %v1376 = vmul.f32 %v1375, 1.442695
    %v1377 = vpow.pop %v1376
    %v1378 = vadd.f32 %v1377, 1.0
    %v1379 = vrcp.pop %v1378
    %v1380 = vmul.f32 1.0, %v1379
    %v1381 = vxor.u32 %v1331, 2147483648
    %v1382 = vmul.f32 %v1381, 1.442695
    %v1383 = vpow.pop %v1382
    %v1384 = vadd.f32 %v1383, 1.0
    %v1385 = vrcp.pop %v1384
    %v1386 = vmul.f32 1.0, %v1385
    %v1387 = vmul.f32 %v1386, %v1181
    %v1388 = vpack.c.bf16 %v1387, %v1387
    %1389 = vmatprep.subr.bf16.mxu0 0
    %1390 = vmatpush1.bf16.msra.mxu0 %v870
    %1391 = vmatprep.subr.bf16.mxu0 0
    %1392 = vmatpush1.bf16.msra.mxu0 %v871
    %1393 = vmatprep.subr.bf16.mxu0 0
    %1394 = vmatpush1.bf16.msra.mxu0 %v872
    %1395 = vmatprep.subr.bf16.mxu0 0
    %1396 = vmatpush1.bf16.msra.mxu0 %v873
    %1397 = vmatprep.subr.bf16.mxu0 0
    %1398 = vmatpush1.bf16.msra.mxu0 %v874
    %1399 = vmatprep.subr.bf16.mxu0 0
    %1400 = vmatpush1.bf16.msra.mxu0 %v875
    %1401 = vmatprep.subr.bf16.mxu0 0
    %1402 = vmatpush1.bf16.msra.mxu0 %v876
    %1403 = vmatprep.subr.bf16.mxu0 0
    %1404 = vmatpush1.bf16.msra.mxu0 %v877
    %1405 = vmatprep.subr.bf16.mxu0 0
    %1406 = vmatpush1.bf16.msra.mxu0 0
    %1407 = vmatprep.subr.bf16.mxu0 0
    %1408 = vmatpush1.bf16.msra.mxu0 0
    %1409 = vmatprep.subr.bf16.mxu0 0
    %1410 = vmatpush1.bf16.msra.mxu0 0
    %1411 = vmatprep.subr.bf16.mxu0 0
    %1412 = vmatpush1.bf16.msra.mxu0 0
    %1413 = vmatprep.subr.bf16.mxu0 0
    %1414 = vmatpush1.bf16.msra.mxu0 0
    %1415 = vmatprep.subr.bf16.mxu0 0
    %1416 = vmatpush1.bf16.msra.mxu0 0
    %1417 = vmatprep.subr.bf16.mxu0 0
    %1418 = vmatpush1.bf16.msra.mxu0 0
    %1419 = vmatprep.subr.bf16.mxu0 0
    %1420 = vmatpush1.bf16.msra.mxu0 0
    %1421 = vmatprep.mubr.bf16.mxu0 0
    %1422 = vmatmul.mubr.bf16.gmra.mrb[0].mxu0 %v1388
    %v1423 = vpop.f32.mrb[0].mxu0
    %v1424 = vadd.f32 0.0, %v1423
    %v1425 = vpop.f32.mrb[0].mxu0
    %v1426 = vpop.f32.mrb[0].mxu0
    %v1427 = vpop.f32.mrb[0].mxu0
    %1428 = vdwg.mxu0
    %v1429 = vadd.f32 %v1370, %v1424
    %v1430 = vtanh.pop %v1429
    %v1431 = vsub.f32 %v1181, %v1430
    %v1432 = vmul.f32 %v1380, %v1431
    %v1433 = vadd.f32 %v1430, %v1432
    %s1434 = scalar_lea.vmem [#allocation13], 16
    %1435 = vst [vmem:[%s1434] sm:$0xff] %v1433
    %s1436 = scalar_lea.vmem [#allocation2], 36
    %v1437 = vld [vmem:[%s1436] sm:$0xff]
    %v1438 = vld [vmem:[%s1436 + $0x8] sm:$0xf]
    %v1439 = vunpack.c.l.bf16 %v1437
    %v1440 = vunpack.c.h.bf16 %v1437
    %v1441 = vunpack.c.l.bf16 %v1438
    %1442 = vmatprep.subr.bf16.mxu0 %v304
    %1443 = vmatpush1.bf16.msra.mxu0 %v303
    %1444 = vmatprep.subr.bf16.mxu0 %v306
    %1445 = vmatpush1.bf16.msra.mxu0 %v305
    %1446 = vmatprep.subr.bf16.mxu0 %v308
    %1447 = vmatpush1.bf16.msra.mxu0 %v307
    %1448 = vmatprep.subr.bf16.mxu0 %v310
    %1449 = vmatpush1.bf16.msra.mxu0 %v309
    %1450 = vmatprep.subr.bf16.mxu0 %v312
    %1451 = vmatpush1.bf16.msra.mxu0 %v311
    %1452 = vmatprep.subr.bf16.mxu0 %v314
    %1453 = vmatpush1.bf16.msra.mxu0 %v313
    %1454 = vmatprep.subr.bf16.mxu0 %v316
    %1455 = vmatpush1.bf16.msra.mxu0 %v315
    %1456 = vmatprep.subr.bf16.mxu0 %v318
    %1457 = vmatpush1.bf16.msra.mxu0 %v317
    %1458 = vmatprep.subr.bf16.mxu0 0
    %1459 = vmatpush1.bf16.msra.mxu0 0
    %1460 = vmatprep.subr.bf16.mxu0 0
    %1461 = vmatpush1.bf16.msra.mxu0 0
    %1462 = vmatprep.subr.bf16.mxu0 0
    %1463 = vmatpush1.bf16.msra.mxu0 0
    %1464 = vmatprep.subr.bf16.mxu0 0
    %1465 = vmatpush1.bf16.msra.mxu0 0
    %1466 = vmatprep.subr.bf16.mxu0 0
    %1467 = vmatpush1.bf16.msra.mxu0 0
    %1468 = vmatprep.subr.bf16.mxu0 0
    %1469 = vmatpush1.bf16.msra.mxu0 0
    %1470 = vmatprep.subr.bf16.mxu0 0
    %1471 = vmatpush1.bf16.msra.mxu0 0
    %1472 = vmatprep.subr.bf16.mxu0 0
    %1473 = vmatpush1.bf16.msra.mxu0 0
    %1474 = vmatprep.mubr.bf16.mxu0 0
    %1475 = vmatmul.mubr.bf16.gmra.mrb[0].mxu0 %v1292
    %v1476 = vpop.f32.mrb[0].mxu0
    %v1477 = vadd.f32 0.0, %v1476
    %v1478 = vpop.f32.mrb[0].mxu0
    %v1479 = vadd.f32 0.0, %v1478
    %v1480 = vpop.f32.mrb[0].mxu0
    %v1481 = vpop.f32.mrb[0].mxu0
    %1482 = vdwg.mxu0
    %v1483 = vadd.f32 %v1439, %v1477
    %v1484 = vxor.u32 %v1483, 2147483648
    %v1485 = vmul.f32 %v1484, 1.442695
    %v1486 = vpow.pop %v1485
    %v1487 = vadd.f32 %v1486, 1.0
    %v1488 = vrcp.pop %v1487
    %v1489 = vmul.f32 1.0, %v1488
    %v1490 = vadd.f32 %v1440, %v1479
    %v1491 = vxor.u32 %v1490, 2147483648
    %v1492 = vmul.f32 %v1491, 1.442695
    %v1493 = vpow.pop %v1492
    %v1494 = vadd.f32 %v1493, 1.0
    %v1495 = vrcp.pop %v1494
    %v1496 = vmul.f32 1.0, %v1495
    %v1497 = vmul.f32 %v1496, %v1291
    %v1498 = vpack.c.bf16 %v1497, %v1497
    %1499 = vmatprep.subr.bf16.mxu0 0
    %1500 = vmatpush1.bf16.msra.mxu0 %v424
    %1501 = vmatprep.subr.bf16.mxu0 0
    %1502 = vmatpush1.bf16.msra.mxu0 %v425
    %1503 = vmatprep.subr.bf16.mxu0 0
    %1504 = vmatpush1.bf16.msra.mxu0 %v426
    %1505 = vmatprep.subr.bf16.mxu0 0
    %1506 = vmatpush1.bf16.msra.mxu0 %v427
    %1507 = vmatprep.subr.bf16.mxu0 0
    %1508 = vmatpush1.bf16.msra.mxu0 %v428
    %1509 = vmatprep.subr.bf16.mxu0 0
    %1510 = vmatpush1.bf16.msra.mxu0 %v429
    %1511 = vmatprep.subr.bf16.mxu0 0
    %1512 = vmatpush1.bf16.msra.mxu0 %v430
    %1513 = vmatprep.subr.bf16.mxu0 0
    %1514 = vmatpush1.bf16.msra.mxu0 %v431
    %1515 = vmatprep.subr.bf16.mxu0 0
    %1516 = vmatpush1.bf16.msra.mxu0 0
    %1517 = vmatprep.subr.bf16.mxu0 0
    %1518 = vmatpush1.bf16.msra.mxu0 0
    %1519 = vmatprep.subr.bf16.mxu0 0
    %1520 = vmatpush1.bf16.msra.mxu0 0
    %1521 = vmatprep.subr.bf16.mxu0 0
    %1522 = vmatpush1.bf16.msra.mxu0 0
    %1523 = vmatprep.subr.bf16.mxu0 0
    %1524 = vmatpush1.bf16.msra.mxu0 0
    %1525 = vmatprep.subr.bf16.mxu0 0
    %1526 = vmatpush1.bf16.msra.mxu0 0
    %1527 = vmatprep.subr.bf16.mxu0 0
    %1528 = vmatpush1.bf16.msra.mxu0 0
    %1529 = vmatprep.subr.bf16.mxu0 0
    %1530 = vmatpush1.bf16.msra.mxu0 0
    %1531 = vmatprep.mubr.bf16.mxu0 0
    %1532 = vmatmul.mubr.bf16.gmra.mrb[0].mxu0 %v1498
    %v1533 = vpop.f32.mrb[0].mxu0
    %v1534 = vadd.f32 0.0, %v1533
    %v1535 = vpop.f32.mrb[0].mxu0
    %v1536 = vpop.f32.mrb[0].mxu0
    %v1537 = vpop.f32.mrb[0].mxu0
    %1538 = vdwg.mxu0
    %v1539 = vadd.f32 %v1441, %v1534
    %v1540 = vtanh.pop %v1539
    %v1541 = vsub.f32 %v1291, %v1540
    %v1542 = vmul.f32 %v1489, %v1541
    %v1543 = vadd.f32 %v1540, %v1542
    %v1544 = vpack.c.bf16 %v1543, %v1543
    %v1545 = vpack.c.bf16 %v1433, %v1433
    %1546 = vmatprep.subr.bf16.mxu0 %v648
    %1547 = vmatpush1.bf16.msra.mxu0 %v647
    %1548 = vmatprep.subr.bf16.mxu0 %v651
    %1549 = vmatpush1.bf16.msra.mxu0 %v650
    %1550 = vmatprep.subr.bf16.mxu0 %v654
    %1551 = vmatpush1.bf16.msra.mxu0 %v653
    %1552 = vmatprep.subr.bf16.mxu0 %v657
    %1553 = vmatpush1.bf16.msra.mxu0 %v656
    %1554 = vmatprep.subr.bf16.mxu0 %v660
    %1555 = vmatpush1.bf16.msra.mxu0 %v659
    %1556 = vmatprep.subr.bf16.mxu0 %v663
    %1557 = vmatpush1.bf16.msra.mxu0 %v662
    %1558 = vmatprep.subr.bf16.mxu0 %v666
    %1559 = vmatpush1.bf16.msra.mxu0 %v665
    %1560 = vmatprep.subr.bf16.mxu0 %v669
    %1561 = vmatpush1.bf16.msra.mxu0 %v668
    %1562 = vmatprep.subr.bf16.mxu0 %v672
    %1563 = vmatpush1.bf16.msra.mxu0 %v671
    %1564 = vmatprep.subr.bf16.mxu0 %v675
    %1565 = vmatpush1.bf16.msra.mxu0 %v674
    %1566 = vmatprep.subr.bf16.mxu0 %v678
    %1567 = vmatpush1.bf16.msra.mxu0 %v677
    %1568 = vmatprep.subr.bf16.mxu0 %v681
    %1569 = vmatpush1.bf16.msra.mxu0 %v680
    %1570 = vmatprep.subr.bf16.mxu0 %v684
    %1571 = vmatpush1.bf16.msra.mxu0 %v683
    %1572 = vmatprep.subr.bf16.mxu0 %v687
    %1573 = vmatpush1.bf16.msra.mxu0 %v686
    %1574 = vmatprep.subr.bf16.mxu0 %v690
    %1575 = vmatpush1.bf16.msra.mxu0 %v689
    %1576 = vmatprep.subr.bf16.mxu0 %v693
    %1577 = vmatpush1.bf16.msra.mxu0 %v692
    %1578 = vmatprep.mubr.bf16.mxu0 %v1545
    %1579 = vmatmul.mubr.bf16.gmra.mrb[0].mxu0 %v1544
    %v1580 = vpop.f32.mrb[0].mxu0
    %v1581 = vadd.f32 %v234, %v1580
    %v1582 = vpop.f32.mrb[0].mxu0
    %v1583 = vadd.f32 %v238, %v1582
    %v1584 = vpop.f32.mrb[0].mxu0
    %v1585 = vpop.f32.mrb[0].mxu0
    %1586 = vdwg.mxu0
    %1587 = vmatprep.subr.bf16.mxu0 0
    %1588 = vmatpush1.bf16.msra.mxu0 %v649
    %1589 = vmatprep.subr.bf16.mxu0 0
    %1590 = vmatpush1.bf16.msra.mxu0 %v652
    %1591 = vmatprep.subr.bf16.mxu0 0
    %1592 = vmatpush1.bf16.msra.mxu0 %v655
    %1593 = vmatprep.subr.bf16.mxu0 0
    %1594 = vmatpush1.bf16.msra.mxu0 %v658
    %1595 = vmatprep.subr.bf16.mxu0 0
    %1596 = vmatpush1.bf16.msra.mxu0 %v661
    %1597 = vmatprep.subr.bf16.mxu0 0
    %1598 = vmatpush1.bf16.msra.mxu0 %v664
    %1599 = vmatprep.subr.bf16.mxu0 0
    %1600 = vmatpush1.bf16.msra.mxu0 %v667
    %1601 = vmatprep.subr.bf16.mxu0 0
    %1602 = vmatpush1.bf16.msra.mxu0 %v670
    %1603 = vmatprep.subr.bf16.mxu0 0
    %1604 = vmatpush1.bf16.msra.mxu0 %v673
    %1605 = vmatprep.subr.bf16.mxu0 0
    %1606 = vmatpush1.bf16.msra.mxu0 %v676
    %1607 = vmatprep.subr.bf16.mxu0 0
    %1608 = vmatpush1.bf16.msra.mxu0 %v679
    %1609 = vmatprep.subr.bf16.mxu0 0
    %1610 = vmatpush1.bf16.msra.mxu0 %v682
    %1611 = vmatprep.subr.bf16.mxu0 0
    %1612 = vmatpush1.bf16.msra.mxu0 %v685
    %1613 = vmatprep.subr.bf16.mxu0 0
    %1614 = vmatpush1.bf16.msra.mxu0 %v688
    %1615 = vmatprep.subr.bf16.mxu0 0
    %1616 = vmatpush1.bf16.msra.mxu0 %v691
    %1617 = vmatprep.subr.bf16.mxu0 0
    %1618 = vmatpush1.bf16.msra.mxu0 %v694
    %1619 = vmatprep.mubr.bf16.mxu0 %v1545
    %1620 = vmatmul.mubr.bf16.gmra.mrb[0].mxu0 %v1544
    %v1621 = vpop.f32.mrb[0].mxu0
    %v1622 = vadd.f32 %v242, %v1621
    %v1623 = vpop.f32.mrb[0].mxu0
    %v1624 = vpop.f32.mrb[0].mxu0
    %v1625 = vpop.f32.mrb[0].mxu0
    %1626 = vdwg.mxu0
    %v1627 = vxor.u32 %v1581, 2147483648
    %v1628 = vmul.f32 %v1627, 1.442695
    %v1629 = vpow.pop %v1628
    %v1630 = vadd.f32 %v1629, 1.0
    %v1631 = vrcp.pop %v1630
    %v1632 = vmul.f32 1.0, %v1631
    %v1633 = vxor.u32 %v1583, 2147483648
    %v1634 = vmul.f32 %v1633, 1.442695
    %v1635 = vpow.pop %v1634
    %v1636 = vadd.f32 %v1635, 1.0
    %v1637 = vrcp.pop %v1636
    %v1638 = vmul.f32 1.0, %v1637
    %v1639 = vmul.f32 %v1638, %v1433
    %v1640 = vpack.c.bf16 %v1639, %v1639
    %1641 = vmatprep.subr.bf16.mxu0 0
    %1642 = vmatpush1.bf16.msra.mxu0 %v870
    %1643 = vmatprep.subr.bf16.mxu0 0
    %1644 = vmatpush1.bf16.msra.mxu0 %v871
    %1645 = vmatprep.subr.bf16.mxu0 0
    %1646 = vmatpush1.bf16.msra.mxu0 %v872
    %1647 = vmatprep.subr.bf16.mxu0 0
    %1648 = vmatpush1.bf16.msra.mxu0 %v873
    %1649 = vmatprep.subr.bf16.mxu0 0
    %1650 = vmatpush1.bf16.msra.mxu0 %v874
    %1651 = vmatprep.subr.bf16.mxu0 0
    %1652 = vmatpush1.bf16.msra.mxu0 %v875
    %1653 = vmatprep.subr.bf16.mxu0 0
    %1654 = vmatpush1.bf16.msra.mxu0 %v876
    %1655 = vmatprep.subr.bf16.mxu0 0
    %1656 = vmatpush1.bf16.msra.mxu0 %v877
    %1657 = vmatprep.subr.bf16.mxu0 0
    %1658 = vmatpush1.bf16.msra.mxu0 0
    %1659 = vmatprep.subr.bf16.mxu0 0
    %1660 = vmatpush1.bf16.msra.mxu0 0
    %1661 = vmatprep.subr.bf16.mxu0 0
    %1662 = vmatpush1.bf16.msra.mxu0 0
    %1663 = vmatprep.subr.bf16.mxu0 0
    %1664 = vmatpush1.bf16.msra.mxu0 0
    %1665 = vmatprep.subr.bf16.mxu0 0
    %1666 = vmatpush1.bf16.msra.mxu0 0
    %1667 = vmatprep.subr.bf16.mxu0 0
    %1668 = vmatpush1.bf16.msra.mxu0 0
    %1669 = vmatprep.subr.bf16.mxu0 0
    %1670 = vmatpush1.bf16.msra.mxu0 0
    %1671 = vmatprep.subr.bf16.mxu0 0
    %1672 = vmatpush1.bf16.msra.mxu0 0
    %1673 = vmatprep.mubr.bf16.mxu0 0
    %1674 = vmatmul.mubr.bf16.gmra.mrb[0].mxu0 %v1640
    %v1675 = vpop.f32.mrb[0].mxu0
    %v1676 = vadd.f32 0.0, %v1675
    %v1677 = vpop.f32.mrb[0].mxu0
    %v1678 = vpop.f32.mrb[0].mxu0
    %v1679 = vpop.f32.mrb[0].mxu0
    %1680 = vdwg.mxu0
    %v1681 = vadd.f32 %v1622, %v1676
    %v1682 = vtanh.pop %v1681
    %v1683 = vsub.f32 %v1433, %v1682
    %v1684 = vmul.f32 %v1632, %v1683
    %v1685 = vadd.f32 %v1682, %v1684
    %s1686 = scalar_lea.vmem [#allocation13], 24
    %1687 = vst [vmem:[%s1686] sm:$0xff] %v1685
    %s1688 = scalar_lea.vmem [#allocation2], 48
    %v1689 = vld [vmem:[%s1688] sm:$0xff]
    %v1690 = vld [vmem:[%s1688 + $0x8] sm:$0xf]
    %v1691 = vunpack.c.l.bf16 %v1689
    %v1692 = vunpack.c.h.bf16 %v1689
    %v1693 = vunpack.c.l.bf16 %v1690
    %1694 = vmatprep.subr.bf16.mxu0 %v304
    %1695 = vmatpush1.bf16.msra.mxu0 %v303
    %1696 = vmatprep.subr.bf16.mxu0 %v306
    %1697 = vmatpush1.bf16.msra.mxu0 %v305
    %1698 = vmatprep.subr.bf16.mxu0 %v308
    %1699 = vmatpush1.bf16.msra.mxu0 %v307
    %1700 = vmatprep.subr.bf16.mxu0 %v310
    %1701 = vmatpush1.bf16.msra.mxu0 %v309
    %1702 = vmatprep.subr.bf16.mxu0 %v312
    %1703 = vmatpush1.bf16.msra.mxu0 %v311
    %1704 = vmatprep.subr.bf16.mxu0 %v314
    %1705 = vmatpush1.bf16.msra.mxu0 %v313
    %1706 = vmatprep.subr.bf16.mxu0 %v316
    %1707 = vmatpush1.bf16.msra.mxu0 %v315
    %1708 = vmatprep.subr.bf16.mxu0 %v318
    %1709 = vmatpush1.bf16.msra.mxu0 %v317
    %1710 = vmatprep.subr.bf16.mxu0 0
    %1711 = vmatpush1.bf16.msra.mxu0 0
    %1712 = vmatprep.subr.bf16.mxu0 0
    %1713 = vmatpush1.bf16.msra.mxu0 0
    %1714 = vmatprep.subr.bf16.mxu0 0
    %1715 = vmatpush1.bf16.msra.mxu0 0
    %1716 = vmatprep.subr.bf16.mxu0 0
    %1717 = vmatpush1.bf16.msra.mxu0 0
    %1718 = vmatprep.subr.bf16.mxu0 0
    %1719 = vmatpush1.bf16.msra.mxu0 0
    %1720 = vmatprep.subr.bf16.mxu0 0
    %1721 = vmatpush1.bf16.msra.mxu0 0
    %1722 = vmatprep.subr.bf16.mxu0 0
    %1723 = vmatpush1.bf16.msra.mxu0 0
    %1724 = vmatprep.subr.bf16.mxu0 0
    %1725 = vmatpush1.bf16.msra.mxu0 0
    %1726 = vmatprep.mubr.bf16.mxu0 0
    %1727 = vmatmul.mubr.bf16.gmra.mrb[0].mxu0 %v1544
    %v1728 = vpop.f32.mrb[0].mxu0
    %v1729 = vadd.f32 0.0, %v1728
    %v1730 = vpop.f32.mrb[0].mxu0
    %v1731 = vadd.f32 0.0, %v1730
    %v1732 = vpop.f32.mrb[0].mxu0
    %v1733 = vpop.f32.mrb[0].mxu0
    %1734 = vdwg.mxu0
    %v1735 = vadd.f32 %v1691, %v1729
    %v1736 = vxor.u32 %v1735, 2147483648
    %v1737 = vmul.f32 %v1736, 1.442695
    %v1738 = vpow.pop %v1737
    %v1739 = vadd.f32 %v1738, 1.0
    %v1740 = vrcp.pop %v1739
    %v1741 = vmul.f32 1.0, %v1740
    %v1742 = vadd.f32 %v1692, %v1731
    %v1743 = vxor.u32 %v1742, 2147483648
    %v1744 = vmul.f32 %v1743, 1.442695
    %v1745 = vpow.pop %v1744
    %v1746 = vadd.f32 %v1745, 1.0
    %v1747 = vrcp.pop %v1746
    %v1748 = vmul.f32 1.0, %v1747
    %v1749 = vmul.f32 %v1748, %v1543
    %v1750 = vpack.c.bf16 %v1749, %v1749
    %1751 = vmatprep.subr.bf16.mxu0 0
    %1752 = vmatpush1.bf16.msra.mxu0 %v424
    %1753 = vmatprep.subr.bf16.mxu0 0
    %1754 = vmatpush1.bf16.msra.mxu0 %v425
    %1755 = vmatprep.subr.bf16.mxu0 0
    %1756 = vmatpush1.bf16.msra.mxu0 %v426
    %1757 = vmatprep.subr.bf16.mxu0 0
    %1758 = vmatpush1.bf16.msra.mxu0 %v427
    %1759 = vmatprep.subr.bf16.mxu0 0
    %1760 = vmatpush1.bf16.msra.mxu0 %v428
    %1761 = vmatprep.subr.bf16.mxu0 0
    %1762 = vmatpush1.bf16.msra.mxu0 %v429
    %1763 = vmatprep.subr.bf16.mxu0 0
    %1764 = vmatpush1.bf16.msra.mxu0 %v430
    %1765 = vmatprep.subr.bf16.mxu0 0
    %1766 = vmatpush1.bf16.msra.mxu0 %v431
    %1767 = vmatprep.subr.bf16.mxu0 0
    %1768 = vmatpush1.bf16.msra.mxu0 0
    %1769 = vmatprep.subr.bf16.mxu0 0
    %1770 = vmatpush1.bf16.msra.mxu0 0
    %1771 = vmatprep.subr.bf16.mxu0 0
    %1772 = vmatpush1.bf16.msra.mxu0 0
    %1773 = vmatprep.subr.bf16.mxu0 0
    %1774 = vmatpush1.bf16.msra.mxu0 0
    %1775 = vmatprep.subr.bf16.mxu0 0
    %1776 = vmatpush1.bf16.msra.mxu0 0
    %1777 = vmatprep.subr.bf16.mxu0 0
    %1778 = vmatpush1.bf16.msra.mxu0 0
    %1779 = vmatprep.subr.bf16.mxu0 0
    %1780 = vmatpush1.bf16.msra.mxu0 0
    %1781 = vmatprep.subr.bf16.mxu0 0
    %1782 = vmatpush1.bf16.msra.mxu0 0
    %1783 = vmatprep.mubr.bf16.mxu0 0
    %1784 = vmatmul.mubr.bf16.gmra.mrb[0].mxu0 %v1750
    %v1785 = vpop.f32.mrb[0].mxu0
    %v1786 = vadd.f32 0.0, %v1785
    %v1787 = vpop.f32.mrb[0].mxu0
    %v1788 = vpop.f32.mrb[0].mxu0
    %v1789 = vpop.f32.mrb[0].mxu0
    %1790 = vdwg.mxu0
    %v1791 = vadd.f32 %v1693, %v1786
    %v1792 = vtanh.pop %v1791
    %v1793 = vsub.f32 %v1543, %v1792
    %v1794 = vmul.f32 %v1741, %v1793
    %v1795 = vadd.f32 %v1792, %v1794
    %v1796 = vpack.c.bf16 %v1795, %v1795
    %v1797 = vpack.c.bf16 %v1685, %v1685
    %1798 = vmatprep.subr.bf16.mxu0 %v648
    %1799 = vmatpush1.bf16.msra.mxu0 %v647
    %1800 = vmatprep.subr.bf16.mxu0 %v651
    %1801 = vmatpush1.bf16.msra.mxu0 %v650
    %1802 = vmatprep.subr.bf16.mxu0 %v654
    %1803 = vmatpush1.bf16.msra.mxu0 %v653
    %1804 = vmatprep.subr.bf16.mxu0 %v657
    %1805 = vmatpush1.bf16.msra.mxu0 %v656
    %1806 = vmatprep.subr.bf16.mxu0 %v660
    %1807 = vmatpush1.bf16.msra.mxu0 %v659
    %1808 = vmatprep.subr.bf16.mxu0 %v663
    %1809 = vmatpush1.bf16.msra.mxu0 %v662
    %1810 = vmatprep.subr.bf16.mxu0 %v666
    %1811 = vmatpush1.bf16.msra.mxu0 %v665
    %1812 = vmatprep.subr.bf16.mxu0 %v669
    %1813 = vmatpush1.bf16.msra.mxu0 %v668
    %1814 = vmatprep.subr.bf16.mxu0 %v672
    %1815 = vmatpush1.bf16.msra.mxu0 %v671
    %1816 = vmatprep.subr.bf16.mxu0 %v675
    %1817 = vmatpush1.bf16.msra.mxu0 %v674
    %1818 = vmatprep.subr.bf16.mxu0 %v678
    %1819 = vmatpush1.bf16.msra.mxu0 %v677
    %1820 = vmatprep.subr.bf16.mxu0 %v681
    %1821 = vmatpush1.bf16.msra.mxu0 %v680
    %1822 = vmatprep.subr.bf16.mxu0 %v684
    %1823 = vmatpush1.bf16.msra.mxu0 %v683
    %1824 = vmatprep.subr.bf16.mxu0 %v687
    %1825 = vmatpush1.bf16.msra.mxu0 %v686
    %1826 = vmatprep.subr.bf16.mxu0 %v690
    %1827 = vmatpush1.bf16.msra.mxu0 %v689
    %1828 = vmatprep.subr.bf16.mxu0 %v693
    %1829 = vmatpush1.bf16.msra.mxu0 %v692
    %1830 = vmatprep.mubr.bf16.mxu0 %v1797
    %1831 = vmatmul.mubr.bf16.gmra.mrb[0].mxu0 %v1796
    %v1832 = vpop.f32.mrb[0].mxu0
    %v1833 = vadd.f32 %v234, %v1832
    %v1834 = vpop.f32.mrb[0].mxu0
    %v1835 = vadd.f32 %v238, %v1834
    %v1836 = vpop.f32.mrb[0].mxu0
    %v1837 = vpop.f32.mrb[0].mxu0
    %1838 = vdwg.mxu0
    %1839 = vmatprep.subr.bf16.mxu0 0
    %1840 = vmatpush1.bf16.msra.mxu0 %v649
    %1841 = vmatprep.subr.bf16.mxu0 0
    %1842 = vmatpush1.bf16.msra.mxu0 %v652
    %1843 = vmatprep.subr.bf16.mxu0 0
    %1844 = vmatpush1.bf16.msra.mxu0 %v655
    %1845 = vmatprep.subr.bf16.mxu0 0
    %1846 = vmatpush1.bf16.msra.mxu0 %v658
    %1847 = vmatprep.subr.bf16.mxu0 0
    %1848 = vmatpush1.bf16.msra.mxu0 %v661
    %1849 = vmatprep.subr.bf16.mxu0 0
    %1850 = vmatpush1.bf16.msra.mxu0 %v664
    %1851 = vmatprep.subr.bf16.mxu0 0
    %1852 = vmatpush1.bf16.msra.mxu0 %v667
    %1853 = vmatprep.subr.bf16.mxu0 0
    %1854 = vmatpush1.bf16.msra.mxu0 %v670
    %1855 = vmatprep.subr.bf16.mxu0 0
    %1856 = vmatpush1.bf16.msra.mxu0 %v673
    %1857 = vmatprep.subr.bf16.mxu0 0
    %1858 = vmatpush1.bf16.msra.mxu0 %v676
    %1859 = vmatprep.subr.bf16.mxu0 0
    %1860 = vmatpush1.bf16.msra.mxu0 %v679
    %1861 = vmatprep.subr.bf16.mxu0 0
    %1862 = vmatpush1.bf16.msra.mxu0 %v682
    %1863 = vmatprep.subr.bf16.mxu0 0
    %1864 = vmatpush1.bf16.msra.mxu0 %v685
    %1865 = vmatprep.subr.bf16.mxu0 0
    %1866 = vmatpush1.bf16.msra.mxu0 %v688
    %1867 = vmatprep.subr.bf16.mxu0 0
    %1868 = vmatpush1.bf16.msra.mxu0 %v691
    %1869 = vmatprep.subr.bf16.mxu0 0
    %1870 = vmatpush1.bf16.msra.mxu0 %v694
    %1871 = vmatprep.mubr.bf16.mxu0 %v1797
    %1872 = vmatmul.mubr.bf16.gmra.mrb[0].mxu0 %v1796
    %v1873 = vpop.f32.mrb[0].mxu0
    %v1874 = vadd.f32 %v242, %v1873
    %v1875 = vpop.f32.mrb[0].mxu0
    %v1876 = vpop.f32.mrb[0].mxu0
    %v1877 = vpop.f32.mrb[0].mxu0
    %1878 = vdwg.mxu0
    %v1879 = vxor.u32 %v1833, 2147483648
    %v1880 = vmul.f32 %v1879, 1.442695
    %v1881 = vpow.pop %v1880
    %v1882 = vadd.f32 %v1881, 1.0
    %v1883 = vrcp.pop %v1882
    %v1884 = vmul.f32 1.0, %v1883
    %v1885 = vxor.u32 %v1835, 2147483648
    %v1886 = vmul.f32 %v1885, 1.442695
    %v1887 = vpow.pop %v1886
    %v1888 = vadd.f32 %v1887, 1.0
    %v1889 = vrcp.pop %v1888
    %v1890 = vmul.f32 1.0, %v1889
    %v1891 = vmul.f32 %v1890, %v1685
    %v1892 = vpack.c.bf16 %v1891, %v1891
    %1893 = vmatprep.subr.bf16.mxu0 0
    %1894 = vmatpush1.bf16.msra.mxu0 %v870
    %1895 = vmatprep.subr.bf16.mxu0 0
    %1896 = vmatpush1.bf16.msra.mxu0 %v871
    %1897 = vmatprep.subr.bf16.mxu0 0
    %1898 = vmatpush1.bf16.msra.mxu0 %v872
    %1899 = vmatprep.subr.bf16.mxu0 0
    %1900 = vmatpush1.bf16.msra.mxu0 %v873
    %1901 = vmatprep.subr.bf16.mxu0 0
    %1902 = vmatpush1.bf16.msra.mxu0 %v874
    %1903 = vmatprep.subr.bf16.mxu0 0
    %1904 = vmatpush1.bf16.msra.mxu0 %v875
    %1905 = vmatprep.subr.bf16.mxu0 0
    %1906 = vmatpush1.bf16.msra.mxu0 %v876
    %1907 = vmatprep.subr.bf16.mxu0 0
    %1908 = vmatpush1.bf16.msra.mxu0 %v877
    %1909 = vmatprep.subr.bf16.mxu0 0
    %1910 = vmatpush1.bf16.msra.mxu0 0
    %1911 = vmatprep.subr.bf16.mxu0 0
    %1912 = vmatpush1.bf16.msra.mxu0 0
    %1913 = vmatprep.subr.bf16.mxu0 0
    %1914 = vmatpush1.bf16.msra.mxu0 0
    %1915 = vmatprep.subr.bf16.mxu0 0
    %1916 = vmatpush1.bf16.msra.mxu0 0
    %1917 = vmatprep.subr.bf16.mxu0 0
    %1918 = vmatpush1.bf16.msra.mxu0 0
    %1919 = vmatprep.subr.bf16.mxu0 0
    %1920 = vmatpush1.bf16.msra.mxu0 0
    %1921 = vmatprep.subr.bf16.mxu0 0
    %1922 = vmatpush1.bf16.msra.mxu0 0
    %1923 = vmatprep.subr.bf16.mxu0 0
    %1924 = vmatpush1.bf16.msra.mxu0 0
    %1925 = vmatprep.mubr.bf16.mxu0 0
    %1926 = vmatmul.mubr.bf16.gmra.mrb[0].mxu0 %v1892
    %v1927 = vpop.f32.mrb[0].mxu0
    %v1928 = vadd.f32 0.0, %v1927
    %v1929 = vpop.f32.mrb[0].mxu0
    %v1930 = vpop.f32.mrb[0].mxu0
    %v1931 = vpop.f32.mrb[0].mxu0
    %1932 = vdwg.mxu0
    %v1933 = vadd.f32 %v1874, %v1928
    %v1934 = vtanh.pop %v1933
    %v1935 = vsub.f32 %v1685, %v1934
    %v1936 = vmul.f32 %v1884, %v1935
    %v1937 = vadd.f32 %v1934, %v1936
    %s1938 = scalar_lea.vmem [#allocation13], 32
    %1939 = vst [vmem:[%s1938] sm:$0xff] %v1937
    %s1940 = scalar_lea.vmem [#allocation2], 60
    %v1941 = vld [vmem:[%s1940] sm:$0xff]
    %v1942 = vld [vmem:[%s1940 + $0x8] sm:$0xf]
    %v1943 = vunpack.c.l.bf16 %v1941
    %v1944 = vunpack.c.h.bf16 %v1941
    %v1945 = vunpack.c.l.bf16 %v1942
    %1946 = vmatprep.subr.bf16.mxu0 %v304
    %1947 = vmatpush1.bf16.msra.mxu0 %v303
    %1948 = vmatprep.subr.bf16.mxu0 %v306
    %1949 = vmatpush1.bf16.msra.mxu0 %v305
    %1950 = vmatprep.subr.bf16.mxu0 %v308
    %1951 = vmatpush1.bf16.msra.mxu0 %v307
    %1952 = vmatprep.subr.bf16.mxu0 %v310
    %1953 = vmatpush1.bf16.msra.mxu0 %v309
    %1954 = vmatprep.subr.bf16.mxu0 %v312
    %1955 = vmatpush1.bf16.msra.mxu0 %v311
    %1956 = vmatprep.subr.bf16.mxu0 %v314
    %1957 = vmatpush1.bf16.msra.mxu0 %v313
    %1958 = vmatprep.subr.bf16.mxu0 %v316
    %1959 = vmatpush1.bf16.msra.mxu0 %v315
    %1960 = vmatprep.subr.bf16.mxu0 %v318
    %1961 = vmatpush1.bf16.msra.mxu0 %v317
    %1962 = vmatprep.subr.bf16.mxu0 0
    %1963 = vmatpush1.bf16.msra.mxu0 0
    %1964 = vmatprep.subr.bf16.mxu0 0
    %1965 = vmatpush1.bf16.msra.mxu0 0
    %1966 = vmatprep.subr.bf16.mxu0 0
    %1967 = vmatpush1.bf16.msra.mxu0 0
    %1968 = vmatprep.subr.bf16.mxu0 0
    %1969 = vmatpush1.bf16.msra.mxu0 0
    %1970 = vmatprep.subr.bf16.mxu0 0
    %1971 = vmatpush1.bf16.msra.mxu0 0
    %1972 = vmatprep.subr.bf16.mxu0 0
    %1973 = vmatpush1.bf16.msra.mxu0 0
    %1974 = vmatprep.subr.bf16.mxu0 0
    %1975 = vmatpush1.bf16.msra.mxu0 0
    %1976 = vmatprep.subr.bf16.mxu0 0
    %1977 = vmatpush1.bf16.msra.mxu0 0
    %1978 = vmatprep.mubr.bf16.mxu0 0
    %1979 = vmatmul.mubr.bf16.gmra.mrb[0].mxu0 %v1796
    %v1980 = vpop.f32.mrb[0].mxu0
    %v1981 = vadd.f32 0.0, %v1980
    %v1982 = vpop.f32.mrb[0].mxu0
    %v1983 = vadd.f32 0.0, %v1982
    %v1984 = vpop.f32.mrb[0].mxu0
    %v1985 = vpop.f32.mrb[0].mxu0
    %1986 = vdwg.mxu0
    %v1987 = vadd.f32 %v1943, %v1981
    %v1988 = vxor.u32 %v1987, 2147483648
    %v1989 = vmul.f32 %v1988, 1.442695
    %v1990 = vpow.pop %v1989
    %v1991 = vadd.f32 %v1990, 1.0
    %v1992 = vrcp.pop %v1991
    %v1993 = vmul.f32 1.0, %v1992
    %v1994 = vadd.f32 %v1944, %v1983
    %v1995 = vxor.u32 %v1994, 2147483648
    %v1996 = vmul.f32 %v1995, 1.442695
    %v1997 = vpow.pop %v1996
    %v1998 = vadd.f32 %v1997, 1.0
    %v1999 = vrcp.pop %v1998
    %v2000 = vmul.f32 1.0, %v1999
    %v2001 = vmul.f32 %v2000, %v1795
    %v2002 = vpack.c.bf16 %v2001, %v2001
    %2003 = vmatprep.subr.bf16.mxu0 0
    %2004 = vmatpush1.bf16.msra.mxu0 %v424
    %2005 = vmatprep.subr.bf16.mxu0 0
    %2006 = vmatpush1.bf16.msra.mxu0 %v425
    %2007 = vmatprep.subr.bf16.mxu0 0
    %2008 = vmatpush1.bf16.msra.mxu0 %v426
    %2009 = vmatprep.subr.bf16.mxu0 0
    %2010 = vmatpush1.bf16.msra.mxu0 %v427
    %2011 = vmatprep.subr.bf16.mxu0 0
    %2012 = vmatpush1.bf16.msra.mxu0 %v428
    %2013 = vmatprep.subr.bf16.mxu0 0
    %2014 = vmatpush1.bf16.msra.mxu0 %v429
    %2015 = vmatprep.subr.bf16.mxu0 0
    %2016 = vmatpush1.bf16.msra.mxu0 %v430
    %2017 = vmatprep.subr.bf16.mxu0 0
    %2018 = vmatpush1.bf16.msra.mxu0 %v431
    %2019 = vmatprep.subr.bf16.mxu0 0
    %2020 = vmatpush1.bf16.msra.mxu0 0
    %2021 = vmatprep.subr.bf16.mxu0 0
    %2022 = vmatpush1.bf16.msra.mxu0 0
    %2023 = vmatprep.subr.bf16.mxu0 0
    %2024 = vmatpush1.bf16.msra.mxu0 0
    %2025 = vmatprep.subr.bf16.mxu0 0
    %2026 = vmatpush1.bf16.msra.mxu0 0
    %2027 = vmatprep.subr.bf16.mxu0 0
    %2028 = vmatpush1.bf16.msra.mxu0 0
    %2029 = vmatprep.subr.bf16.mxu0 0
    %2030 = vmatpush1.bf16.msra.mxu0 0
    %2031 = vmatprep.subr.bf16.mxu0 0
    %2032 = vmatpush1.bf16.msra.mxu0 0
    %2033 = vmatprep.subr.bf16.mxu0 0
    %2034 = vmatpush1.bf16.msra.mxu0 0
    %2035 = vmatprep.mubr.bf16.mxu0 0
    %2036 = vmatmul.mubr.bf16.gmra.mrb[0].mxu0 %v2002
    %v2037 = vpop.f32.mrb[0].mxu0
    %v2038 = vadd.f32 0.0, %v2037
    %v2039 = vpop.f32.mrb[0].mxu0
    %v2040 = vpop.f32.mrb[0].mxu0
    %v2041 = vpop.f32.mrb[0].mxu0
    %2042 = vdwg.mxu0
    %v2043 = vadd.f32 %v1945, %v2038
    %v2044 = vtanh.pop %v2043
    %v2045 = vsub.f32 %v1795, %v2044
    %v2046 = vmul.f32 %v1993, %v2045
    %v2047 = vadd.f32 %v2044, %v2046
    %v2048 = vpack.c.bf16 %v2047, %v2047
    %v2049 = vpack.c.bf16 %v1937, %v1937
    %2050 = vmatprep.subr.bf16.mxu0 %v648
    %2051 = vmatpush1.bf16.msra.mxu0 %v647
    %2052 = vmatprep.subr.bf16.mxu0 %v651
    %2053 = vmatpush1.bf16.msra.mxu0 %v650
    %2054 = vmatprep.subr.bf16.mxu0 %v654
    %2055 = vmatpush1.bf16.msra.mxu0 %v653
    %2056 = vmatprep.subr.bf16.mxu0 %v657
    %2057 = vmatpush1.bf16.msra.mxu0 %v656
    %2058 = vmatprep.subr.bf16.mxu0 %v660
    %2059 = vmatpush1.bf16.msra.mxu0 %v659
    %2060 = vmatprep.subr.bf16.mxu0 %v663
    %2061 = vmatpush1.bf16.msra.mxu0 %v662
    %2062 = vmatprep.subr.bf16.mxu0 %v666
    %2063 = vmatpush1.bf16.msra.mxu0 %v665
    %2064 = vmatprep.subr.bf16.mxu0 %v669
    %2065 = vmatpush1.bf16.msra.mxu0 %v668
    %2066 = vmatprep.subr.bf16.mxu0 %v672
    %2067 = vmatpush1.bf16.msra.mxu0 %v671
    %2068 = vmatprep.subr.bf16.mxu0 %v675
    %2069 = vmatpush1.bf16.msra.mxu0 %v674
    %2070 = vmatprep.subr.bf16.mxu0 %v678
    %2071 = vmatpush1.bf16.msra.mxu0 %v677
    %2072 = vmatprep.subr.bf16.mxu0 %v681
    %2073 = vmatpush1.bf16.msra.mxu0 %v680
    %2074 = vmatprep.subr.bf16.mxu0 %v684
    %2075 = vmatpush1.bf16.msra.mxu0 %v683
    %2076 = vmatprep.subr.bf16.mxu0 %v687
    %2077 = vmatpush1.bf16.msra.mxu0 %v686
    %2078 = vmatprep.subr.bf16.mxu0 %v690
    %2079 = vmatpush1.bf16.msra.mxu0 %v689
    %2080 = vmatprep.subr.bf16.mxu0 %v693
    %2081 = vmatpush1.bf16.msra.mxu0 %v692
    %2082 = vmatprep.mubr.bf16.mxu0 %v2049
    %2083 = vmatmul.mubr.bf16.gmra.mrb[0].mxu0 %v2048
    %v2084 = vpop.f32.mrb[0].mxu0
    %v2085 = vadd.f32 %v234, %v2084
    %v2086 = vpop.f32.mrb[0].mxu0
    %v2087 = vadd.f32 %v238, %v2086
    %v2088 = vpop.f32.mrb[0].mxu0
    %v2089 = vpop.f32.mrb[0].mxu0
    %2090 = vdwg.mxu0
    %2091 = vmatprep.subr.bf16.mxu0 0
    %2092 = vmatpush1.bf16.msra.mxu0 %v649
    %2093 = vmatprep.subr.bf16.mxu0 0
    %2094 = vmatpush1.bf16.msra.mxu0 %v652
    %2095 = vmatprep.subr.bf16.mxu0 0
    %2096 = vmatpush1.bf16.msra.mxu0 %v655
    %2097 = vmatprep.subr.bf16.mxu0 0
    %2098 = vmatpush1.bf16.msra.mxu0 %v658
    %2099 = vmatprep.subr.bf16.mxu0 0
    %2100 = vmatpush1.bf16.msra.mxu0 %v661
    %2101 = vmatprep.subr.bf16.mxu0 0
    %2102 = vmatpush1.bf16.msra.mxu0 %v664
    %2103 = vmatprep.subr.bf16.mxu0 0
    %2104 = vmatpush1.bf16.msra.mxu0 %v667
    %2105 = vmatprep.subr.bf16.mxu0 0
    %2106 = vmatpush1.bf16.msra.mxu0 %v670
    %2107 = vmatprep.subr.bf16.mxu0 0
    %2108 = vmatpush1.bf16.msra.mxu0 %v673
    %2109 = vmatprep.subr.bf16.mxu0 0
    %2110 = vmatpush1.bf16.msra.mxu0 %v676
    %2111 = vmatprep.subr.bf16.mxu0 0
    %2112 = vmatpush1.bf16.msra.mxu0 %v679
    %2113 = vmatprep.subr.bf16.mxu0 0
    %2114 = vmatpush1.bf16.msra.mxu0 %v682
    %2115 = vmatprep.subr.bf16.mxu0 0
    %2116 = vmatpush1.bf16.msra.mxu0 %v685
    %2117 = vmatprep.subr.bf16.mxu0 0
    %2118 = vmatpush1.bf16.msra.mxu0 %v688
    %2119 = vmatprep.subr.bf16.mxu0 0
    %2120 = vmatpush1.bf16.msra.mxu0 %v691
    %2121 = vmatprep.subr.bf16.mxu0 0
    %2122 = vmatpush1.bf16.msra.mxu0 %v694
    %2123 = vmatprep.mubr.bf16.mxu0 %v2049
    %2124 = vmatmul.mubr.bf16.gmra.mrb[0].mxu0 %v2048
    %v2125 = vpop.f32.mrb[0].mxu0
    %v2126 = vadd.f32 %v242, %v2125
    %v2127 = vpop.f32.mrb[0].mxu0
    %v2128 = vpop.f32.mrb[0].mxu0
    %v2129 = vpop.f32.mrb[0].mxu0
    %2130 = vdwg.mxu0
    %v2131 = vxor.u32 %v2085, 2147483648
    %v2132 = vmul.f32 %v2131, 1.442695
    %v2133 = vpow.pop %v2132
    %v2134 = vadd.f32 %v2133, 1.0
    %v2135 = vrcp.pop %v2134
    %v2136 = vmul.f32 1.0, %v2135
    %v2137 = vxor.u32 %v2087, 2147483648
    %v2138 = vmul.f32 %v2137, 1.442695
    %v2139 = vpow.pop %v2138
    %v2140 = vadd.f32 %v2139, 1.0
    %v2141 = vrcp.pop %v2140
    %v2142 = vmul.f32 1.0, %v2141
    %v2143 = vmul.f32 %v2142, %v1937
    %v2144 = vpack.c.bf16 %v2143, %v2143
    %2145 = vmatprep.subr.bf16.mxu0 0
    %2146 = vmatpush1.bf16.msra.mxu0 %v870
    %2147 = vmatprep.subr.bf16.mxu0 0
    %2148 = vmatpush1.bf16.msra.mxu0 %v871
    %2149 = vmatprep.subr.bf16.mxu0 0
    %2150 = vmatpush1.bf16.msra.mxu0 %v872
    %2151 = vmatprep.subr.bf16.mxu0 0
    %2152 = vmatpush1.bf16.msra.mxu0 %v873
    %2153 = vmatprep.subr.bf16.mxu0 0
    %2154 = vmatpush1.bf16.msra.mxu0 %v874
    %2155 = vmatprep.subr.bf16.mxu0 0
    %2156 = vmatpush1.bf16.msra.mxu0 %v875
    %2157 = vmatprep.subr.bf16.mxu0 0
    %2158 = vmatpush1.bf16.msra.mxu0 %v876
    %2159 = vmatprep.subr.bf16.mxu0 0
    %2160 = vmatpush1.bf16.msra.mxu0 %v877
    %2161 = vmatprep.subr.bf16.mxu0 0
    %2162 = vmatpush1.bf16.msra.mxu0 0
    %2163 = vmatprep.subr.bf16.mxu0 0
    %2164 = vmatpush1.bf16.msra.mxu0 0
    %2165 = vmatprep.subr.bf16.mxu0 0
    %2166 = vmatpush1.bf16.msra.mxu0 0
    %2167 = vmatprep.subr.bf16.mxu0 0
    %2168 = vmatpush1.bf16.msra.mxu0 0
    %2169 = vmatprep.subr.bf16.mxu0 0
    %2170 = vmatpush1.bf16.msra.mxu0 0
    %2171 = vmatprep.subr.bf16.mxu0 0
    %2172 = vmatpush1.bf16.msra.mxu0 0
    %2173 = vmatprep.subr.bf16.mxu0 0
    %2174 = vmatpush1.bf16.msra.mxu0 0
    %2175 = vmatprep.subr.bf16.mxu0 0
    %2176 = vmatpush1.bf16.msra.mxu0 0
    %2177 = vmatprep.mubr.bf16.mxu0 0
    %2178 = vmatmul.mubr.bf16.gmra.mrb[0].mxu0 %v2144
    %v2179 = vpop.f32.mrb[0].mxu0
    %v2180 = vadd.f32 0.0, %v2179
    %v2181 = vpop.f32.mrb[0].mxu0
    %v2182 = vpop.f32.mrb[0].mxu0
    %v2183 = vpop.f32.mrb[0].mxu0
    %2184 = vdwg.mxu0
    %v2185 = vadd.f32 %v2126, %v2180
    %v2186 = vtanh.pop %v2185
    %v2187 = vsub.f32 %v1937, %v2186
    %v2188 = vmul.f32 %v2136, %v2187
    %v2189 = vadd.f32 %v2186, %v2188
    %s2190 = scalar_lea.vmem [#allocation13], 40
    %2191 = vst [vmem:[%s2190] sm:$0xff] %v2189
    %s2192 = scalar_lea.vmem [#allocation2], 72
    %v2193 = vld [vmem:[%s2192] sm:$0xff]
    %v2194 = vld [vmem:[%s2192 + $0x8] sm:$0xf]
    %v2195 = vunpack.c.l.bf16 %v2193
    %v2196 = vunpack.c.h.bf16 %v2193
    %v2197 = vunpack.c.l.bf16 %v2194
    %2198 = vmatprep.subr.bf16.mxu0 %v304
    %2199 = vmatpush1.bf16.msra.mxu0 %v303
    %2200 = vmatprep.subr.bf16.mxu0 %v306
    %2201 = vmatpush1.bf16.msra.mxu0 %v305
    %2202 = vmatprep.subr.bf16.mxu0 %v308
    %2203 = vmatpush1.bf16.msra.mxu0 %v307
    %2204 = vmatprep.subr.bf16.mxu0 %v310
    %2205 = vmatpush1.bf16.msra.mxu0 %v309
    %2206 = vmatprep.subr.bf16.mxu0 %v312
    %2207 = vmatpush1.bf16.msra.mxu0 %v311
    %2208 = vmatprep.subr.bf16.mxu0 %v314
    %2209 = vmatpush1.bf16.msra.mxu0 %v313
    %2210 = vmatprep.subr.bf16.mxu0 %v316
    %2211 = vmatpush1.bf16.msra.mxu0 %v315
    %2212 = vmatprep.subr.bf16.mxu0 %v318
    %2213 = vmatpush1.bf16.msra.mxu0 %v317
    %2214 = vmatprep.subr.bf16.mxu0 0
    %2215 = vmatpush1.bf16.msra.mxu0 0
    %2216 = vmatprep.subr.bf16.mxu0 0
    %2217 = vmatpush1.bf16.msra.mxu0 0
    %2218 = vmatprep.subr.bf16.mxu0 0
    %2219 = vmatpush1.bf16.msra.mxu0 0
    %2220 = vmatprep.subr.bf16.mxu0 0
    %2221 = vmatpush1.bf16.msra.mxu0 0
    %2222 = vmatprep.subr.bf16.mxu0 0
    %2223 = vmatpush1.bf16.msra.mxu0 0
    %2224 = vmatprep.subr.bf16.mxu0 0
    %2225 = vmatpush1.bf16.msra.mxu0 0
    %2226 = vmatprep.subr.bf16.mxu0 0
    %2227 = vmatpush1.bf16.msra.mxu0 0
    %2228 = vmatprep.subr.bf16.mxu0 0
    %2229 = vmatpush1.bf16.msra.mxu0 0
    %2230 = vmatprep.mubr.bf16.mxu0 0
    %2231 = vmatmul.mubr.bf16.gmra.mrb[0].mxu0 %v2048
    %v2232 = vpop.f32.mrb[0].mxu0
    %v2233 = vadd.f32 0.0, %v2232
    %v2234 = vpop.f32.mrb[0].mxu0
    %v2235 = vadd.f32 0.0, %v2234
    %v2236 = vpop.f32.mrb[0].mxu0
    %v2237 = vpop.f32.mrb[0].mxu0
    %2238 = vdwg.mxu0
    %v2239 = vadd.f32 %v2195, %v2233
    %v2240 = vxor.u32 %v2239, 2147483648
    %v2241 = vmul.f32 %v2240, 1.442695
    %v2242 = vpow.pop %v2241
    %v2243 = vadd.f32 %v2242, 1.0
    %v2244 = vrcp.pop %v2243
    %v2245 = vmul.f32 1.0, %v2244
    %v2246 = vadd.f32 %v2196, %v2235
    %v2247 = vxor.u32 %v2246, 2147483648
    %v2248 = vmul.f32 %v2247, 1.442695
    %v2249 = vpow.pop %v2248
    %v2250 = vadd.f32 %v2249, 1.0
    %v2251 = vrcp.pop %v2250
    %v2252 = vmul.f32 1.0, %v2251
    %v2253 = vmul.f32 %v2252, %v2047
    %v2254 = vpack.c.bf16 %v2253, %v2253
    %2255 = vmatprep.subr.bf16.mxu0 0
    %2256 = vmatpush1.bf16.msra.mxu0 %v424
    %2257 = vmatprep.subr.bf16.mxu0 0
    %2258 = vmatpush1.bf16.msra.mxu0 %v425
    %2259 = vmatprep.subr.bf16.mxu0 0
    %2260 = vmatpush1.bf16.msra.mxu0 %v426
    %2261 = vmatprep.subr.bf16.mxu0 0
    %2262 = vmatpush1.bf16.msra.mxu0 %v427
    %2263 = vmatprep.subr.bf16.mxu0 0
    %2264 = vmatpush1.bf16.msra.mxu0 %v428
    %2265 = vmatprep.subr.bf16.mxu0 0
    %2266 = vmatpush1.bf16.msra.mxu0 %v429
    %2267 = vmatprep.subr.bf16.mxu0 0
    %2268 = vmatpush1.bf16.msra.mxu0 %v430
    %2269 = vmatprep.subr.bf16.mxu0 0
    %2270 = vmatpush1.bf16.msra.mxu0 %v431
    %2271 = vmatprep.subr.bf16.mxu0 0
    %2272 = vmatpush1.bf16.msra.mxu0 0
    %2273 = vmatprep.subr.bf16.mxu0 0
    %2274 = vmatpush1.bf16.msra.mxu0 0
    %2275 = vmatprep.subr.bf16.mxu0 0
    %2276 = vmatpush1.bf16.msra.mxu0 0
    %2277 = vmatprep.subr.bf16.mxu0 0
    %2278 = vmatpush1.bf16.msra.mxu0 0
    %2279 = vmatprep.subr.bf16.mxu0 0
    %2280 = vmatpush1.bf16.msra.mxu0 0
    %2281 = vmatprep.subr.bf16.mxu0 0
    %2282 = vmatpush1.bf16.msra.mxu0 0
    %2283 = vmatprep.subr.bf16.mxu0 0
    %2284 = vmatpush1.bf16.msra.mxu0 0
    %2285 = vmatprep.subr.bf16.mxu0 0
    %2286 = vmatpush1.bf16.msra.mxu0 0
    %2287 = vmatprep.mubr.bf16.mxu0 0
    %2288 = vmatmul.mubr.bf16.gmra.mrb[0].mxu0 %v2254
    %v2289 = vpop.f32.mrb[0].mxu0
    %v2290 = vadd.f32 0.0, %v2289
    %v2291 = vpop.f32.mrb[0].mxu0
    %v2292 = vpop.f32.mrb[0].mxu0
    %v2293 = vpop.f32.mrb[0].mxu0
    %2294 = vdwg.mxu0
    %v2295 = vadd.f32 %v2197, %v2290
    %v2296 = vtanh.pop %v2295
    %v2297 = vsub.f32 %v2047, %v2296
    %v2298 = vmul.f32 %v2245, %v2297
    %v2299 = vadd.f32 %v2296, %v2298
    %v2300 = vpack.c.bf16 %v2299, %v2299
    %v2301 = vpack.c.bf16 %v2189, %v2189
    %2302 = vmatprep.subr.bf16.mxu0 %v648
    %2303 = vmatpush1.bf16.msra.mxu0 %v647
    %2304 = vmatprep.subr.bf16.mxu0 %v651
    %2305 = vmatpush1.bf16.msra.mxu0 %v650
    %2306 = vmatprep.subr.bf16.mxu0 %v654
    %2307 = vmatpush1.bf16.msra.mxu0 %v653
    %2308 = vmatprep.subr.bf16.mxu0 %v657
    %2309 = vmatpush1.bf16.msra.mxu0 %v656
    %2310 = vmatprep.subr.bf16.mxu0 %v660
    %2311 = vmatpush1.bf16.msra.mxu0 %v659
    %2312 = vmatprep.subr.bf16.mxu0 %v663
    %2313 = vmatpush1.bf16.msra.mxu0 %v662
    %2314 = vmatprep.subr.bf16.mxu0 %v666
    %2315 = vmatpush1.bf16.msra.mxu0 %v665
    %2316 = vmatprep.subr.bf16.mxu0 %v669
    %2317 = vmatpush1.bf16.msra.mxu0 %v668
    %2318 = vmatprep.subr.bf16.mxu0 %v672
    %2319 = vmatpush1.bf16.msra.mxu0 %v671
    %2320 = vmatprep.subr.bf16.mxu0 %v675
    %2321 = vmatpush1.bf16.msra.mxu0 %v674
    %2322 = vmatprep.subr.bf16.mxu0 %v678
    %2323 = vmatpush1.bf16.msra.mxu0 %v677
    %2324 = vmatprep.subr.bf16.mxu0 %v681
    %2325 = vmatpush1.bf16.msra.mxu0 %v680
    %2326 = vmatprep.subr.bf16.mxu0 %v684
    %2327 = vmatpush1.bf16.msra.mxu0 %v683
    %2328 = vmatprep.subr.bf16.mxu0 %v687
    %2329 = vmatpush1.bf16.msra.mxu0 %v686
    %2330 = vmatprep.subr.bf16.mxu0 %v690
    %2331 = vmatpush1.bf16.msra.mxu0 %v689
    %2332 = vmatprep.subr.bf16.mxu0 %v693
    %2333 = vmatpush1.bf16.msra.mxu0 %v692
    %2334 = vmatprep.mubr.bf16.mxu0 %v2301
    %2335 = vmatmul.mubr.bf16.gmra.mrb[0].mxu0 %v2300
    %v2336 = vpop.f32.mrb[0].mxu0
    %v2337 = vadd.f32 %v234, %v2336
    %v2338 = vpop.f32.mrb[0].mxu0
    %v2339 = vadd.f32 %v238, %v2338
    %v2340 = vpop.f32.mrb[0].mxu0
    %v2341 = vpop.f32.mrb[0].mxu0
    %2342 = vdwg.mxu0
    %2343 = vmatprep.subr.bf16.mxu0 0
    %2344 = vmatpush1.bf16.msra.mxu0 %v649
    %2345 = vmatprep.subr.bf16.mxu0 0
    %2346 = vmatpush1.bf16.msra.mxu0 %v652
    %2347 = vmatprep.subr.bf16.mxu0 0
    %2348 = vmatpush1.bf16.msra.mxu0 %v655
    %2349 = vmatprep.subr.bf16.mxu0 0
    %2350 = vmatpush1.bf16.msra.mxu0 %v658
    %2351 = vmatprep.subr.bf16.mxu0 0
    %2352 = vmatpush1.bf16.msra.mxu0 %v661
    %2353 = vmatprep.subr.bf16.mxu0 0
    %2354 = vmatpush1.bf16.msra.mxu0 %v664
    %2355 = vmatprep.subr.bf16.mxu0 0
    %2356 = vmatpush1.bf16.msra.mxu0 %v667
    %2357 = vmatprep.subr.bf16.mxu0 0
    %2358 = vmatpush1.bf16.msra.mxu0 %v670
    %2359 = vmatprep.subr.bf16.mxu0 0
    %2360 = vmatpush1.bf16.msra.mxu0 %v673
    %2361 = vmatprep.subr.bf16.mxu0 0
    %2362 = vmatpush1.bf16.msra.mxu0 %v676
    %2363 = vmatprep.subr.bf16.mxu0 0
    %2364 = vmatpush1.bf16.msra.mxu0 %v679
    %2365 = vmatprep.subr.bf16.mxu0 0
    %2366 = vmatpush1.bf16.msra.mxu0 %v682
    %2367 = vmatprep.subr.bf16.mxu0 0
    %2368 = vmatpush1.bf16.msra.mxu0 %v685
    %2369 = vmatprep.subr.bf16.mxu0 0
    %2370 = vmatpush1.bf16.msra.mxu0 %v688
    %2371 = vmatprep.subr.bf16.mxu0 0
    %2372 = vmatpush1.bf16.msra.mxu0 %v691
    %2373 = vmatprep.subr.bf16.mxu0 0
    %2374 = vmatpush1.bf16.msra.mxu0 %v694
    %2375 = vmatprep.mubr.bf16.mxu0 %v2301
    %2376 = vmatmul.mubr.bf16.gmra.mrb[0].mxu0 %v2300
    %v2377 = vpop.f32.mrb[0].mxu0
    %v2378 = vadd.f32 %v242, %v2377
    %v2379 = vpop.f32.mrb[0].mxu0
    %v2380 = vpop.f32.mrb[0].mxu0
    %v2381 = vpop.f32.mrb[0].mxu0
    %2382 = vdwg.mxu0
    %v2383 = vxor.u32 %v2337, 2147483648
    %v2384 = vmul.f32 %v2383, 1.442695
    %v2385 = vpow.pop %v2384
    %v2386 = vadd.f32 %v2385, 1.0
    %v2387 = vrcp.pop %v2386
    %v2388 = vmul.f32 1.0, %v2387
    %v2389 = vxor.u32 %v2339, 2147483648
    %v2390 = vmul.f32 %v2389, 1.442695
    %v2391 = vpow.pop %v2390
    %v2392 = vadd.f32 %v2391, 1.0
    %v2393 = vrcp.pop %v2392
    %v2394 = vmul.f32 1.0, %v2393
    %v2395 = vmul.f32 %v2394, %v2189
    %v2396 = vpack.c.bf16 %v2395, %v2395
    %2397 = vmatprep.subr.bf16.mxu0 0
    %2398 = vmatpush1.bf16.msra.mxu0 %v870
    %2399 = vmatprep.subr.bf16.mxu0 0
    %2400 = vmatpush1.bf16.msra.mxu0 %v871
    %2401 = vmatprep.subr.bf16.mxu0 0
    %2402 = vmatpush1.bf16.msra.mxu0 %v872
    %2403 = vmatprep.subr.bf16.mxu0 0
    %2404 = vmatpush1.bf16.msra.mxu0 %v873
    %2405 = vmatprep.subr.bf16.mxu0 0
    %2406 = vmatpush1.bf16.msra.mxu0 %v874
    %2407 = vmatprep.subr.bf16.mxu0 0
    %2408 = vmatpush1.bf16.msra.mxu0 %v875
    %2409 = vmatprep.subr.bf16.mxu0 0
    %2410 = vmatpush1.bf16.msra.mxu0 %v876
    %2411 = vmatprep.subr.bf16.mxu0 0
    %2412 = vmatpush1.bf16.msra.mxu0 %v877
    %2413 = vmatprep.subr.bf16.mxu0 0
    %2414 = vmatpush1.bf16.msra.mxu0 0
    %2415 = vmatprep.subr.bf16.mxu0 0
    %2416 = vmatpush1.bf16.msra.mxu0 0
    %2417 = vmatprep.subr.bf16.mxu0 0
    %2418 = vmatpush1.bf16.msra.mxu0 0
    %2419 = vmatprep.subr.bf16.mxu0 0
    %2420 = vmatpush1.bf16.msra.mxu0 0
    %2421 = vmatprep.subr.bf16.mxu0 0
    %2422 = vmatpush1.bf16.msra.mxu0 0
    %2423 = vmatprep.subr.bf16.mxu0 0
    %2424 = vmatpush1.bf16.msra.mxu0 0
    %2425 = vmatprep.subr.bf16.mxu0 0
    %2426 = vmatpush1.bf16.msra.mxu0 0
    %2427 = vmatprep.subr.bf16.mxu0 0
    %2428 = vmatpush1.bf16.msra.mxu0 0
    %2429 = vmatprep.mubr.bf16.mxu0 0
    %2430 = vmatmul.mubr.bf16.gmra.mrb[0].mxu0 %v2396
    %v2431 = vpop.f32.mrb[0].mxu0
    %v2432 = vadd.f32 0.0, %v2431
    %v2433 = vpop.f32.mrb[0].mxu0
    %v2434 = vpop.f32.mrb[0].mxu0
    %v2435 = vpop.f32.mrb[0].mxu0
    %2436 = vdwg.mxu0
    %v2437 = vadd.f32 %v2378, %v2432
    %v2438 = vtanh.pop %v2437
    %v2439 = vsub.f32 %v2189, %v2438
    %v2440 = vmul.f32 %v2388, %v2439
    %v2441 = vadd.f32 %v2438, %v2440
    %s2442 = scalar_lea.vmem [#allocation13], 48
    %2443 = vst [vmem:[%s2442] sm:$0xff] %v2441
    %s2444 = scalar_lea.vmem [#allocation2], 84
    %v2445 = vld [vmem:[%s2444] sm:$0xff]
    %v2446 = vld [vmem:[%s2444 + $0x8] sm:$0xf]
    %v2447 = vunpack.c.l.bf16 %v2445
    %v2448 = vunpack.c.h.bf16 %v2445
    %v2449 = vunpack.c.l.bf16 %v2446
    %2450 = vmatprep.subr.bf16.mxu0 %v304
    %2451 = vmatpush1.bf16.msra.mxu0 %v303
    %2452 = vmatprep.subr.bf16.mxu0 %v306
    %2453 = vmatpush1.bf16.msra.mxu0 %v305
    %2454 = vmatprep.subr.bf16.mxu0 %v308
    %2455 = vmatpush1.bf16.msra.mxu0 %v307
    %2456 = vmatprep.subr.bf16.mxu0 %v310
    %2457 = vmatpush1.bf16.msra.mxu0 %v309
    %2458 = vmatprep.subr.bf16.mxu0 %v312
    %2459 = vmatpush1.bf16.msra.mxu0 %v311
    %2460 = vmatprep.subr.bf16.mxu0 %v314
    %2461 = vmatpush1.bf16.msra.mxu0 %v313
    %2462 = vmatprep.subr.bf16.mxu0 %v316
    %2463 = vmatpush1.bf16.msra.mxu0 %v315
    %2464 = vmatprep.subr.bf16.mxu0 %v318
    %2465 = vmatpush1.bf16.msra.mxu0 %v317
    %2466 = vmatprep.subr.bf16.mxu0 0
    %2467 = vmatpush1.bf16.msra.mxu0 0
    %2468 = vmatprep.subr.bf16.mxu0 0
    %2469 = vmatpush1.bf16.msra.mxu0 0
    %2470 = vmatprep.subr.bf16.mxu0 0
    %2471 = vmatpush1.bf16.msra.mxu0 0
    %2472 = vmatprep.subr.bf16.mxu0 0
    %2473 = vmatpush1.bf16.msra.mxu0 0
    %2474 = vmatprep.subr.bf16.mxu0 0
    %2475 = vmatpush1.bf16.msra.mxu0 0
    %2476 = vmatprep.subr.bf16.mxu0 0
    %2477 = vmatpush1.bf16.msra.mxu0 0
    %2478 = vmatprep.subr.bf16.mxu0 0
    %2479 = vmatpush1.bf16.msra.mxu0 0
    %2480 = vmatprep.subr.bf16.mxu0 0
    %2481 = vmatpush1.bf16.msra.mxu0 0
    %2482 = vmatprep.mubr.bf16.mxu0 0
    %2483 = vmatmul.mubr.bf16.gmra.mrb[0].mxu0 %v2300
    %v2484 = vpop.f32.mrb[0].mxu0
    %v2485 = vadd.f32 0.0, %v2484
    %v2486 = vpop.f32.mrb[0].mxu0
    %v2487 = vadd.f32 0.0, %v2486
    %v2488 = vpop.f32.mrb[0].mxu0
    %v2489 = vpop.f32.mrb[0].mxu0
    %2490 = vdwg.mxu0
    %v2491 = vadd.f32 %v2447, %v2485
    %v2492 = vxor.u32 %v2491, 2147483648
    %v2493 = vmul.f32 %v2492, 1.442695
    %v2494 = vpow.pop %v2493
    %v2495 = vadd.f32 %v2494, 1.0
    %v2496 = vrcp.pop %v2495
    %v2497 = vmul.f32 1.0, %v2496
    %v2498 = vadd.f32 %v2448, %v2487
    %v2499 = vxor.u32 %v2498, 2147483648
    %v2500 = vmul.f32 %v2499, 1.442695
    %v2501 = vpow.pop %v2500
    %v2502 = vadd.f32 %v2501, 1.0
    %v2503 = vrcp.pop %v2502
    %v2504 = vmul.f32 1.0, %v2503
    %v2505 = vmul.f32 %v2504, %v2299
    %v2506 = vpack.c.bf16 %v2505, %v2505
    %2507 = vmatprep.subr.bf16.mxu0 0
    %2508 = vmatpush1.bf16.msra.mxu0 %v424
    %2509 = vmatprep.subr.bf16.mxu0 0
    %2510 = vmatpush1.bf16.msra.mxu0 %v425
    %2511 = vmatprep.subr.bf16.mxu0 0
    %2512 = vmatpush1.bf16.msra.mxu0 %v426
    %2513 = vmatprep.subr.bf16.mxu0 0
    %2514 = vmatpush1.bf16.msra.mxu0 %v427
    %2515 = vmatprep.subr.bf16.mxu0 0
    %2516 = vmatpush1.bf16.msra.mxu0 %v428
    %2517 = vmatprep.subr.bf16.mxu0 0
    %2518 = vmatpush1.bf16.msra.mxu0 %v429
    %2519 = vmatprep.subr.bf16.mxu0 0
    %2520 = vmatpush1.bf16.msra.mxu0 %v430
    %2521 = vmatprep.subr.bf16.mxu0 0
    %2522 = vmatpush1.bf16.msra.mxu0 %v431
    %2523 = vmatprep.subr.bf16.mxu0 0
    %2524 = vmatpush1.bf16.msra.mxu0 0
    %2525 = vmatprep.subr.bf16.mxu0 0
    %2526 = vmatpush1.bf16.msra.mxu0 0
    %2527 = vmatprep.subr.bf16.mxu0 0
    %2528 = vmatpush1.bf16.msra.mxu0 0
    %2529 = vmatprep.subr.bf16.mxu0 0
    %2530 = vmatpush1.bf16.msra.mxu0 0
    %2531 = vmatprep.subr.bf16.mxu0 0
    %2532 = vmatpush1.bf16.msra.mxu0 0
    %2533 = vmatprep.subr.bf16.mxu0 0
    %2534 = vmatpush1.bf16.msra.mxu0 0
    %2535 = vmatprep.subr.bf16.mxu0 0
    %2536 = vmatpush1.bf16.msra.mxu0 0
    %2537 = vmatprep.subr.bf16.mxu0 0
    %2538 = vmatpush1.bf16.msra.mxu0 0
    %2539 = vmatprep.mubr.bf16.mxu0 0
    %2540 = vmatmul.mubr.bf16.gmra.mrb[0].mxu0 %v2506
    %v2541 = vpop.f32.mrb[0].mxu0
    %v2542 = vadd.f32 0.0, %v2541
    %v2543 = vpop.f32.mrb[0].mxu0
    %v2544 = vpop.f32.mrb[0].mxu0
    %v2545 = vpop.f32.mrb[0].mxu0
    %2546 = vdwg.mxu0
    %v2547 = vadd.f32 %v2449, %v2542
    %v2548 = vtanh.pop %v2547
    %v2549 = vsub.f32 %v2299, %v2548
    %v2550 = vmul.f32 %v2497, %v2549
    %v2551 = vadd.f32 %v2548, %v2550
    %v2552 = vpack.c.bf16 %v2551, %v2551
    %v2553 = vpack.c.bf16 %v2441, %v2441
    %2554 = vmatprep.subr.bf16.mxu0 %v648
    %2555 = vmatpush1.bf16.msra.mxu0 %v647
    %2556 = vmatprep.subr.bf16.mxu0 %v651
    %2557 = vmatpush1.bf16.msra.mxu0 %v650
    %2558 = vmatprep.subr.bf16.mxu0 %v654
    %2559 = vmatpush1.bf16.msra.mxu0 %v653
    %2560 = vmatprep.subr.bf16.mxu0 %v657
    %2561 = vmatpush1.bf16.msra.mxu0 %v656
    %2562 = vmatprep.subr.bf16.mxu0 %v660
    %2563 = vmatpush1.bf16.msra.mxu0 %v659
    %2564 = vmatprep.subr.bf16.mxu0 %v663
    %2565 = vmatpush1.bf16.msra.mxu0 %v662
    %2566 = vmatprep.subr.bf16.mxu0 %v666
    %2567 = vmatpush1.bf16.msra.mxu0 %v665
    %2568 = vmatprep.subr.bf16.mxu0 %v669
    %2569 = vmatpush1.bf16.msra.mxu0 %v668
    %2570 = vmatprep.subr.bf16.mxu0 %v672
    %2571 = vmatpush1.bf16.msra.mxu0 %v671
    %2572 = vmatprep.subr.bf16.mxu0 %v675
    %2573 = vmatpush1.bf16.msra.mxu0 %v674
    %2574 = vmatprep.subr.bf16.mxu0 %v678
    %2575 = vmatpush1.bf16.msra.mxu0 %v677
    %2576 = vmatprep.subr.bf16.mxu0 %v681
    %2577 = vmatpush1.bf16.msra.mxu0 %v680
    %2578 = vmatprep.subr.bf16.mxu0 %v684
    %2579 = vmatpush1.bf16.msra.mxu0 %v683
    %2580 = vmatprep.subr.bf16.mxu0 %v687
    %2581 = vmatpush1.bf16.msra.mxu0 %v686
    %2582 = vmatprep.subr.bf16.mxu0 %v690
    %2583 = vmatpush1.bf16.msra.mxu0 %v689
    %2584 = vmatprep.subr.bf16.mxu0 %v693
    %2585 = vmatpush1.bf16.msra.mxu0 %v692
    %2586 = vmatprep.mubr.bf16.mxu0 %v2553
    %2587 = vmatmul.mubr.bf16.gmra.mrb[0].mxu0 %v2552
    %v2588 = vpop.f32.mrb[0].mxu0
    %v2589 = vadd.f32 %v234, %v2588
    %v2590 = vpop.f32.mrb[0].mxu0
    %v2591 = vadd.f32 %v238, %v2590
    %v2592 = vpop.f32.mrb[0].mxu0
    %v2593 = vpop.f32.mrb[0].mxu0
    %2594 = vdwg.mxu0
    %2595 = vmatprep.subr.bf16.mxu0 0
    %2596 = vmatpush1.bf16.msra.mxu0 %v649
    %2597 = vmatprep.subr.bf16.mxu0 0
    %2598 = vmatpush1.bf16.msra.mxu0 %v652
    %2599 = vmatprep.subr.bf16.mxu0 0
    %2600 = vmatpush1.bf16.msra.mxu0 %v655
    %2601 = vmatprep.subr.bf16.mxu0 0
    %2602 = vmatpush1.bf16.msra.mxu0 %v658
    %2603 = vmatprep.subr.bf16.mxu0 0
    %2604 = vmatpush1.bf16.msra.mxu0 %v661
    %2605 = vmatprep.subr.bf16.mxu0 0
    %2606 = vmatpush1.bf16.msra.mxu0 %v664
    %2607 = vmatprep.subr.bf16.mxu0 0
    %2608 = vmatpush1.bf16.msra.mxu0 %v667
    %2609 = vmatprep.subr.bf16.mxu0 0
    %2610 = vmatpush1.bf16.msra.mxu0 %v670
    %2611 = vmatprep.subr.bf16.mxu0 0
    %2612 = vmatpush1.bf16.msra.mxu0 %v673
    %2613 = vmatprep.subr.bf16.mxu0 0
    %2614 = vmatpush1.bf16.msra.mxu0 %v676
    %2615 = vmatprep.subr.bf16.mxu0 0
    %2616 = vmatpush1.bf16.msra.mxu0 %v679
    %2617 = vmatprep.subr.bf16.mxu0 0
    %2618 = vmatpush1.bf16.msra.mxu0 %v682
    %2619 = vmatprep.subr.bf16.mxu0 0
    %2620 = vmatpush1.bf16.msra.mxu0 %v685
    %2621 = vmatprep.subr.bf16.mxu0 0
    %2622 = vmatpush1.bf16.msra.mxu0 %v688
    %2623 = vmatprep.subr.bf16.mxu0 0
    %2624 = vmatpush1.bf16.msra.mxu0 %v691
    %2625 = vmatprep.subr.bf16.mxu0 0
    %2626 = vmatpush1.bf16.msra.mxu0 %v694
    %2627 = vmatprep.mubr.bf16.mxu0 %v2553
    %2628 = vmatmul.mubr.bf16.gmra.mrb[0].mxu0 %v2552
    %v2629 = vpop.f32.mrb[0].mxu0
    %v2630 = vadd.f32 %v242, %v2629
    %v2631 = vpop.f32.mrb[0].mxu0
    %v2632 = vpop.f32.mrb[0].mxu0
    %v2633 = vpop.f32.mrb[0].mxu0
    %2634 = vdwg.mxu0
    %v2635 = vxor.u32 %v2589, 2147483648
    %v2636 = vmul.f32 %v2635, 1.442695
    %v2637 = vpow.pop %v2636
    %v2638 = vadd.f32 %v2637, 1.0
    %v2639 = vrcp.pop %v2638
    %v2640 = vmul.f32 1.0, %v2639
    %v2641 = vxor.u32 %v2591, 2147483648
    %v2642 = vmul.f32 %v2641, 1.442695
    %v2643 = vpow.pop %v2642
    %v2644 = vadd.f32 %v2643, 1.0
    %v2645 = vrcp.pop %v2644
    %v2646 = vmul.f32 1.0, %v2645
    %v2647 = vmul.f32 %v2646, %v2441
    %v2648 = vpack.c.bf16 %v2647, %v2647
    %2649 = vmatprep.subr.bf16.mxu0 0
    %2650 = vmatpush1.bf16.msra.mxu0 %v870
    %2651 = vmatprep.subr.bf16.mxu0 0
    %2652 = vmatpush1.bf16.msra.mxu0 %v871
    %2653 = vmatprep.subr.bf16.mxu0 0
    %2654 = vmatpush1.bf16.msra.mxu0 %v872
    %2655 = vmatprep.subr.bf16.mxu0 0
    %2656 = vmatpush1.bf16.msra.mxu0 %v873
    %2657 = vmatprep.subr.bf16.mxu0 0
    %2658 = vmatpush1.bf16.msra.mxu0 %v874
    %2659 = vmatprep.subr.bf16.mxu0 0
    %2660 = vmatpush1.bf16.msra.mxu0 %v875
    %2661 = vmatprep.subr.bf16.mxu0 0
    %2662 = vmatpush1.bf16.msra.mxu0 %v876
    %2663 = vmatprep.subr.bf16.mxu0 0
    %2664 = vmatpush1.bf16.msra.mxu0 %v877
    %2665 = vmatprep.subr.bf16.mxu0 0
    %2666 = vmatpush1.bf16.msra.mxu0 0
    %2667 = vmatprep.subr.bf16.mxu0 0
    %2668 = vmatpush1.bf16.msra.mxu0 0
    %2669 = vmatprep.subr.bf16.mxu0 0
    %2670 = vmatpush1.bf16.msra.mxu0 0
    %2671 = vmatprep.subr.bf16.mxu0 0
    %2672 = vmatpush1.bf16.msra.mxu0 0
    %2673 = vmatprep.subr.bf16.mxu0 0
    %2674 = vmatpush1.bf16.msra.mxu0 0
    %2675 = vmatprep.subr.bf16.mxu0 0
    %2676 = vmatpush1.bf16.msra.mxu0 0
    %2677 = vmatprep.subr.bf16.mxu0 0
    %2678 = vmatpush1.bf16.msra.mxu0 0
    %2679 = vmatprep.subr.bf16.mxu0 0
    %2680 = vmatpush1.bf16.msra.mxu0 0
    %2681 = vmatprep.mubr.bf16.mxu0 0
    %2682 = vmatmul.mubr.bf16.gmra.mrb[0].mxu0 %v2648
    %v2683 = vpop.f32.mrb[0].mxu0
    %v2684 = vadd.f32 0.0, %v2683
    %v2685 = vpop.f32.mrb[0].mxu0
    %v2686 = vpop.f32.mrb[0].mxu0
    %v2687 = vpop.f32.mrb[0].mxu0
    %2688 = vdwg.mxu0
    %v2689 = vadd.f32 %v2630, %v2684
    %v2690 = vtanh.pop %v2689
    %v2691 = vsub.f32 %v2441, %v2690
    %v2692 = vmul.f32 %v2640, %v2691
    %v2693 = vadd.f32 %v2690, %v2692
    %s2694 = scalar_lea.vmem [#allocation13], 56
    %2695 = vst [vmem:[%s2694] sm:$0xff] %v2693
    %2696 = vst [vmem:[#allocation14] sm:$0xff] %v2551
    %2697 = vst [vmem:[%s247] sm:$0xff] %v2693
    // Predicated region
    $region54: #{tpu_custom_call.1} parent=1 // pred_check
      _
    $region55: #{tpu_custom_call.1} parent=1 // pred_check_branch
      %2699 = sbr.rel (0) target = $region57
    $region56: #{tpu_custom_call.1} parent=1 // pred_region
      %s2701 = ssub.s32 1024, 1024
      %2702 = vsyncadd [#allocation4], %s2701
      %s2703 = sshll.u32 [#allocation13], 4
      %s2704 = int_to_ptr.vmem [resolvable:$true] %s2703
      %2709 = dma.vmem_to_hbm [thread:$0]  %s2704, 1024, %s6, [#allocation4], 128, 128, 8
    $region57: #{tpu_custom_call.1} parent=1 // pred_fallthru
      _
    // Predicated region
    $region58: #{tpu_custom_call.1} parent=1 // pred_check
      _
    $region59: #{tpu_custom_call.1} parent=1 // pred_check_branch
      %2711 = sbr.rel (0) target = $region61
    $region60: #{tpu_custom_call.1} parent=1 // pred_region
      %s2713 = ssub.s32 256, 256
      %2714 = vsyncadd [#allocation15], %s2713
      %s2715 = sshll.u32 [#allocation14], 4
      %s2716 = int_to_ptr.vmem [resolvable:$true] %s2715
      %2721 = dma.vmem_to_hbm [thread:$0]  %s2716, 256, %s7, [#allocation15], 128, 128, 8
    $region61: #{tpu_custom_call.1} parent=1 // pred_fallthru
      _
    // Predicated region
    $region62: #{tpu_custom_call.1} parent=1 // pred_check
      _
    $region63: #{tpu_custom_call.1} parent=1 // pred_check_branch
      %2723 = sbr.rel (0) target = $region65
    $region64: #{tpu_custom_call.1} parent=1 // pred_region
      %2724 = dma.done [#allocation4], 1024
    $region65: #{tpu_custom_call.1} parent=1 // pred_fallthru
      _
    // Predicated region
    $region66: #{tpu_custom_call.1} parent=1 // pred_check
      _
    $region67: #{tpu_custom_call.1} parent=1 // pred_check_branch
      %2726 = sbr.rel (0) target = $region69
    $region68: #{tpu_custom_call.1} parent=1 // pred_region
      %2727 = dma.done [#allocation15], 256
    $region69: #{tpu_custom_call.1} parent=1 // pred_fallthru
      _
    %2728 = vsyncpa [#allocation3], 1
    %2729 = vsyncpa [#allocation6], 1
    %2730 = vsyncpa [#allocation9], 1
    %2731 = vsyncpa [#allocation12], 1
    %2732 = vsyncpa [#allocation4], 1
    %2733 = vsyncpa [#allocation15], 1

</llo_original>
